<compile_context>
chip_gen: v7x
topology: tpu7x:2x2x1
jax: 0.10.0
libtpu: 0.0.40
codegen_flags: <defaults>
</compile_context>

<pallas_src>
import functools

import jax
import jax.numpy as jnp
from jax.experimental import pallas as pl
from jax.experimental.pallas import tpu as pltpu


# ----------------------------------------------------------------------------
# Pallas kernel: out = relu_opt( x @ w + b ); bf16 operands, f32 accum/epilogue
# ----------------------------------------------------------------------------
def _linear_kernel(x_ref, w_ref, b_ref, o_ref, *, apply_relu):
    y = jnp.dot(x_ref[...], w_ref[...], preferred_element_type=jnp.float32)
    y = y + b_ref[...]                      # (1, N) f32 broadcasts over (M, N)
    if apply_relu:
        y = jnp.maximum(y, 0.0)
    o_ref[...] = y.astype(o_ref.dtype)


def linear_pallas(x, w, b, *, relu, out_dtype=jnp.bfloat16, tm=512):
    """x: (M, K), w: (K, Np) with Np % 128 == 0, b: (Np,) -> (M, Np)."""
    M, K = x.shape
    K2, Np = w.shape
    assert K == K2 and Np % 128 == 0, (K, K2, Np)

    x = x.astype(jnp.bfloat16)
    w = w.astype(jnp.bfloat16)
    b = b.reshape(1, Np).astype(jnp.float32)

    tm_eff = M if M <= tm else tm           # small inputs: one full-M block
    grid_m = pl.cdiv(M, tm_eff)             # ragged last block masked by Pallas

    kernel = functools.partial(_linear_kernel, apply_relu=relu)
    return pl.pallas_call(
        kernel,
        out_shape=jax.ShapeDtypeStruct((M, Np), out_dtype),
        grid=(grid_m,),
        in_specs=[
            pl.BlockSpec((tm_eff, K), lambda i: (i, 0)),
            pl.BlockSpec((K, Np), lambda i: (0, 0)),    # weight stays resident
            pl.BlockSpec((1, Np), lambda i: (0, 0)),
        ],
        out_specs=pl.BlockSpec((tm_eff, Np), lambda i: (i, 0)),
        compiler_params=pltpu.CompilerParams(
            dimension_semantics=("parallel",)),         # megacore split on v7x
    )(x, w, b)


def _pad_cols_to_128(w, b):
    """Zero-pad (K, N) weight / (N,) bias so N is a multiple of 128 lanes."""
    K, N = w.shape
    n_pad = (-N) % 128
    if n_pad:
        w = jnp.pad(w, ((0, 0), (0, n_pad)))
        b = jnp.pad(b, (0, n_pad))
    return w, b, N


# ----------------------------------------------------------------------------
# im2col (NHWC input, patch ordering (kh, kw, C)) — pure reshuffle glue.
# ----------------------------------------------------------------------------
def im2col_nhwc(x, kh, kw, stride):
    B, H, W, C = x.shape
    OH = (H - kh) // stride + 1
    OW = (W - kw) // stride + 1
    cols = []
    for i in range(kh):
        for j in range(kw):
            cols.append(
                x[:, i:i + OH * stride:stride, j:j + OW * stride:stride, :])
    p = jnp.stack(cols, axis=3)                       # (B, OH, OW, kh*kw, C)
    return p.reshape(B * OH * OW, kh * kw * C), OH, OW


# ----------------------------------------------------------------------------
# DQN forward
# ----------------------------------------------------------------------------
def dqn_forward(x, params):
    """x: (B, 4, 84, 84) f32 NCHW in [0, 255]. Returns (B, action_space) f32."""
    B = x.shape[0]
    w1, b1, w2, b2, w3, b3, w4, b4 = params

    # Single cheap layout change at the boundary: NCHW -> NHWC, cast to bf16.
    xh = jnp.transpose(x, (0, 2, 3, 1)).astype(jnp.bfloat16)  # (B, 84, 84, 4)

    # ---- Conv1: 4 -> 16, kernel 8, stride 4, ReLU (1/255 folded into w1) ----
    w1m = w1.transpose(2, 3, 1, 0).reshape(8 * 8 * 4, 16) * (1.0 / 255.0)
    w1p, b1p, n1 = _pad_cols_to_128(w1m, b1)
    p1, oh1, ow1 = im2col_nhwc(xh, 8, 8, 4)                   # (B*400, 256) bf16
    y1 = linear_pallas(p1, w1p, b1p, relu=True)               # (B*400, 128) bf16
    y1 = y1[:, :n1].reshape(B, oh1, ow1, n1)                  # NHWC (B,20,20,16)

    # ---- Conv2: 16 -> 32, kernel 4, stride 2, ReLU ----
    w2m = w2.transpose(2, 3, 1, 0).reshape(4 * 4 * 16, 32)
    w2p, b2p, n2 = _pad_cols_to_128(w2m, b2)
    p2, oh2, ow2 = im2col_nhwc(y1, 4, 4, 2)                   # (B*81, 256) bf16
    y2 = linear_pallas(p2, w2p, b2p, relu=True)               # (B*81, 128) bf16
    y2 = y2[:, :n2].reshape(B, oh2, ow2, n2)                  # NHWC (B,9,9,32)

    # ---- Flatten (NHWC order) + FC1: 2592 -> 256, ReLU ----
    flat = y2.reshape(B, oh2 * ow2 * n2)                      # (B, 2592)
    # w3 rows are stored in PyTorch NCHW-flatten order (c,h,w); permute once to
    # NHWC-flatten order (h,w,c) so the activation never gets re-laid-out.
    w3m = w3.reshape(n2, oh2, ow2, 256).transpose(1, 2, 0, 3).reshape(
        oh2 * ow2 * n2, 256)
    h = linear_pallas(flat, w3m, b3, relu=True)               # (B, 256) bf16

    # ---- FC2: 256 -> action_space (no activation), f32 output ----
    w4p, b4p, n4 = _pad_cols_to_128(w4, b4)
    q = linear_pallas(h, w4p, b4p, relu=False, out_dtype=jnp.float32)
    return q[:, :n4]


# ----------------------------------------------------------------------------
# Plain-JAX reference (PyTorch semantics) for validation.
# ----------------------------------------------------------------------------
def dqn_reference(x, params):
    w1, b1, w2, b2, w3, b3, w4, b4 = params
    x = x / 255.0
    dn = ("NCHW", "OIHW", "NCHW")
    y = jax.lax.conv_general_dilated(x, w1, (4, 4), "VALID",
                                     dimension_numbers=dn)
    y = jax.nn.relu(y + b1[None, :, None, None])
    y = jax.lax.conv_general_dilated(y, w2, (2, 2), "VALID",
                                     dimension_numbers=dn)
    y = jax.nn.relu(y + b2[None, :, None, None])
    f = y.reshape(y.shape[0], -1)
    h = jax.nn.relu(f @ w3 + b3)
    return h @ w4 + b4


def init_params(key, action_space):
    """Deterministic synthetic parameters (PyTorch-layout conv weights)."""
    ks = jax.random.split(key, 8)
    def u(k, shape, fan_in):
        bound = 1.0 / jnp.sqrt(fan_in)
        return jax.random.uniform(k, shape, jnp.float32, -bound, bound)
    w1 = u(ks[0], (16, 4, 8, 8), 4 * 8 * 8)
    b1 = u(ks[1], (16,), 4 * 8 * 8)
    w2 = u(ks[2], (32, 16, 4, 4), 16 * 4 * 4)
    b2 = u(ks[3], (32,), 16 * 4 * 4)
    w3 = u(ks[4], (2592, 256), 2592)     # stored as (in, out)
    b3 = u(ks[5], (256,), 2592)
    w4 = u(ks[6], (256, action_space), 256)
    b4 = u(ks[7], (action_space,), 256)
    return (w1, b1, w2, b2, w3, b3, w4, b4)


if __name__ == "__main__":
    ACTION_SPACE = 6
    B = 2
    key = jax.random.PRNGKey(0)
    k_param, k_x = jax.random.split(key)

    params = init_params(k_param, ACTION_SPACE)
    # Atari-style frames: integer-valued pixels in [0, 255] (84x84 is forced by
    # the Linear(2592, 256) layer: 32*9*9 = 2592).
    x = jnp.round(
        jax.random.uniform(k_x, (B, 4, 84, 84), jnp.float32, 0.0, 255.0))

    q = jax.jit(dqn_forward)(x, params)
    jax.block_until_ready(q)
    assert q.shape == (B, ACTION_SPACE)
    assert bool(jnp.all(jnp.isfinite(q)))

    # Loose-tolerance check vs. f32 XLA reference (kernel uses bf16 operands).
    q_ref = dqn_reference(x, params)
    max_err = float(jnp.max(jnp.abs(q - q_ref)))
    scale = float(jnp.max(jnp.abs(q_ref))) + 1e-3
    assert max_err <= 0.05 * scale + 0.02, f"max_err={max_err}, scale={scale}"

    print("KERNEL_OK")
</pallas_src>

<mosaic_0001>
module attributes {stable_mosaic.version = 11 : i64} {
  func.func @_linear_kernel(%arg0: i32, %arg1: memref<512x256xbf16, #tpu.memory_space<vmem>>, %arg2: memref<256x128xbf16, #tpu.memory_space<vmem>>, %arg3: memref<1x128xf32, #tpu.memory_space<vmem>>, %arg4: memref<512x128xbf16, #tpu.memory_space<vmem>>) attributes {dimension_semantics = [#tpu.dimension_semantics<parallel>], iteration_bounds = array<i64: 2>, scalar_prefetch = 0 : i64, scratch_operands = 0 : i64, tpu.core_type = #tpu.core_type<tc>, window_params = [{transform_indices = @transform_0, window_bounds = array<i64: 512, 256>}, {pipeline_mode = #tpu.pipeline_mode<synchronous>, transform_indices = @transform_1, window_bounds = array<i64: 256, 128>}, {pipeline_mode = #tpu.pipeline_mode<synchronous>, transform_indices = @transform_2, window_bounds = array<i64: 1, 128>}, {transform_indices = @transform_3, window_bounds = array<i64: 512, 128>}]} {
    %c0 = arith.constant 0 : index
    %c0_0 = arith.constant 0 : index
    %0 = vector.load %arg1[%c0, %c0_0] : memref<512x256xbf16, #tpu.memory_space<vmem>>, vector<512x256xbf16>
    %c0_1 = arith.constant 0 : index
    %c0_2 = arith.constant 0 : index
    %1 = vector.load %arg2[%c0_1, %c0_2] : memref<256x128xbf16, #tpu.memory_space<vmem>>, vector<256x128xbf16>
    %cst = arith.constant dense<0.000000e+00> : vector<512x128xf32>
    %2 = tpu.matmul %0, %1, %cst {dimension_numbers = #tpu.dot_dimension_numbers<[1], [0], [0], [1], [0, 0, 1, 1], [], []>} : vector<512x256xbf16>, vector<256x128xbf16>, vector<512x128xf32> -> vector<512x128xf32>
    %c0_3 = arith.constant 0 : index
    %c0_4 = arith.constant 0 : index
    %3 = vector.load %arg3[%c0_3, %c0_4] : memref<1x128xf32, #tpu.memory_space<vmem>>, vector<1x128xf32>
    %4 = vector.broadcast %3 : vector<1x128xf32> to vector<512x128xf32>
    %5 = arith.addf %2, %4 : vector<512x128xf32>
    %cst_5 = arith.constant 0.000000e+00 : f32
    %6 = vector.broadcast %cst_5 : f32 to vector<512x128xf32>
    %7 = arith.maximumf %5, %6 : vector<512x128xf32>
    %8 = arith.truncf %7 : vector<512x128xf32> to vector<512x128xbf16>
    %c0_6 = arith.constant 0 : index
    %c0_7 = arith.constant 0 : index
    %9 = vector.load %arg4[%c0_6, %c0_7] : memref<512x128xbf16, #tpu.memory_space<vmem>>, vector<512x128xbf16>
    tpu.vector_store %arg4[%c0_6, %c0_7], %8 {strides = array<i32>} : memref<512x128xbf16, #tpu.memory_space<vmem>>, vector<512x128xbf16>,
    return
  }
  func.func @transform_0(%arg0: i32) -> (i32, i32) {
    %c0_i32 = arith.constant 0 : i32
    %c0_i32_0 = arith.constant 0 : i32
    return %arg0, %c0_i32 : i32, i32
  }
  func.func @transform_1(%arg0: i32) -> (i32, i32) {
    %c0_i32 = arith.constant 0 : i32
    %c0_i32_0 = arith.constant 0 : i32
    %c0_i32_1 = arith.constant 0 : i32
    return %c0_i32, %c0_i32_0 : i32, i32
  }
  func.func @transform_2(%arg0: i32) -> (i32, i32) {
    %c0_i32 = arith.constant 0 : i32
    %c0_i32_0 = arith.constant 0 : i32
    %c0_i32_1 = arith.constant 0 : i32
    return %c0_i32, %c0_i32_0 : i32, i32
  }
  func.func @transform_3(%arg0: i32) -> (i32, i32) {
    %c0_i32 = arith.constant 0 : i32
    %c0_i32_0 = arith.constant 0 : i32
    return %arg0, %c0_i32 : i32, i32
  }
}

module attributes {stable_mosaic.version = 11 : i64} {
  func.func @_linear_kernel(%arg0: i32, %arg1: memref<162x256xbf16, #tpu.memory_space<vmem>>, %arg2: memref<256x128xbf16, #tpu.memory_space<vmem>>, %arg3: memref<1x128xf32, #tpu.memory_space<vmem>>, %arg4: memref<162x128xbf16, #tpu.memory_space<vmem>>) attributes {dimension_semantics = [#tpu.dimension_semantics<parallel>], iteration_bounds = array<i64: 1>, scalar_prefetch = 0 : i64, scratch_operands = 0 : i64, tpu.core_type = #tpu.core_type<tc>, window_params = [{transform_indices = @transform_0, window_bounds = array<i64: 162, 256>}, {pipeline_mode = #tpu.pipeline_mode<synchronous>, transform_indices = @transform_1, window_bounds = array<i64: 256, 128>}, {pipeline_mode = #tpu.pipeline_mode<synchronous>, transform_indices = @transform_2, window_bounds = array<i64: 1, 128>}, {transform_indices = @transform_3, window_bounds = array<i64: 162, 128>}]} {
    %c0 = arith.constant 0 : index
    %c0_0 = arith.constant 0 : index
    %0 = vector.load %arg1[%c0, %c0_0] : memref<162x256xbf16, #tpu.memory_space<vmem>>, vector<162x256xbf16>
    %c0_1 = arith.constant 0 : index
    %c0_2 = arith.constant 0 : index
    %1 = vector.load %arg2[%c0_1, %c0_2] : memref<256x128xbf16, #tpu.memory_space<vmem>>, vector<256x128xbf16>
    %cst = arith.constant dense<0.000000e+00> : vector<162x128xf32>
    %2 = tpu.matmul %0, %1, %cst {dimension_numbers = #tpu.dot_dimension_numbers<[1], [0], [0], [1], [0, 0, 1, 1], [], []>} : vector<162x256xbf16>, vector<256x128xbf16>, vector<162x128xf32> -> vector<162x128xf32>
    %c0_3 = arith.constant 0 : index
    %c0_4 = arith.constant 0 : index
    %3 = vector.load %arg3[%c0_3, %c0_4] : memref<1x128xf32, #tpu.memory_space<vmem>>, vector<1x128xf32>
    %4 = vector.broadcast %3 : vector<1x128xf32> to vector<162x128xf32>
    %5 = arith.addf %2, %4 : vector<162x128xf32>
    %cst_5 = arith.constant 0.000000e+00 : f32
    %6 = vector.broadcast %cst_5 : f32 to vector<162x128xf32>
    %7 = arith.maximumf %5, %6 : vector<162x128xf32>
    %8 = arith.truncf %7 : vector<162x128xf32> to vector<162x128xbf16>
    %c0_6 = arith.constant 0 : index
    %c0_7 = arith.constant 0 : index
    %9 = vector.load %arg4[%c0_6, %c0_7] : memref<162x128xbf16, #tpu.memory_space<vmem>>, vector<162x128xbf16>
    tpu.vector_store %arg4[%c0_6, %c0_7], %8 {strides = array<i32>} : memref<162x128xbf16, #tpu.memory_space<vmem>>, vector<162x128xbf16>,
    return
  }
  func.func @transform_0(%arg0: i32) -> (i32, i32) {
    %c0_i32 = arith.constant 0 : i32
    %c0_i32_0 = arith.constant 0 : i32
    return %arg0, %c0_i32 : i32, i32
  }
  func.func @transform_1(%arg0: i32) -> (i32, i32) {
    %c0_i32 = arith.constant 0 : i32
    %c0_i32_0 = arith.constant 0 : i32
    %c0_i32_1 = arith.constant 0 : i32
    return %c0_i32, %c0_i32_0 : i32, i32
  }
  func.func @transform_2(%arg0: i32) -> (i32, i32) {
    %c0_i32 = arith.constant 0 : i32
    %c0_i32_0 = arith.constant 0 : i32
    %c0_i32_1 = arith.constant 0 : i32
    return %c0_i32, %c0_i32_0 : i32, i32
  }
  func.func @transform_3(%arg0: i32) -> (i32, i32) {
    %c0_i32 = arith.constant 0 : i32
    %c0_i32_0 = arith.constant 0 : i32
    return %arg0, %c0_i32 : i32, i32
  }
}

module attributes {stable_mosaic.version = 11 : i64} {
  func.func @_linear_kernel(%arg0: i32, %arg1: memref<2x2592xbf16, #tpu.memory_space<vmem>>, %arg2: memref<2592x256xbf16, #tpu.memory_space<vmem>>, %arg3: memref<1x256xf32, #tpu.memory_space<vmem>>, %arg4: memref<2x256xbf16, #tpu.memory_space<vmem>>) attributes {dimension_semantics = [#tpu.dimension_semantics<parallel>], iteration_bounds = array<i64: 1>, scalar_prefetch = 0 : i64, scratch_operands = 0 : i64, tpu.core_type = #tpu.core_type<tc>, window_params = [{transform_indices = @transform_0, window_bounds = array<i64: 2, 2592>}, {pipeline_mode = #tpu.pipeline_mode<synchronous>, transform_indices = @transform_1, window_bounds = array<i64: 2592, 256>}, {pipeline_mode = #tpu.pipeline_mode<synchronous>, transform_indices = @transform_2, window_bounds = array<i64: 1, 256>}, {transform_indices = @transform_3, window_bounds = array<i64: 2, 256>}]} {
    %c0 = arith.constant 0 : index
    %c0_0 = arith.constant 0 : index
    %0 = vector.load %arg1[%c0, %c0_0] : memref<2x2592xbf16, #tpu.memory_space<vmem>>, vector<2x2592xbf16>
    %c0_1 = arith.constant 0 : index
    %c0_2 = arith.constant 0 : index
    %1 = vector.load %arg2[%c0_1, %c0_2] : memref<2592x256xbf16, #tpu.memory_space<vmem>>, vector<2592x256xbf16>
    %cst = arith.constant dense<0.000000e+00> : vector<2x256xf32>
    %2 = tpu.matmul %0, %1, %cst {dimension_numbers = #tpu.dot_dimension_numbers<[1], [0], [0], [1], [0, 0, 1, 1], [], []>} : vector<2x2592xbf16>, vector<2592x256xbf16>, vector<2x256xf32> -> vector<2x256xf32>
    %c0_3 = arith.constant 0 : index
    %c0_4 = arith.constant 0 : index
    %3 = vector.load %arg3[%c0_3, %c0_4] : memref<1x256xf32, #tpu.memory_space<vmem>>, vector<1x256xf32>
    %4 = vector.broadcast %3 : vector<1x256xf32> to vector<2x256xf32>
    %5 = arith.addf %2, %4 : vector<2x256xf32>
    %cst_5 = arith.constant 0.000000e+00 : f32
    %6 = vector.broadcast %cst_5 : f32 to vector<2x256xf32>
    %7 = arith.maximumf %5, %6 : vector<2x256xf32>
    %8 = arith.truncf %7 : vector<2x256xf32> to vector<2x256xbf16>
    %c0_6 = arith.constant 0 : index
    %c0_7 = arith.constant 0 : index
    %9 = vector.load %arg4[%c0_6, %c0_7] : memref<2x256xbf16, #tpu.memory_space<vmem>>, vector<2x256xbf16>
    tpu.vector_store %arg4[%c0_6, %c0_7], %8 {strides = array<i32>} : memref<2x256xbf16, #tpu.memory_space<vmem>>, vector<2x256xbf16>,
    return
  }
  func.func @transform_0(%arg0: i32) -> (i32, i32) {
    %c0_i32 = arith.constant 0 : i32
    %c0_i32_0 = arith.constant 0 : i32
    return %arg0, %c0_i32 : i32, i32
  }
  func.func @transform_1(%arg0: i32) -> (i32, i32) {
    %c0_i32 = arith.constant 0 : i32
    %c0_i32_0 = arith.constant 0 : i32
    %c0_i32_1 = arith.constant 0 : i32
    return %c0_i32, %c0_i32_0 : i32, i32
  }
  func.func @transform_2(%arg0: i32) -> (i32, i32) {
    %c0_i32 = arith.constant 0 : i32
    %c0_i32_0 = arith.constant 0 : i32
    %c0_i32_1 = arith.constant 0 : i32
    return %c0_i32, %c0_i32_0 : i32, i32
  }
  func.func @transform_3(%arg0: i32) -> (i32, i32) {
    %c0_i32 = arith.constant 0 : i32
    %c0_i32_0 = arith.constant 0 : i32
    return %arg0, %c0_i32 : i32, i32
  }
}

module attributes {stable_mosaic.version = 11 : i64} {
  func.func @_linear_kernel(%arg0: i32, %arg1: memref<2x256xbf16, #tpu.memory_space<vmem>>, %arg2: memref<256x128xbf16, #tpu.memory_space<vmem>>, %arg3: memref<1x128xf32, #tpu.memory_space<vmem>>, %arg4: memref<2x128xf32, #tpu.memory_space<vmem>>) attributes {dimension_semantics = [#tpu.dimension_semantics<parallel>], iteration_bounds = array<i64: 1>, scalar_prefetch = 0 : i64, scratch_operands = 0 : i64, tpu.core_type = #tpu.core_type<tc>, window_params = [{transform_indices = @transform_0, window_bounds = array<i64: 2, 256>}, {pipeline_mode = #tpu.pipeline_mode<synchronous>, transform_indices = @transform_1, window_bounds = array<i64: 256, 128>}, {pipeline_mode = #tpu.pipeline_mode<synchronous>, transform_indices = @transform_2, window_bounds = array<i64: 1, 128>}, {transform_indices = @transform_3, window_bounds = array<i64: 2, 128>}]} {
    %c0 = arith.constant 0 : index
    %c0_0 = arith.constant 0 : index
    %0 = vector.load %arg1[%c0, %c0_0] : memref<2x256xbf16, #tpu.memory_space<vmem>>, vector<2x256xbf16>
    %c0_1 = arith.constant 0 : index
    %c0_2 = arith.constant 0 : index
    %1 = vector.load %arg2[%c0_1, %c0_2] : memref<256x128xbf16, #tpu.memory_space<vmem>>, vector<256x128xbf16>
    %cst = arith.constant dense<0.000000e+00> : vector<2x128xf32>
    %2 = tpu.matmul %0, %1, %cst {dimension_numbers = #tpu.dot_dimension_numbers<[1], [0], [0], [1], [0, 0, 1, 1], [], []>} : vector<2x256xbf16>, vector<256x128xbf16>, vector<2x128xf32> -> vector<2x128xf32>
    %c0_3 = arith.constant 0 : index
    %c0_4 = arith.constant 0 : index
    %3 = vector.load %arg3[%c0_3, %c0_4] : memref<1x128xf32, #tpu.memory_space<vmem>>, vector<1x128xf32>
    %4 = vector.broadcast %3 : vector<1x128xf32> to vector<2x128xf32>
    %5 = arith.addf %2, %4 : vector<2x128xf32>
    %c0_5 = arith.constant 0 : index
    %c0_6 = arith.constant 0 : index
    %6 = vector.load %arg4[%c0_5, %c0_6] : memref<2x128xf32, #tpu.memory_space<vmem>>, vector<2x128xf32>
    tpu.vector_store %arg4[%c0_5, %c0_6], %5 {strides = array<i32>} : memref<2x128xf32, #tpu.memory_space<vmem>>, vector<2x128xf32>,
    return
  }
  func.func @transform_0(%arg0: i32) -> (i32, i32) {
    %c0_i32 = arith.constant 0 : i32
    %c0_i32_0 = arith.constant 0 : i32
    return %arg0, %c0_i32 : i32, i32
  }
  func.func @transform_1(%arg0: i32) -> (i32, i32) {
    %c0_i32 = arith.constant 0 : i32
    %c0_i32_0 = arith.constant 0 : i32
    %c0_i32_1 = arith.constant 0 : i32
    return %c0_i32, %c0_i32_0 : i32, i32
  }
  func.func @transform_2(%arg0: i32) -> (i32, i32) {
    %c0_i32 = arith.constant 0 : i32
    %c0_i32_0 = arith.constant 0 : i32
    %c0_i32_1 = arith.constant 0 : i32
    return %c0_i32, %c0_i32_0 : i32, i32
  }
  func.func @transform_3(%arg0: i32) -> (i32, i32) {
    %c0_i32 = arith.constant 0 : i32
    %c0_i32_0 = arith.constant 0 : i32
    return %arg0, %c0_i32 : i32, i32
  }
}

</mosaic_0001>

<llo_original>
// kernel: dqn_forward.4
$region0: #{dqn_forward.4}
  #allocation0 [shape = 'u32[]', space=smem, size = 0x4, offset = 0x4, fixed_abs, tag = 'smem constant byte address 0x4 - core index']
  #allocation1 [shape = 'u32[144,128]{1,0:T(1,128)}', space=vmem, size = 0x12000, scoped, tag = 'internal scratch']
  %s0 = inlined_call_operand.vmem [shape: bf16[800,256], index: 0, kind: input, shape index: {}]
  %s1 = inlined_call_operand.vmem [shape: bf16[256,128], index: 1, kind: input, shape index: {}]
  %s2 = inlined_call_operand.vmem [shape: f32[1,128], index: 2, kind: input, shape index: {}]
  %s3 = inlined_call_operand.vmem [shape: bf16[800,128], index: 3, kind: output, shape index: {}]
  %s4 = sld [smem:[#allocation0]]
  $region89: #{dqn_forward.4} parent=0
    _
  %s6 = ssub.s32 1, %s4
  %s7 = scalar_select 0, %s6, %s4
  $region1: #{dqn_forward.4} parent=0
    #allocation2 [shape = 'u8[262144]{0}', space=vmem, size = 0x40000, scoped, tag = 'output window, operand 0']
    loop: start=0, step=1, limit=4
    $region2: #{dqn_forward.4} parent=1 // loop_pre_header
      _
    $region3: #{dqn_forward.4} parent=1 // loop_header
      %s9 = sphi 0, %s13
      %p10 = scmp.ge.s32.totalorder %s9, 4
      %s19 = sphi 0, %s21
      %s22 = sphi 0, %s19
      %s23 = sphi 0, %s22
      %s39 = sphi 0, %s23
      %s43 = sphi 0, %s43
      %s45 = sphi 0, %s43
      %s46 = sphi 0, %s45
      %s60 = sphi 0, %s46
      %s64 = sphi 0, %s64
      %s66 = sphi 0, %s64
      %s67 = sphi 0, %s66
      %s81 = sphi 0, %s67
      %s87 = sphi 0, %s89
      %s90 = sphi 0, %s87
      %s91 = sphi 0, %s90
      %s107 = sphi 0, %s91
    $region4: #{dqn_forward.4} parent=1 // loop_header_branch
      %12 = sbr.rel (%p10) target = $region8
    $region5: #{dqn_forward.4} parent=1 // loop_body
      %s14 = ssub.s32 %s9, 1
      %s15 = ssub.s32 %s9, 2
      %s16 = sadd.s32 %s9, 1
      %s17 = ssub.s32 %s9, %s16
      %p18 = scmp.eq.s32.totalorder %s17, 0
      %s20 = sadd.s32 %s19, 1
      %s21 = scalar_select %p18, %s19, %s20
      %p24 = pneg %p18
      %p25 = scmp.eq.s32.totalorder %s9, 1
      %p26 = por %p24, %p25
      %p27 = scmp.ne.s32.totalorder %s19, %s22
      %p28 = scmp.eq.s32.totalorder %s9, 0
      %p29 = por %p27, %p28
      %p30 = scmp.ne.s32.totalorder %s19, %s22
      %p31 = scmp.eq.s32.totalorder %s14, 1
      %p32 = por %p30, %p31
      %p33 = scmp.ne.s32.totalorder %s22, %s23
      %p34 = scmp.eq.s32.totalorder %s14, 0
      %p35 = por %p33, %p34
      %p36 = scmp.ne.s32.totalorder %s22, %s23
      %p37 = scmp.eq.s32.totalorder %s15, 1
      %p38 = por %p36, %p37
      %p40 = scmp.ne.s32.totalorder %s23, %s39
      %p41 = scmp.eq.s32.totalorder %s15, 0
      %p42 = por %p40, %p41
      %s44 = sadd.s32 %s43, 1
      %p47 = scmp.eq.s32.totalorder %s9, 1
      %p48 = scmp.ne.s32.totalorder %s43, %s45
      %p49 = scmp.eq.s32.totalorder %s9, 0
      %p50 = por %p48, %p49
      %p51 = scmp.ne.s32.totalorder %s43, %s45
      %p52 = scmp.eq.s32.totalorder %s14, 1
      %p53 = por %p51, %p52
      %p54 = scmp.ne.s32.totalorder %s45, %s46
      %p55 = scmp.eq.s32.totalorder %s14, 0
      %p56 = por %p54, %p55
      %p57 = scmp.ne.s32.totalorder %s45, %s46
      %p58 = scmp.eq.s32.totalorder %s15, 1
      %p59 = por %p57, %p58
      %p61 = scmp.ne.s32.totalorder %s46, %s60
      %p62 = scmp.eq.s32.totalorder %s15, 0
      %p63 = por %p61, %p62
      %s65 = sadd.s32 %s64, 1
      %p68 = scmp.eq.s32.totalorder %s9, 1
      %p69 = scmp.ne.s32.totalorder %s64, %s66
      %p70 = scmp.eq.s32.totalorder %s9, 0
      %p71 = por %p69, %p70
      %p72 = scmp.ne.s32.totalorder %s64, %s66
      %p73 = scmp.eq.s32.totalorder %s14, 1
      %p74 = por %p72, %p73
      %p75 = scmp.ne.s32.totalorder %s66, %s67
      %p76 = scmp.eq.s32.totalorder %s14, 0
      %p77 = por %p75, %p76
      %p78 = scmp.ne.s32.totalorder %s66, %s67
      %p79 = scmp.eq.s32.totalorder %s15, 1
      %p80 = por %p78, %p79
      %p82 = scmp.ne.s32.totalorder %s67, %s81
      %p83 = scmp.eq.s32.totalorder %s15, 0
      %p84 = por %p82, %p83
      %s85 = ssub.s32 %s9, %s16
      %p86 = scmp.eq.s32.totalorder %s85, 0
      %s88 = sadd.s32 %s87, 1
      %s89 = scalar_select %p86, %s87, %s88
      %p92 = pneg %p86
      %p93 = scmp.eq.s32.totalorder %s9, 1
      %p94 = por %p92, %p93
      %p95 = scmp.ne.s32.totalorder %s87, %s90
      %p96 = scmp.eq.s32.totalorder %s9, 0
      %p97 = por %p95, %p96
      %p98 = scmp.ne.s32.totalorder %s87, %s90
      %p99 = scmp.eq.s32.totalorder %s14, 1
      %p100 = por %p98, %p99
      %p101 = scmp.ne.s32.totalorder %s90, %s91
      %p102 = scmp.eq.s32.totalorder %s14, 0
      %p103 = por %p101, %p102
      %p104 = scmp.ne.s32.totalorder %s90, %s91
      %p105 = scmp.eq.s32.totalorder %s15, 1
      %p106 = por %p104, %p105
      %p108 = scmp.ne.s32.totalorder %s91, %s107
      %p109 = scmp.eq.s32.totalorder %s15, 0
      %p110 = por %p108, %p109
      %p111 = scmp.le.s32.totalorder 1, %s9
      %p112 = scmp.lt.s32.totalorder %s9, 3
      %p113 = pnand %p111, %p112
      %p114 = pneg %p113
      // Predicated region
      $region9: #{dqn_forward.4} parent=5 // pred_check
        _
      $region10: #{dqn_forward.4} parent=5 // pred_check_branch
        %116 = sbr.rel (%p113) target = $region12
      $region11: #{dqn_forward.4} parent=5 // pred_region
        %s117 = ssub.s32 %s9, 1
        // Predicated region
        $region13: #{dqn_forward.4} parent=11 // pred_check
          %p118 = pneg %p56
        $region14: #{dqn_forward.4} parent=11 // pred_check_branch
          %120 = sbr.rel (%p118) target = $region16
        $region15: #{dqn_forward.4} parent=11 // pred_region
          _
        $region16: #{dqn_forward.4} parent=11 // pred_fallthru
          _
        // Predicated region
        $region17: #{dqn_forward.4} parent=11 // pred_check
          %p121 = pneg %p77
        $region18: #{dqn_forward.4} parent=11 // pred_check_branch
          %123 = sbr.rel (%p121) target = $region20
        $region19: #{dqn_forward.4} parent=11 // pred_region
          _
        $region20: #{dqn_forward.4} parent=11 // pred_fallthru
          _
      $region12: #{dqn_forward.4} parent=5 // pred_fallthru
        _
      %p124 = scmp.lt.s32.totalorder %s9, 2
      // Predicated region
      $region21: #{dqn_forward.4} parent=5 // pred_check
        %p125 = pneg %p124
      $region22: #{dqn_forward.4} parent=5 // pred_check_branch
        %127 = sbr.rel (%p125) target = $region24
      $region23: #{dqn_forward.4} parent=5 // pred_region
        // Predicated region
        $region25: #{dqn_forward.4} parent=23 // pred_check
          %p128 = pneg %p29
        $region26: #{dqn_forward.4} parent=23 // pred_check_branch
          %130 = sbr.rel (%p128) target = $region28
        $region27: #{dqn_forward.4} parent=23 // pred_region
          %s131 = smul.u32 64, %s9
          %s132 = ssub.s32 100, %s131
          %p133 = scmp.lt.s32.totalorder %s132, 64
          %s134 = scalar_select %p133, %s132, 64
          %s135 = smul.u32 64, %s134
          %s136 = smul.u32 %s135, 2
          %p137 = scmp.lt.s32.totalorder %s131, 99
          %s138 = scalar_select %p137, %s131, 99
          %s139 = smul.addr %s138, 2
          %s140 = smul.addr %s139, 4
          %s141 = scalar_lea.vmem %s0, %s140
          %s142 = smul.u32 64, %s9
          %s143 = ssub.s32 100, %s142
          %p144 = scmp.lt.s32.totalorder %s143, 64
          %s145 = scalar_select %p144, %s143, 64
          %s146 = smul.u32 64, %s145
          %s147 = smul.u32 %s146, 2
        $region28: #{dqn_forward.4} parent=23 // pred_fallthru
          _
      $region24: #{dqn_forward.4} parent=5 // pred_fallthru
        _
      %p148 = scmp.le.s32.totalorder 1, %s9
      %p149 = scmp.lt.s32.totalorder %s9, 3
      %p150 = pnand %p148, %p149
      %p151 = pneg %p150
      // Predicated region
      $region29: #{dqn_forward.4} parent=5 // pred_check
        _
      $region30: #{dqn_forward.4} parent=5 // pred_check_branch
        %153 = sbr.rel (%p150) target = $region32
      $region31: #{dqn_forward.4} parent=5 // pred_region
        %s154 = ssub.s32 %s9, 1
        %s155 = smul.u32 64, %s14
        %s156 = ssub.s32 100, %s155
        %p157 = scmp.lt.s32.totalorder %s156, 64
        %s158 = scalar_select %p157, %s156, 64
        %s159 = smul.u32 64, %s158
        %s160 = smul.u32 %s159, 2
        %p161 = scmp.lt.s32.totalorder %s155, 99
        %s162 = scalar_select %p161, %s155, 99
        %s163 = smul.addr %s162, 2
        %s164 = smul.addr %s163, 4
        %s165 = scalar_lea.vmem %s0, %s164
        %p166 = pneg %p35
        %p167 = pneg %p32
        %p168 = pneg %p56
        %p169 = pneg %p53
        %p170 = pneg %p77
        %p171 = pneg %p74
        %p172 = pneg %p103
        %p173 = pneg %p100
        %s174 = sand.u32 %s90, 1
        %s175 = sand.u32 %s90, 1
        %s176 = smul.addr %s175, 256
        %s177 = scalar_lea.vmem [#allocation2], %s176
        %s178 = smul.u32 64, %s14
        %s179 = ssub.s32 100, %s178
        %p180 = scmp.lt.s32.totalorder %s179, 64
        %s181 = scalar_select %p180, %s179, 64
        %s182 = smul.u32 64, %s181
        %s183 = smul.u32 %s182, 2
        %p184 = scmp.lt.s32.totalorder %s178, 99
        %s185 = scalar_select %p184, %s178, 99
        %s186 = smul.addr %s185, 2
        %s187 = smul.addr %s186, 4
        %s188 = scalar_lea.vmem %s0, %s187
        %s189 = smul.u32 64, %s14
        %s190 = ssub.s32 100, %s189
        %p191 = scmp.lt.s32.totalorder %s190, 64
        %s192 = scalar_select %p191, %s190, 64
        %s193 = smul.u32 64, %s192
        %s194 = smul.u32 %s193, 2
        %s195 = smul.u32 64, %s14
        %s196 = ssub.s32 100, %s195
        %p197 = scmp.lt.s32.totalorder %s196, 64
        %s198 = scalar_select %p197, %s196, 64
        %s199 = smul.u32 64, %s198
        %v201 = vld [vmem:[%s188] sm:$0xff]
        %v202 = vld [vmem:[%s188 + $0x8] sm:$0xff]
        %v203 = vld [vmem:[%s188 + $0x10] sm:$0xff]
        %v204 = vld [vmem:[%s188 + $0x18] sm:$0xff]
        %v205 = vld [vmem:[%s188 + $0x20] sm:$0xff]
        %v206 = vld [vmem:[%s188 + $0x28] sm:$0xff]
        %v207 = vld [vmem:[%s188 + $0x30] sm:$0xff]
        %v208 = vld [vmem:[%s188 + $0x38] sm:$0xff]
        %v209 = vld [vmem:[%s188 + $0x40] sm:$0xff]
        %v210 = vld [vmem:[%s188 + $0x48] sm:$0xff]
        %v211 = vld [vmem:[%s188 + $0x50] sm:$0xff]
        %v212 = vld [vmem:[%s188 + $0x58] sm:$0xff]
        %v213 = vld [vmem:[%s188 + $0x60] sm:$0xff]
        %v214 = vld [vmem:[%s188 + $0x68] sm:$0xff]
        %v215 = vld [vmem:[%s188 + $0x70] sm:$0xff]
        %v216 = vld [vmem:[%s188 + $0x78] sm:$0xff]
        %v217 = vld [vmem:[%s188 + $0x80] sm:$0xff]
        %v218 = vld [vmem:[%s188 + $0x88] sm:$0xff]
        %v219 = vld [vmem:[%s188 + $0x90] sm:$0xff]
        %v220 = vld [vmem:[%s188 + $0x98] sm:$0xff]
        %v221 = vld [vmem:[%s188 + $0xa0] sm:$0xff]
        %v222 = vld [vmem:[%s188 + $0xa8] sm:$0xff]
        %v223 = vld [vmem:[%s188 + $0xb0] sm:$0xff]
        %v224 = vld [vmem:[%s188 + $0xb8] sm:$0xff]
        %v225 = vld [vmem:[%s188 + $0xc0] sm:$0xff]
        %v226 = vld [vmem:[%s188 + $0xc8] sm:$0xff]
        %v227 = vld [vmem:[%s188 + $0xd0] sm:$0xff]
        %v228 = vld [vmem:[%s188 + $0xd8] sm:$0xff]
        %v229 = vld [vmem:[%s188 + $0xe0] sm:$0xff]
        %v230 = vld [vmem:[%s188 + $0xe8] sm:$0xff]
        %v231 = vld [vmem:[%s188 + $0xf0] sm:$0xff]
        %v232 = vld [vmem:[%s188 + $0xf8] sm:$0xff]
        %v233 = vld [vmem:[%s188 + $0x100] sm:$0xff]
        %v234 = vld [vmem:[%s188 + $0x108] sm:$0xff]
        %v235 = vld [vmem:[%s188 + $0x110] sm:$0xff]
        %v236 = vld [vmem:[%s188 + $0x118] sm:$0xff]
        %v237 = vld [vmem:[%s188 + $0x120] sm:$0xff]
        %v238 = vld [vmem:[%s188 + $0x128] sm:$0xff]
        %v239 = vld [vmem:[%s188 + $0x130] sm:$0xff]
        %v240 = vld [vmem:[%s188 + $0x138] sm:$0xff]
        %v241 = vld [vmem:[%s188 + $0x140] sm:$0xff]
        %v242 = vld [vmem:[%s188 + $0x148] sm:$0xff]
        %v243 = vld [vmem:[%s188 + $0x150] sm:$0xff]
        %v244 = vld [vmem:[%s188 + $0x158] sm:$0xff]
        %v245 = vld [vmem:[%s188 + $0x160] sm:$0xff]
        %v246 = vld [vmem:[%s188 + $0x168] sm:$0xff]
        %v247 = vld [vmem:[%s188 + $0x170] sm:$0xff]
        %v248 = vld [vmem:[%s188 + $0x178] sm:$0xff]
        %v249 = vld [vmem:[%s188 + $0x180] sm:$0xff]
        %v250 = vld [vmem:[%s188 + $0x188] sm:$0xff]
        %v251 = vld [vmem:[%s188 + $0x190] sm:$0xff]
        %v252 = vld [vmem:[%s188 + $0x198] sm:$0xff]
        %v253 = vld [vmem:[%s188 + $0x1a0] sm:$0xff]
        %v254 = vld [vmem:[%s188 + $0x1a8] sm:$0xff]
        %v255 = vld [vmem:[%s188 + $0x1b0] sm:$0xff]
        %v256 = vld [vmem:[%s188 + $0x1b8] sm:$0xff]
        %v257 = vld [vmem:[%s188 + $0x1c0] sm:$0xff]
        %v258 = vld [vmem:[%s188 + $0x1c8] sm:$0xff]
        %v259 = vld [vmem:[%s188 + $0x1d0] sm:$0xff]
        %v260 = vld [vmem:[%s188 + $0x1d8] sm:$0xff]
        %v261 = vld [vmem:[%s188 + $0x1e0] sm:$0xff]
        %v262 = vld [vmem:[%s188 + $0x1e8] sm:$0xff]
        %v263 = vld [vmem:[%s188 + $0x1f0] sm:$0xff]
        %v264 = vld [vmem:[%s188 + $0x1f8] sm:$0xff]
        %v265 = vld [vmem:[%s1] sm:$0xf]
        %v266 = vld [vmem:[%s1 + $0x4] sm:$0xf]
        %v267 = vld [vmem:[%s1 + $0x8] sm:$0xf]
        %v268 = vld [vmem:[%s1 + $0xc] sm:$0xf]
        %v269 = vld [vmem:[%s1 + $0x10] sm:$0xf]
        %v270 = vld [vmem:[%s1 + $0x14] sm:$0xf]
        %v271 = vld [vmem:[%s1 + $0x18] sm:$0xf]
        %v272 = vld [vmem:[%s1 + $0x1c] sm:$0xf]
        %v273 = vld [vmem:[%s1 + $0x20] sm:$0xf]
        %v274 = vld [vmem:[%s1 + $0x24] sm:$0xf]
        %v275 = vld [vmem:[%s1 + $0x28] sm:$0xf]
        %v276 = vld [vmem:[%s1 + $0x2c] sm:$0xf]
        %v277 = vld [vmem:[%s1 + $0x30] sm:$0xf]
        %v278 = vld [vmem:[%s1 + $0x34] sm:$0xf]
        %v279 = vld [vmem:[%s1 + $0x38] sm:$0xf]
        %v280 = vld [vmem:[%s1 + $0x3c] sm:$0xf]
        %v281 = vld [vmem:[%s1 + $0x40] sm:$0xf]
        %v282 = vld [vmem:[%s1 + $0x44] sm:$0xf]
        %v283 = vld [vmem:[%s1 + $0x48] sm:$0xf]
        %v284 = vld [vmem:[%s1 + $0x4c] sm:$0xf]
        %v285 = vld [vmem:[%s1 + $0x50] sm:$0xf]
        %v286 = vld [vmem:[%s1 + $0x54] sm:$0xf]
        %v287 = vld [vmem:[%s1 + $0x58] sm:$0xf]
        %v288 = vld [vmem:[%s1 + $0x5c] sm:$0xf]
        %v289 = vld [vmem:[%s1 + $0x60] sm:$0xf]
        %v290 = vld [vmem:[%s1 + $0x64] sm:$0xf]
        %v291 = vld [vmem:[%s1 + $0x68] sm:$0xf]
        %v292 = vld [vmem:[%s1 + $0x6c] sm:$0xf]
        %v293 = vld [vmem:[%s1 + $0x70] sm:$0xf]
        %v294 = vld [vmem:[%s1 + $0x74] sm:$0xf]
        %v295 = vld [vmem:[%s1 + $0x78] sm:$0xf]
        %v296 = vld [vmem:[%s1 + $0x7c] sm:$0xf]
        %v297 = vld [vmem:[%s2] sm:$0x1]
        %v299 = vlaneseq
        %v300 = vshrl.u32 %v299, 7
        %v301 = vsub.s32 0, %v300
        %v302 = vrot.slane %v297, %v301
        %v368 = vunpack.c.l.b16 %v201
        %v369 = vunpack.c.h.b16 %v201
        %v370 = vunpack.c.l.b16 %v202
        %v371 = vunpack.c.h.b16 %v202
        %v372 = vunpack.c.l.b16 %v203
        %v373 = vunpack.c.h.b16 %v203
        %v374 = vunpack.c.l.b16 %v204
        %v375 = vunpack.c.h.b16 %v204
        %v376 = vunpack.c.l.b16 %v205
        %v377 = vunpack.c.h.b16 %v205
        %v378 = vunpack.c.l.b16 %v206
        %v379 = vunpack.c.h.b16 %v206
        %v380 = vunpack.c.l.b16 %v207
        %v381 = vunpack.c.h.b16 %v207
        %v382 = vunpack.c.l.b16 %v208
        %v383 = vunpack.c.h.b16 %v208
        %v384 = vunpack.c.l.b16 %v209
        %v385 = vunpack.c.h.b16 %v209
        %v386 = vunpack.c.l.b16 %v210
        %v387 = vunpack.c.h.b16 %v210
        %v388 = vunpack.c.l.b16 %v211
        %v389 = vunpack.c.h.b16 %v211
        %v390 = vunpack.c.l.b16 %v212
        %v391 = vunpack.c.h.b16 %v212
        %v392 = vunpack.c.l.b16 %v213
        %v393 = vunpack.c.h.b16 %v213
        %v394 = vunpack.c.l.b16 %v214
        %v395 = vunpack.c.h.b16 %v214
        %v396 = vunpack.c.l.b16 %v215
        %v397 = vunpack.c.h.b16 %v215
        %v398 = vunpack.c.l.b16 %v216
        %v399 = vunpack.c.h.b16 %v216
        %v400 = vunpack.c.l.b16 %v217
        %v401 = vunpack.c.h.b16 %v217
        %v402 = vunpack.c.l.b16 %v218
        %v403 = vunpack.c.h.b16 %v218
        %v404 = vunpack.c.l.b16 %v219
        %v405 = vunpack.c.h.b16 %v219
        %v406 = vunpack.c.l.b16 %v220
        %v407 = vunpack.c.h.b16 %v220
        %v408 = vunpack.c.l.b16 %v221
        %v409 = vunpack.c.h.b16 %v221
        %v410 = vunpack.c.l.b16 %v222
        %v411 = vunpack.c.h.b16 %v222
        %v412 = vunpack.c.l.b16 %v223
        %v413 = vunpack.c.h.b16 %v223
        %v414 = vunpack.c.l.b16 %v224
        %v415 = vunpack.c.h.b16 %v224
        %v416 = vunpack.c.l.b16 %v225
        %v417 = vunpack.c.h.b16 %v225
        %v418 = vunpack.c.l.b16 %v226
        %v419 = vunpack.c.h.b16 %v226
        %v420 = vunpack.c.l.b16 %v227
        %v421 = vunpack.c.h.b16 %v227
        %v422 = vunpack.c.l.b16 %v228
        %v423 = vunpack.c.h.b16 %v228
        %v424 = vunpack.c.l.b16 %v229
        %v425 = vunpack.c.h.b16 %v229
        %v426 = vunpack.c.l.b16 %v230
        %v427 = vunpack.c.h.b16 %v230
        %v428 = vunpack.c.l.b16 %v231
        %v429 = vunpack.c.h.b16 %v231
        %v430 = vunpack.c.l.b16 %v232
        %v431 = vunpack.c.h.b16 %v232
        %v432 = vunpack.c.l.b16 %v233
        %v433 = vunpack.c.h.b16 %v233
        %v434 = vunpack.c.l.b16 %v234
        %v435 = vunpack.c.h.b16 %v234
        %v436 = vunpack.c.l.b16 %v235
        %v437 = vunpack.c.h.b16 %v235
        %v438 = vunpack.c.l.b16 %v236
        %v439 = vunpack.c.h.b16 %v236
        %v440 = vunpack.c.l.b16 %v237
        %v441 = vunpack.c.h.b16 %v237
        %v442 = vunpack.c.l.b16 %v238
        %v443 = vunpack.c.h.b16 %v238
        %v444 = vunpack.c.l.b16 %v239
        %v445 = vunpack.c.h.b16 %v239
        %v446 = vunpack.c.l.b16 %v240
        %v447 = vunpack.c.h.b16 %v240
        %v448 = vunpack.c.l.b16 %v241
        %v449 = vunpack.c.h.b16 %v241
        %v450 = vunpack.c.l.b16 %v242
        %v451 = vunpack.c.h.b16 %v242
        %v452 = vunpack.c.l.b16 %v243
        %v453 = vunpack.c.h.b16 %v243
        %v454 = vunpack.c.l.b16 %v244
        %v455 = vunpack.c.h.b16 %v244
        %v456 = vunpack.c.l.b16 %v245
        %v457 = vunpack.c.h.b16 %v245
        %v458 = vunpack.c.l.b16 %v246
        %v459 = vunpack.c.h.b16 %v246
        %v460 = vunpack.c.l.b16 %v247
        %v461 = vunpack.c.h.b16 %v247
        %v462 = vunpack.c.l.b16 %v248
        %v463 = vunpack.c.h.b16 %v248
        %v464 = vunpack.c.l.b16 %v249
        %v465 = vunpack.c.h.b16 %v249
        %v466 = vunpack.c.l.b16 %v250
        %v467 = vunpack.c.h.b16 %v250
        %v468 = vunpack.c.l.b16 %v251
        %v469 = vunpack.c.h.b16 %v251
        %v470 = vunpack.c.l.b16 %v252
        %v471 = vunpack.c.h.b16 %v252
        %v472 = vunpack.c.l.b16 %v253
        %v473 = vunpack.c.h.b16 %v253
        %v474 = vunpack.c.l.b16 %v254
        %v475 = vunpack.c.h.b16 %v254
        %v476 = vunpack.c.l.b16 %v255
        %v477 = vunpack.c.h.b16 %v255
        %v478 = vunpack.c.l.b16 %v256
        %v479 = vunpack.c.h.b16 %v256
        %v480 = vunpack.c.l.b16 %v257
        %v481 = vunpack.c.h.b16 %v257
        %v482 = vunpack.c.l.b16 %v258
        %v483 = vunpack.c.h.b16 %v258
        %v484 = vunpack.c.l.b16 %v259
        %v485 = vunpack.c.h.b16 %v259
        %v486 = vunpack.c.l.b16 %v260
        %v487 = vunpack.c.h.b16 %v260
        %v488 = vunpack.c.l.b16 %v261
        %v489 = vunpack.c.h.b16 %v261
        %v490 = vunpack.c.l.b16 %v262
        %v491 = vunpack.c.h.b16 %v262
        %v492 = vunpack.c.l.b16 %v263
        %v493 = vunpack.c.h.b16 %v263
        %v494 = vunpack.c.l.b16 %v264
        %v495 = vunpack.c.h.b16 %v264
        %v496 = vpack.c.b16 %v370, %v368
        %v497 = vpack.c.b16 %v371, %v369
        %v498 = vpack.c.b16 %v374, %v372
        %v499 = vpack.c.b16 %v375, %v373
        %v500 = vpack.c.b16 %v378, %v376
        %v501 = vpack.c.b16 %v379, %v377
        %v502 = vpack.c.b16 %v382, %v380
        %v503 = vpack.c.b16 %v383, %v381
        %v504 = vpack.c.b16 %v386, %v384
        %v505 = vpack.c.b16 %v387, %v385
        %v506 = vpack.c.b16 %v390, %v388
        %v507 = vpack.c.b16 %v391, %v389
        %v508 = vpack.c.b16 %v394, %v392
        %v509 = vpack.c.b16 %v395, %v393
        %v510 = vpack.c.b16 %v398, %v396
        %v511 = vpack.c.b16 %v399, %v397
        %v512 = vpack.c.b16 %v402, %v400
        %v513 = vpack.c.b16 %v403, %v401
        %v514 = vpack.c.b16 %v406, %v404
        %v515 = vpack.c.b16 %v407, %v405
        %v516 = vpack.c.b16 %v410, %v408
        %v517 = vpack.c.b16 %v411, %v409
        %v518 = vpack.c.b16 %v414, %v412
        %v519 = vpack.c.b16 %v415, %v413
        %v520 = vpack.c.b16 %v418, %v416
        %v521 = vpack.c.b16 %v419, %v417
        %v522 = vpack.c.b16 %v422, %v420
        %v523 = vpack.c.b16 %v423, %v421
        %v524 = vpack.c.b16 %v426, %v424
        %v525 = vpack.c.b16 %v427, %v425
        %v526 = vpack.c.b16 %v430, %v428
        %v527 = vpack.c.b16 %v431, %v429
        %v528 = vpack.c.b16 %v434, %v432
        %v529 = vpack.c.b16 %v435, %v433
        %v530 = vpack.c.b16 %v438, %v436
        %v531 = vpack.c.b16 %v439, %v437
        %v532 = vpack.c.b16 %v442, %v440
        %v533 = vpack.c.b16 %v443, %v441
        %v534 = vpack.c.b16 %v446, %v444
        %v535 = vpack.c.b16 %v447, %v445
        %v536 = vpack.c.b16 %v450, %v448
        %v537 = vpack.c.b16 %v451, %v449
        %v538 = vpack.c.b16 %v454, %v452
        %v539 = vpack.c.b16 %v455, %v453
        %v540 = vpack.c.b16 %v458, %v456
        %v541 = vpack.c.b16 %v459, %v457
        %v542 = vpack.c.b16 %v462, %v460
        %v543 = vpack.c.b16 %v463, %v461
        %v544 = vpack.c.b16 %v466, %v464
        %v545 = vpack.c.b16 %v467, %v465
        %v546 = vpack.c.b16 %v470, %v468
        %v547 = vpack.c.b16 %v471, %v469
        %v548 = vpack.c.b16 %v474, %v472
        %v549 = vpack.c.b16 %v475, %v473
        %v550 = vpack.c.b16 %v478, %v476
        %v551 = vpack.c.b16 %v479, %v477
        %v552 = vpack.c.b16 %v482, %v480
        %v553 = vpack.c.b16 %v483, %v481
        %v554 = vpack.c.b16 %v486, %v484
        %v555 = vpack.c.b16 %v487, %v485
        %v556 = vpack.c.b16 %v490, %v488
        %v557 = vpack.c.b16 %v491, %v489
        %v558 = vpack.c.b16 %v494, %v492
        %v559 = vpack.c.b16 %v495, %v493
        %v656 = vunpack.c.l.b16 %v265
        %v657 = vunpack.c.l.b16 %v266
        %v658 = vunpack.c.l.b16 %v267
        %v659 = vunpack.c.l.b16 %v268
        %v660 = vunpack.c.l.b16 %v269
        %v661 = vunpack.c.l.b16 %v270
        %v662 = vunpack.c.l.b16 %v271
        %v663 = vunpack.c.l.b16 %v272
        %v664 = vunpack.c.l.b16 %v273
        %v665 = vunpack.c.l.b16 %v274
        %v666 = vunpack.c.l.b16 %v275
        %v667 = vunpack.c.l.b16 %v276
        %v668 = vunpack.c.l.b16 %v277
        %v669 = vunpack.c.l.b16 %v278
        %v670 = vunpack.c.l.b16 %v279
        %v671 = vunpack.c.l.b16 %v280
        %v672 = vunpack.c.l.b16 %v281
        %v673 = vunpack.c.l.b16 %v282
        %v674 = vunpack.c.l.b16 %v283
        %v675 = vunpack.c.l.b16 %v284
        %v676 = vunpack.c.l.b16 %v285
        %v677 = vunpack.c.l.b16 %v286
        %v678 = vunpack.c.l.b16 %v287
        %v679 = vunpack.c.l.b16 %v288
        %v680 = vunpack.c.l.b16 %v289
        %v681 = vunpack.c.l.b16 %v290
        %v682 = vunpack.c.l.b16 %v291
        %v683 = vunpack.c.l.b16 %v292
        %v684 = vunpack.c.l.b16 %v293
        %v685 = vunpack.c.l.b16 %v294
        %v686 = vunpack.c.l.b16 %v295
        %v687 = vunpack.c.l.b16 %v296
        %v688 = vpack.c.b16 %v657, %v656
        %v689 = vpack.c.b16 %v659, %v658
        %v690 = vpack.c.b16 %v661, %v660
        %v691 = vpack.c.b16 %v663, %v662
        %v692 = vpack.c.b16 %v665, %v664
        %v693 = vpack.c.b16 %v667, %v666
        %v694 = vpack.c.b16 %v669, %v668
        %v695 = vpack.c.b16 %v671, %v670
        %v696 = vpack.c.b16 %v673, %v672
        %v697 = vpack.c.b16 %v675, %v674
        %v698 = vpack.c.b16 %v677, %v676
        %v699 = vpack.c.b16 %v679, %v678
        %v700 = vpack.c.b16 %v681, %v680
        %v701 = vpack.c.b16 %v683, %v682
        %v702 = vpack.c.b16 %v685, %v684
        %v703 = vpack.c.b16 %v687, %v686
        %720 = vmatprep.subr.bf16.mxu0 0
        %721 = vmatpush1.bf16.msra.mxu0 %v688
        %722 = vmatprep.subr.bf16.mxu0 0
        %723 = vmatpush1.bf16.msra.mxu0 %v689
        %724 = vmatprep.subr.bf16.mxu0 0
        %725 = vmatpush1.bf16.msra.mxu0 %v690
        %726 = vmatprep.subr.bf16.mxu0 0
        %727 = vmatpush1.bf16.msra.mxu0 %v691
        %728 = vmatprep.subr.bf16.mxu0 0
        %729 = vmatpush1.bf16.msra.mxu0 %v692
        %730 = vmatprep.subr.bf16.mxu0 0
        %731 = vmatpush1.bf16.msra.mxu0 %v693
        %732 = vmatprep.subr.bf16.mxu0 0
        %733 = vmatpush1.bf16.msra.mxu0 %v694
        %734 = vmatprep.subr.bf16.mxu0 0
        %735 = vmatpush1.bf16.msra.mxu0 %v695
        %736 = vmatprep.subr.bf16.mxu0 0
        %737 = vmatpush1.bf16.msra.mxu0 %v696
        %738 = vmatprep.subr.bf16.mxu0 0
        %739 = vmatpush1.bf16.msra.mxu0 %v697
        %740 = vmatprep.subr.bf16.mxu0 0
        %741 = vmatpush1.bf16.msra.mxu0 %v698
        %742 = vmatprep.subr.bf16.mxu0 0
        %743 = vmatpush1.bf16.msra.mxu0 %v699
        %744 = vmatprep.subr.bf16.mxu0 0
        %745 = vmatpush1.bf16.msra.mxu0 %v700
        %746 = vmatprep.subr.bf16.mxu0 0
        %747 = vmatpush1.bf16.msra.mxu0 %v701
        %748 = vmatprep.subr.bf16.mxu0 0
        %749 = vmatpush1.bf16.msra.mxu0 %v702
        %750 = vmatprep.subr.bf16.mxu0 0
        %751 = vmatpush1.bf16.msra.mxu0 %v703
        %752 = vmatprep.mubr.bf16.mxu0 %v497
        %753 = vmatmul.mubr.bf16.gmra.mrb[0].mxu0 %v496
        %v754 = vpop.f32.mrb[0].mxu0
        %v755 = vadd.f32 %v302, %v754
        %v756 = vpop.f32.mrb[0].mxu0
        %v757 = vpop.f32.mrb[0].mxu0
        %v758 = vadd.f32 %v302, %v757
        %v759 = vpop.f32.mrb[0].mxu0
        %760 = vmatprep.mubr.bf16.mxu0 %v499
        %761 = vmatmul.mubr.bf16.gmra.mrb[0].mxu0 %v498
        %v762 = vpop.f32.mrb[0].mxu0
        %v763 = vadd.f32 %v302, %v762
        %v764 = vpop.f32.mrb[0].mxu0
        %v765 = vpop.f32.mrb[0].mxu0
        %v766 = vadd.f32 %v302, %v765
        %v767 = vpop.f32.mrb[0].mxu0
        %768 = vmatprep.mubr.bf16.mxu0 %v501
        %769 = vmatmul.mubr.bf16.gmra.mrb[0].mxu0 %v500
        %v770 = vpop.f32.mrb[0].mxu0
        %v771 = vadd.f32 %v302, %v770
        %v772 = vpop.f32.mrb[0].mxu0
        %v773 = vpop.f32.mrb[0].mxu0
        %v774 = vadd.f32 %v302, %v773
        %v775 = vpop.f32.mrb[0].mxu0
        %776 = vmatprep.mubr.bf16.mxu0 %v503
        %777 = vmatmul.mubr.bf16.gmra.mrb[0].mxu0 %v502
        %v778 = vpop.f32.mrb[0].mxu0
        %v779 = vadd.f32 %v302, %v778
        %v780 = vpop.f32.mrb[0].mxu0
        %v781 = vpop.f32.mrb[0].mxu0
        %v782 = vadd.f32 %v302, %v781
        %v783 = vpop.f32.mrb[0].mxu0
        %784 = vmatprep.mubr.bf16.mxu0 %v505
        %785 = vmatmul.mubr.bf16.gmra.mrb[0].mxu0 %v504
        %v786 = vpop.f32.mrb[0].mxu0
        %v787 = vadd.f32 %v302, %v786
        %v788 = vpop.f32.mrb[0].mxu0
        %v789 = vpop.f32.mrb[0].mxu0
        %v790 = vadd.f32 %v302, %v789
        %v791 = vpop.f32.mrb[0].mxu0
        %792 = vmatprep.mubr.bf16.mxu0 %v507
        %793 = vmatmul.mubr.bf16.gmra.mrb[0].mxu0 %v506
        %v794 = vpop.f32.mrb[0].mxu0
        %v795 = vadd.f32 %v302, %v794
        %v796 = vpop.f32.mrb[0].mxu0
        %v797 = vpop.f32.mrb[0].mxu0
        %v798 = vadd.f32 %v302, %v797
        %v799 = vpop.f32.mrb[0].mxu0
        %800 = vmatprep.mubr.bf16.mxu0 %v509
        %801 = vmatmul.mubr.bf16.gmra.mrb[0].mxu0 %v508
        %v802 = vpop.f32.mrb[0].mxu0
        %v803 = vadd.f32 %v302, %v802
        %v804 = vpop.f32.mrb[0].mxu0
        %v805 = vpop.f32.mrb[0].mxu0
        %v806 = vadd.f32 %v302, %v805
        %v807 = vpop.f32.mrb[0].mxu0
        %808 = vmatprep.mubr.bf16.mxu0 %v511
        %809 = vmatmul.mubr.bf16.gmra.mrb[0].mxu0 %v510
        %v810 = vpop.f32.mrb[0].mxu0
        %v811 = vadd.f32 %v302, %v810
        %v812 = vpop.f32.mrb[0].mxu0
        %v813 = vpop.f32.mrb[0].mxu0
        %v814 = vadd.f32 %v302, %v813
        %v815 = vpop.f32.mrb[0].mxu0
        %816 = vmatprep.mubr.bf16.mxu0 %v513
        %817 = vmatmul.mubr.bf16.gmra.mrb[0].mxu0 %v512
        %v818 = vpop.f32.mrb[0].mxu0
        %v819 = vadd.f32 %v302, %v818
        %v820 = vpop.f32.mrb[0].mxu0
        %v821 = vpop.f32.mrb[0].mxu0
        %v822 = vadd.f32 %v302, %v821
        %v823 = vpop.f32.mrb[0].mxu0
        %824 = vmatprep.mubr.bf16.mxu0 %v515
        %825 = vmatmul.mubr.bf16.gmra.mrb[0].mxu0 %v514
        %v826 = vpop.f32.mrb[0].mxu0
        %v827 = vadd.f32 %v302, %v826
        %v828 = vpop.f32.mrb[0].mxu0
        %v829 = vpop.f32.mrb[0].mxu0
        %v830 = vadd.f32 %v302, %v829
        %v831 = vpop.f32.mrb[0].mxu0
        %832 = vmatprep.mubr.bf16.mxu0 %v517
        %833 = vmatmul.mubr.bf16.gmra.mrb[0].mxu0 %v516
        %v834 = vpop.f32.mrb[0].mxu0
        %v835 = vadd.f32 %v302, %v834
        %v836 = vpop.f32.mrb[0].mxu0
        %v837 = vpop.f32.mrb[0].mxu0
        %v838 = vadd.f32 %v302, %v837
        %v839 = vpop.f32.mrb[0].mxu0
        %840 = vmatprep.mubr.bf16.mxu0 %v519
        %841 = vmatmul.mubr.bf16.gmra.mrb[0].mxu0 %v518
        %v842 = vpop.f32.mrb[0].mxu0
        %v843 = vadd.f32 %v302, %v842
        %v844 = vpop.f32.mrb[0].mxu0
        %v845 = vpop.f32.mrb[0].mxu0
        %v846 = vadd.f32 %v302, %v845
        %v847 = vpop.f32.mrb[0].mxu0
        %848 = vmatprep.mubr.bf16.mxu0 %v521
        %849 = vmatmul.mubr.bf16.gmra.mrb[0].mxu0 %v520
        %v850 = vpop.f32.mrb[0].mxu0
        %v851 = vadd.f32 %v302, %v850
        %v852 = vpop.f32.mrb[0].mxu0
        %v853 = vpop.f32.mrb[0].mxu0
        %v854 = vadd.f32 %v302, %v853
        %v855 = vpop.f32.mrb[0].mxu0
        %856 = vmatprep.mubr.bf16.mxu0 %v523
        %857 = vmatmul.mubr.bf16.gmra.mrb[0].mxu0 %v522
        %v858 = vpop.f32.mrb[0].mxu0
        %v859 = vadd.f32 %v302, %v858
        %v860 = vpop.f32.mrb[0].mxu0
        %v861 = vpop.f32.mrb[0].mxu0
        %v862 = vadd.f32 %v302, %v861
        %v863 = vpop.f32.mrb[0].mxu0
        %864 = vmatprep.mubr.bf16.mxu0 %v525
        %865 = vmatmul.mubr.bf16.gmra.mrb[0].mxu0 %v524
        %v866 = vpop.f32.mrb[0].mxu0
        %v867 = vadd.f32 %v302, %v866
        %v868 = vpop.f32.mrb[0].mxu0
        %v869 = vpop.f32.mrb[0].mxu0
        %v870 = vadd.f32 %v302, %v869
        %v871 = vpop.f32.mrb[0].mxu0
        %872 = vmatprep.mubr.bf16.mxu0 %v527
        %873 = vmatmul.mubr.bf16.gmra.mrb[0].mxu0 %v526
        %v874 = vpop.f32.mrb[0].mxu0
        %v875 = vadd.f32 %v302, %v874
        %v876 = vpop.f32.mrb[0].mxu0
        %v877 = vpop.f32.mrb[0].mxu0
        %v878 = vadd.f32 %v302, %v877
        %v879 = vpop.f32.mrb[0].mxu0
        %880 = vmatprep.mubr.bf16.mxu0 %v529
        %881 = vmatmul.mubr.bf16.gmra.mrb[0].mxu0 %v528
        %v882 = vpop.f32.mrb[0].mxu0
        %v883 = vadd.f32 %v302, %v882
        %v884 = vpop.f32.mrb[0].mxu0
        %v885 = vpop.f32.mrb[0].mxu0
        %v886 = vadd.f32 %v302, %v885
        %v887 = vpop.f32.mrb[0].mxu0
        %888 = vmatprep.mubr.bf16.mxu0 %v531
        %889 = vmatmul.mubr.bf16.gmra.mrb[0].mxu0 %v530
        %v890 = vpop.f32.mrb[0].mxu0
        %v891 = vadd.f32 %v302, %v890
        %v892 = vpop.f32.mrb[0].mxu0
        %v893 = vpop.f32.mrb[0].mxu0
        %v894 = vadd.f32 %v302, %v893
        %v895 = vpop.f32.mrb[0].mxu0
        %896 = vmatprep.mubr.bf16.mxu0 %v533
        %897 = vmatmul.mubr.bf16.gmra.mrb[0].mxu0 %v532
        %v898 = vpop.f32.mrb[0].mxu0
        %v899 = vadd.f32 %v302, %v898
        %v900 = vpop.f32.mrb[0].mxu0
        %v901 = vpop.f32.mrb[0].mxu0
        %v902 = vadd.f32 %v302, %v901
        %v903 = vpop.f32.mrb[0].mxu0
        %904 = vmatprep.mubr.bf16.mxu0 %v535
        %905 = vmatmul.mubr.bf16.gmra.mrb[0].mxu0 %v534
        %v906 = vpop.f32.mrb[0].mxu0
        %v907 = vadd.f32 %v302, %v906
        %v908 = vpop.f32.mrb[0].mxu0
        %v909 = vpop.f32.mrb[0].mxu0
        %v910 = vadd.f32 %v302, %v909
        %v911 = vpop.f32.mrb[0].mxu0
        %912 = vmatprep.mubr.bf16.mxu0 %v537
        %913 = vmatmul.mubr.bf16.gmra.mrb[0].mxu0 %v536
        %v914 = vpop.f32.mrb[0].mxu0
        %v915 = vadd.f32 %v302, %v914
        %v916 = vpop.f32.mrb[0].mxu0
        %v917 = vpop.f32.mrb[0].mxu0
        %v918 = vadd.f32 %v302, %v917
        %v919 = vpop.f32.mrb[0].mxu0
        %920 = vmatprep.mubr.bf16.mxu0 %v539
        %921 = vmatmul.mubr.bf16.gmra.mrb[0].mxu0 %v538
        %v922 = vpop.f32.mrb[0].mxu0
        %v923 = vadd.f32 %v302, %v922
        %v924 = vpop.f32.mrb[0].mxu0
        %v925 = vpop.f32.mrb[0].mxu0
        %v926 = vadd.f32 %v302, %v925
        %v927 = vpop.f32.mrb[0].mxu0
        %928 = vmatprep.mubr.bf16.mxu0 %v541
        %929 = vmatmul.mubr.bf16.gmra.mrb[0].mxu0 %v540
        %v930 = vpop.f32.mrb[0].mxu0
        %v931 = vadd.f32 %v302, %v930
        %v932 = vpop.f32.mrb[0].mxu0
        %v933 = vpop.f32.mrb[0].mxu0
        %v934 = vadd.f32 %v302, %v933
        %v935 = vpop.f32.mrb[0].mxu0
        %936 = vmatprep.mubr.bf16.mxu0 %v543
        %937 = vmatmul.mubr.bf16.gmra.mrb[0].mxu0 %v542
        %v938 = vpop.f32.mrb[0].mxu0
        %v939 = vadd.f32 %v302, %v938
        %v940 = vpop.f32.mrb[0].mxu0
        %v941 = vpop.f32.mrb[0].mxu0
        %v942 = vadd.f32 %v302, %v941
        %v943 = vpop.f32.mrb[0].mxu0
        %944 = vmatprep.mubr.bf16.mxu0 %v545
        %945 = vmatmul.mubr.bf16.gmra.mrb[0].mxu0 %v544
        %v946 = vpop.f32.mrb[0].mxu0
        %v947 = vadd.f32 %v302, %v946
        %v948 = vpop.f32.mrb[0].mxu0
        %v949 = vpop.f32.mrb[0].mxu0
        %v950 = vadd.f32 %v302, %v949
        %v951 = vpop.f32.mrb[0].mxu0
        %952 = vmatprep.mubr.bf16.mxu0 %v547
        %953 = vmatmul.mubr.bf16.gmra.mrb[0].mxu0 %v546
        %v954 = vpop.f32.mrb[0].mxu0
        %v955 = vadd.f32 %v302, %v954
        %v956 = vpop.f32.mrb[0].mxu0
        %v957 = vpop.f32.mrb[0].mxu0
        %v958 = vadd.f32 %v302, %v957
        %v959 = vpop.f32.mrb[0].mxu0
        %960 = vmatprep.mubr.bf16.mxu0 %v549
        %961 = vmatmul.mubr.bf16.gmra.mrb[0].mxu0 %v548
        %v962 = vpop.f32.mrb[0].mxu0
        %v963 = vadd.f32 %v302, %v962
        %v964 = vpop.f32.mrb[0].mxu0
        %v965 = vpop.f32.mrb[0].mxu0
        %v966 = vadd.f32 %v302, %v965
        %v967 = vpop.f32.mrb[0].mxu0
        %968 = vmatprep.mubr.bf16.mxu0 %v551
        %969 = vmatmul.mubr.bf16.gmra.mrb[0].mxu0 %v550
        %v970 = vpop.f32.mrb[0].mxu0
        %v971 = vadd.f32 %v302, %v970
        %v972 = vpop.f32.mrb[0].mxu0
        %v973 = vpop.f32.mrb[0].mxu0
        %v974 = vadd.f32 %v302, %v973
        %v975 = vpop.f32.mrb[0].mxu0
        %976 = vmatprep.mubr.bf16.mxu0 %v553
        %977 = vmatmul.mubr.bf16.gmra.mrb[0].mxu0 %v552
        %v978 = vpop.f32.mrb[0].mxu0
        %v979 = vadd.f32 %v302, %v978
        %v980 = vpop.f32.mrb[0].mxu0
        %v981 = vpop.f32.mrb[0].mxu0
        %v982 = vadd.f32 %v302, %v981
        %v983 = vpop.f32.mrb[0].mxu0
        %984 = vmatprep.mubr.bf16.mxu0 %v555
        %985 = vmatmul.mubr.bf16.gmra.mrb[0].mxu0 %v554
        %v986 = vpop.f32.mrb[0].mxu0
        %v987 = vadd.f32 %v302, %v986
        %v988 = vpop.f32.mrb[0].mxu0
        %v989 = vpop.f32.mrb[0].mxu0
        %v990 = vadd.f32 %v302, %v989
        %v991 = vpop.f32.mrb[0].mxu0
        %992 = vmatprep.mubr.bf16.mxu0 %v557
        %993 = vmatmul.mubr.bf16.gmra.mrb[0].mxu0 %v556
        %v994 = vpop.f32.mrb[0].mxu0
        %v995 = vadd.f32 %v302, %v994
        %v996 = vpop.f32.mrb[0].mxu0
        %v997 = vpop.f32.mrb[0].mxu0
        %v998 = vadd.f32 %v302, %v997
        %v999 = vpop.f32.mrb[0].mxu0
        %1000 = vmatprep.mubr.bf16.mxu0 %v559
        %1001 = vmatmul.mubr.bf16.gmra.mrb[0].mxu0 %v558
        %v1002 = vpop.f32.mrb[0].mxu0
        %v1003 = vadd.f32 %v302, %v1002
        %v1004 = vpop.f32.mrb[0].mxu0
        %v1005 = vpop.f32.mrb[0].mxu0
        %v1006 = vadd.f32 %v302, %v1005
        %v1007 = vpop.f32.mrb[0].mxu0
        %1008 = vdwg.mxu0
        %v1009 = vmax.f32 %v755, 0.0
        %v1010 = vmax.f32 %v758, 0.0
        %v1011 = vmax.f32 %v763, 0.0
        %v1012 = vmax.f32 %v766, 0.0
        %v1013 = vmax.f32 %v771, 0.0
        %v1014 = vmax.f32 %v774, 0.0
        %v1015 = vmax.f32 %v779, 0.0
        %v1016 = vmax.f32 %v782, 0.0
        %v1017 = vmax.f32 %v787, 0.0
        %v1018 = vmax.f32 %v790, 0.0
        %v1019 = vmax.f32 %v795, 0.0
        %v1020 = vmax.f32 %v798, 0.0
        %v1021 = vmax.f32 %v803, 0.0
        %v1022 = vmax.f32 %v806, 0.0
        %v1023 = vmax.f32 %v811, 0.0
        %v1024 = vmax.f32 %v814, 0.0
        %v1025 = vmax.f32 %v819, 0.0
        %v1026 = vmax.f32 %v822, 0.0
        %v1027 = vmax.f32 %v827, 0.0
        %v1028 = vmax.f32 %v830, 0.0
        %v1029 = vmax.f32 %v835, 0.0
        %v1030 = vmax.f32 %v838, 0.0
        %v1031 = vmax.f32 %v843, 0.0
        %v1032 = vmax.f32 %v846, 0.0
        %v1033 = vmax.f32 %v851, 0.0
        %v1034 = vmax.f32 %v854, 0.0
        %v1035 = vmax.f32 %v859, 0.0
        %v1036 = vmax.f32 %v862, 0.0
        %v1037 = vmax.f32 %v867, 0.0
        %v1038 = vmax.f32 %v870, 0.0
        %v1039 = vmax.f32 %v875, 0.0
        %v1040 = vmax.f32 %v878, 0.0
        %v1041 = vmax.f32 %v883, 0.0
        %v1042 = vmax.f32 %v886, 0.0
        %v1043 = vmax.f32 %v891, 0.0
        %v1044 = vmax.f32 %v894, 0.0
        %v1045 = vmax.f32 %v899, 0.0
        %v1046 = vmax.f32 %v902, 0.0
        %v1047 = vmax.f32 %v907, 0.0
        %v1048 = vmax.f32 %v910, 0.0
        %v1049 = vmax.f32 %v915, 0.0
        %v1050 = vmax.f32 %v918, 0.0
        %v1051 = vmax.f32 %v923, 0.0
        %v1052 = vmax.f32 %v926, 0.0
        %v1053 = vmax.f32 %v931, 0.0
        %v1054 = vmax.f32 %v934, 0.0
        %v1055 = vmax.f32 %v939, 0.0
        %v1056 = vmax.f32 %v942, 0.0
        %v1057 = vmax.f32 %v947, 0.0
        %v1058 = vmax.f32 %v950, 0.0
        %v1059 = vmax.f32 %v955, 0.0
        %v1060 = vmax.f32 %v958, 0.0
        %v1061 = vmax.f32 %v963, 0.0
        %v1062 = vmax.f32 %v966, 0.0
        %v1063 = vmax.f32 %v971, 0.0
        %v1064 = vmax.f32 %v974, 0.0
        %v1065 = vmax.f32 %v979, 0.0
        %v1066 = vmax.f32 %v982, 0.0
        %v1067 = vmax.f32 %v987, 0.0
        %v1068 = vmax.f32 %v990, 0.0
        %v1069 = vmax.f32 %v995, 0.0
        %v1070 = vmax.f32 %v998, 0.0
        %v1071 = vmax.f32 %v1003, 0.0
        %v1072 = vmax.f32 %v1006, 0.0
        %v1073 = vpack.c.bf16 %v1010, %v1009
        %v1074 = vpack.c.bf16 %v1012, %v1011
        %v1075 = vpack.c.bf16 %v1014, %v1013
        %v1076 = vpack.c.bf16 %v1016, %v1015
        %v1077 = vpack.c.bf16 %v1018, %v1017
        %v1078 = vpack.c.bf16 %v1020, %v1019
        %v1079 = vpack.c.bf16 %v1022, %v1021
        %v1080 = vpack.c.bf16 %v1024, %v1023
        %v1081 = vpack.c.bf16 %v1026, %v1025
        %v1082 = vpack.c.bf16 %v1028, %v1027
        %v1083 = vpack.c.bf16 %v1030, %v1029
        %v1084 = vpack.c.bf16 %v1032, %v1031
        %v1085 = vpack.c.bf16 %v1034, %v1033
        %v1086 = vpack.c.bf16 %v1036, %v1035
        %v1087 = vpack.c.bf16 %v1038, %v1037
        %v1088 = vpack.c.bf16 %v1040, %v1039
        %v1089 = vpack.c.bf16 %v1042, %v1041
        %v1090 = vpack.c.bf16 %v1044, %v1043
        %v1091 = vpack.c.bf16 %v1046, %v1045
        %v1092 = vpack.c.bf16 %v1048, %v1047
        %v1093 = vpack.c.bf16 %v1050, %v1049
        %v1094 = vpack.c.bf16 %v1052, %v1051
        %v1095 = vpack.c.bf16 %v1054, %v1053
        %v1096 = vpack.c.bf16 %v1056, %v1055
        %v1097 = vpack.c.bf16 %v1058, %v1057
        %v1098 = vpack.c.bf16 %v1060, %v1059
        %v1099 = vpack.c.bf16 %v1062, %v1061
        %v1100 = vpack.c.bf16 %v1064, %v1063
        %v1101 = vpack.c.bf16 %v1066, %v1065
        %v1102 = vpack.c.bf16 %v1068, %v1067
        %v1103 = vpack.c.bf16 %v1070, %v1069
        %v1104 = vpack.c.bf16 %v1072, %v1071
        %v1137 = vunpack.c.l.b16 %v1073
        %v1138 = vunpack.c.h.b16 %v1073
        %v1139 = vunpack.c.l.b16 %v1074
        %v1140 = vunpack.c.h.b16 %v1074
        %v1141 = vunpack.c.l.b16 %v1075
        %v1142 = vunpack.c.h.b16 %v1075
        %v1143 = vunpack.c.l.b16 %v1076
        %v1144 = vunpack.c.h.b16 %v1076
        %v1145 = vunpack.c.l.b16 %v1077
        %v1146 = vunpack.c.h.b16 %v1077
        %v1147 = vunpack.c.l.b16 %v1078
        %v1148 = vunpack.c.h.b16 %v1078
        %v1149 = vunpack.c.l.b16 %v1079
        %v1150 = vunpack.c.h.b16 %v1079
        %v1151 = vunpack.c.l.b16 %v1080
        %v1152 = vunpack.c.h.b16 %v1080
        %v1153 = vunpack.c.l.b16 %v1081
        %v1154 = vunpack.c.h.b16 %v1081
        %v1155 = vunpack.c.l.b16 %v1082
        %v1156 = vunpack.c.h.b16 %v1082
        %v1157 = vunpack.c.l.b16 %v1083
        %v1158 = vunpack.c.h.b16 %v1083
        %v1159 = vunpack.c.l.b16 %v1084
        %v1160 = vunpack.c.h.b16 %v1084
        %v1161 = vunpack.c.l.b16 %v1085
        %v1162 = vunpack.c.h.b16 %v1085
        %v1163 = vunpack.c.l.b16 %v1086
        %v1164 = vunpack.c.h.b16 %v1086
        %v1165 = vunpack.c.l.b16 %v1087
        %v1166 = vunpack.c.h.b16 %v1087
        %v1167 = vunpack.c.l.b16 %v1088
        %v1168 = vunpack.c.h.b16 %v1088
        %v1169 = vunpack.c.l.b16 %v1089
        %v1170 = vunpack.c.h.b16 %v1089
        %v1171 = vunpack.c.l.b16 %v1090
        %v1172 = vunpack.c.h.b16 %v1090
        %v1173 = vunpack.c.l.b16 %v1091
        %v1174 = vunpack.c.h.b16 %v1091
        %v1175 = vunpack.c.l.b16 %v1092
        %v1176 = vunpack.c.h.b16 %v1092
        %v1177 = vunpack.c.l.b16 %v1093
        %v1178 = vunpack.c.h.b16 %v1093
        %v1179 = vunpack.c.l.b16 %v1094
        %v1180 = vunpack.c.h.b16 %v1094
        %v1181 = vunpack.c.l.b16 %v1095
        %v1182 = vunpack.c.h.b16 %v1095
        %v1183 = vunpack.c.l.b16 %v1096
        %v1184 = vunpack.c.h.b16 %v1096
        %v1185 = vunpack.c.l.b16 %v1097
        %v1186 = vunpack.c.h.b16 %v1097
        %v1187 = vunpack.c.l.b16 %v1098
        %v1188 = vunpack.c.h.b16 %v1098
        %v1189 = vunpack.c.l.b16 %v1099
        %v1190 = vunpack.c.h.b16 %v1099
        %v1191 = vunpack.c.l.b16 %v1100
        %v1192 = vunpack.c.h.b16 %v1100
        %v1193 = vunpack.c.l.b16 %v1101
        %v1194 = vunpack.c.h.b16 %v1101
        %v1195 = vunpack.c.l.b16 %v1102
        %v1196 = vunpack.c.h.b16 %v1102
        %v1197 = vunpack.c.l.b16 %v1103
        %v1198 = vunpack.c.h.b16 %v1103
        %v1199 = vunpack.c.l.b16 %v1104
        %v1200 = vunpack.c.h.b16 %v1104
        %v1201 = vpack.c.b16 %v1137, %v1137
        %v1202 = vpack.c.b16 %v1138, %v1138
        %v1203 = vpack.c.b16 %v1139, %v1139
        %v1204 = vpack.c.b16 %v1140, %v1140
        %v1205 = vpack.c.b16 %v1141, %v1141
        %v1206 = vpack.c.b16 %v1142, %v1142
        %v1207 = vpack.c.b16 %v1143, %v1143
        %v1208 = vpack.c.b16 %v1144, %v1144
        %v1209 = vpack.c.b16 %v1145, %v1145
        %v1210 = vpack.c.b16 %v1146, %v1146
        %v1211 = vpack.c.b16 %v1147, %v1147
        %v1212 = vpack.c.b16 %v1148, %v1148
        %v1213 = vpack.c.b16 %v1149, %v1149
        %v1214 = vpack.c.b16 %v1150, %v1150
        %v1215 = vpack.c.b16 %v1151, %v1151
        %v1216 = vpack.c.b16 %v1152, %v1152
        %v1217 = vpack.c.b16 %v1153, %v1153
        %v1218 = vpack.c.b16 %v1154, %v1154
        %v1219 = vpack.c.b16 %v1155, %v1155
        %v1220 = vpack.c.b16 %v1156, %v1156
        %v1221 = vpack.c.b16 %v1157, %v1157
        %v1222 = vpack.c.b16 %v1158, %v1158
        %v1223 = vpack.c.b16 %v1159, %v1159
        %v1224 = vpack.c.b16 %v1160, %v1160
        %v1225 = vpack.c.b16 %v1161, %v1161
        %v1226 = vpack.c.b16 %v1162, %v1162
        %v1227 = vpack.c.b16 %v1163, %v1163
        %v1228 = vpack.c.b16 %v1164, %v1164
        %v1229 = vpack.c.b16 %v1165, %v1165
        %v1230 = vpack.c.b16 %v1166, %v1166
        %v1231 = vpack.c.b16 %v1167, %v1167
        %v1232 = vpack.c.b16 %v1168, %v1168
        %v1233 = vpack.c.b16 %v1169, %v1169
        %v1234 = vpack.c.b16 %v1170, %v1170
        %v1235 = vpack.c.b16 %v1171, %v1171
        %v1236 = vpack.c.b16 %v1172, %v1172
        %v1237 = vpack.c.b16 %v1173, %v1173
        %v1238 = vpack.c.b16 %v1174, %v1174
        %v1239 = vpack.c.b16 %v1175, %v1175
        %v1240 = vpack.c.b16 %v1176, %v1176
        %v1241 = vpack.c.b16 %v1177, %v1177
        %v1242 = vpack.c.b16 %v1178, %v1178
        %v1243 = vpack.c.b16 %v1179, %v1179
        %v1244 = vpack.c.b16 %v1180, %v1180
        %v1245 = vpack.c.b16 %v1181, %v1181
        %v1246 = vpack.c.b16 %v1182, %v1182
        %v1247 = vpack.c.b16 %v1183, %v1183
        %v1248 = vpack.c.b16 %v1184, %v1184
        %v1249 = vpack.c.b16 %v1185, %v1185
        %v1250 = vpack.c.b16 %v1186, %v1186
        %v1251 = vpack.c.b16 %v1187, %v1187
        %v1252 = vpack.c.b16 %v1188, %v1188
        %v1253 = vpack.c.b16 %v1189, %v1189
        %v1254 = vpack.c.b16 %v1190, %v1190
        %v1255 = vpack.c.b16 %v1191, %v1191
        %v1256 = vpack.c.b16 %v1192, %v1192
        %v1257 = vpack.c.b16 %v1193, %v1193
        %v1258 = vpack.c.b16 %v1194, %v1194
        %v1259 = vpack.c.b16 %v1195, %v1195
        %v1260 = vpack.c.b16 %v1196, %v1196
        %v1261 = vpack.c.b16 %v1197, %v1197
        %v1262 = vpack.c.b16 %v1198, %v1198
        %v1263 = vpack.c.b16 %v1199, %v1199
        %v1264 = vpack.c.b16 %v1200, %v1200
        %1329 = vst [vmem:[%s177] sm:$0xf] %v1201
        %1330 = vst [vmem:[%s177 + $0x4] sm:$0xf] %v1202
        %1331 = vst [vmem:[%s177 + $0x8] sm:$0xf] %v1203
        %1332 = vst [vmem:[%s177 + $0xc] sm:$0xf] %v1204
        %1333 = vst [vmem:[%s177 + $0x10] sm:$0xf] %v1205
        %1334 = vst [vmem:[%s177 + $0x14] sm:$0xf] %v1206
        %1335 = vst [vmem:[%s177 + $0x18] sm:$0xf] %v1207
        %1336 = vst [vmem:[%s177 + $0x1c] sm:$0xf] %v1208
        %1337 = vst [vmem:[%s177 + $0x20] sm:$0xf] %v1209
        %1338 = vst [vmem:[%s177 + $0x24] sm:$0xf] %v1210
        %1339 = vst [vmem:[%s177 + $0x28] sm:$0xf] %v1211
        %1340 = vst [vmem:[%s177 + $0x2c] sm:$0xf] %v1212
        %1341 = vst [vmem:[%s177 + $0x30] sm:$0xf] %v1213
        %1342 = vst [vmem:[%s177 + $0x34] sm:$0xf] %v1214
        %1343 = vst [vmem:[%s177 + $0x38] sm:$0xf] %v1215
        %1344 = vst [vmem:[%s177 + $0x3c] sm:$0xf] %v1216
        %1345 = vst [vmem:[%s177 + $0x40] sm:$0xf] %v1217
        %1346 = vst [vmem:[%s177 + $0x44] sm:$0xf] %v1218
        %1347 = vst [vmem:[%s177 + $0x48] sm:$0xf] %v1219
        %1348 = vst [vmem:[%s177 + $0x4c] sm:$0xf] %v1220
        %1349 = vst [vmem:[%s177 + $0x50] sm:$0xf] %v1221
        %1350 = vst [vmem:[%s177 + $0x54] sm:$0xf] %v1222
        %1351 = vst [vmem:[%s177 + $0x58] sm:$0xf] %v1223
        %1352 = vst [vmem:[%s177 + $0x5c] sm:$0xf] %v1224
        %1353 = vst [vmem:[%s177 + $0x60] sm:$0xf] %v1225
        %1354 = vst [vmem:[%s177 + $0x64] sm:$0xf] %v1226
        %1355 = vst [vmem:[%s177 + $0x68] sm:$0xf] %v1227
        %1356 = vst [vmem:[%s177 + $0x6c] sm:$0xf] %v1228
        %1357 = vst [vmem:[%s177 + $0x70] sm:$0xf] %v1229
        %1358 = vst [vmem:[%s177 + $0x74] sm:$0xf] %v1230
        %1359 = vst [vmem:[%s177 + $0x78] sm:$0xf] %v1231
        %1360 = vst [vmem:[%s177 + $0x7c] sm:$0xf] %v1232
        %1361 = vst [vmem:[%s177 + $0x80] sm:$0xf] %v1233
        %1362 = vst [vmem:[%s177 + $0x84] sm:$0xf] %v1234
        %1363 = vst [vmem:[%s177 + $0x88] sm:$0xf] %v1235
        %1364 = vst [vmem:[%s177 + $0x8c] sm:$0xf] %v1236
        %1365 = vst [vmem:[%s177 + $0x90] sm:$0xf] %v1237
        %1366 = vst [vmem:[%s177 + $0x94] sm:$0xf] %v1238
        %1367 = vst [vmem:[%s177 + $0x98] sm:$0xf] %v1239
        %1368 = vst [vmem:[%s177 + $0x9c] sm:$0xf] %v1240
        %1369 = vst [vmem:[%s177 + $0xa0] sm:$0xf] %v1241
        %1370 = vst [vmem:[%s177 + $0xa4] sm:$0xf] %v1242
        %1371 = vst [vmem:[%s177 + $0xa8] sm:$0xf] %v1243
        %1372 = vst [vmem:[%s177 + $0xac] sm:$0xf] %v1244
        %1373 = vst [vmem:[%s177 + $0xb0] sm:$0xf] %v1245
        %1374 = vst [vmem:[%s177 + $0xb4] sm:$0xf] %v1246
        %1375 = vst [vmem:[%s177 + $0xb8] sm:$0xf] %v1247
        %1376 = vst [vmem:[%s177 + $0xbc] sm:$0xf] %v1248
        %1377 = vst [vmem:[%s177 + $0xc0] sm:$0xf] %v1249
        %1378 = vst [vmem:[%s177 + $0xc4] sm:$0xf] %v1250
        %1379 = vst [vmem:[%s177 + $0xc8] sm:$0xf] %v1251
        %1380 = vst [vmem:[%s177 + $0xcc] sm:$0xf] %v1252
        %1381 = vst [vmem:[%s177 + $0xd0] sm:$0xf] %v1253
        %1382 = vst [vmem:[%s177 + $0xd4] sm:$0xf] %v1254
        %1383 = vst [vmem:[%s177 + $0xd8] sm:$0xf] %v1255
        %1384 = vst [vmem:[%s177 + $0xdc] sm:$0xf] %v1256
        %1385 = vst [vmem:[%s177 + $0xe0] sm:$0xf] %v1257
        %1386 = vst [vmem:[%s177 + $0xe4] sm:$0xf] %v1258
        %1387 = vst [vmem:[%s177 + $0xe8] sm:$0xf] %v1259
        %1388 = vst [vmem:[%s177 + $0xec] sm:$0xf] %v1260
        %1389 = vst [vmem:[%s177 + $0xf0] sm:$0xf] %v1261
        %1390 = vst [vmem:[%s177 + $0xf4] sm:$0xf] %v1262
        %1391 = vst [vmem:[%s177 + $0xf8] sm:$0xf] %v1263
        %1392 = vst [vmem:[%s177 + $0xfc] sm:$0xf] %v1264
        %s1393 = sand.u32 %s90, 1
        %s1394 = sand.u32 %s90, 1
        %s1395 = smul.addr %s1394, 256
        %s1396 = scalar_lea.vmem [#allocation2], %s1395
        // Predicated region
        $region33: #{dqn_forward.4} parent=31 // pred_check
          %p1397 = pneg %p100
        $region34: #{dqn_forward.4} parent=31 // pred_check_branch
          %1399 = sbr.rel (%p1397) target = $region36
        $region35: #{dqn_forward.4} parent=31 // pred_region
          %s1400 = smul.u32 64, %s14
          %s1401 = ssub.s32 100, %s1400
          %p1402 = scmp.lt.s32.totalorder %s1401, 64
          %s1403 = scalar_select %p1402, %s1401, 64
          %s1404 = smul.u32 64, %s1403
          %p1405 = scmp.ne.s32.totalorder 0, %s1404
          %s1406 = smul.addr %s1400, 4
          %s1407 = scalar_lea.vmem %s3, %s1406
          // Predicated region
          $region37: #{dqn_forward.4} parent=35 // pred_check
            %p1408 = pneg %p1405
          $region38: #{dqn_forward.4} parent=35 // pred_check_branch
            %1410 = sbr.rel (%p1408) target = $region40
          $region39: #{dqn_forward.4} parent=35 // pred_region
            // Predicated region
            $region41: #{dqn_forward.4} parent=39 // pred_check
              _
            $region42: #{dqn_forward.4} parent=39 // pred_check_branch
              %1412 = sbr.rel target = $region44
            $region43: #{dqn_forward.4} parent=39 // pred_region
              // Predicated region
              $region63: #{dqn_forward.4} parent=43 // pred_check
                _
              $region64: #{dqn_forward.4} parent=43 // pred_check_branch
                %1587 = sbr.rel (0) target = $region66
              $region65: #{dqn_forward.4} parent=43 // pred_region
                %s1589 = sshrl.u32 %s1403, 6
                // While loop
                $region67: #{dqn_forward.4} parent=65 // loop_pre_header
                  _
                $region68: #{dqn_forward.4} parent=65 // loop_header
                  %s1591 = sphi 0, %s1593
                  %p1592 = scmp.ge.s32.totalorder %s1591, %s1589
                  %s1596 = sphi 0, %s1729
                  %s1597 = sphi %s1396, %s1732
                  %s1598 = sphi %s1407, %s1733
                $region69: #{dqn_forward.4} parent=65 // loop_header_branch
                  %1595 = sbr.rel (%p1592) target = $region73
                $region70: #{dqn_forward.4} parent=65 // loop_body
                  %v1599 = vld [vmem:[%s1597] sm:$0xf]
                  %1600 = vst [vmem:[%s1598] sm:$0xf] %v1599
                  %v1601 = vld [vmem:[%s1597 + $0x4] sm:$0xf]
                  %1602 = vst [vmem:[%s1598 + $0x4] sm:$0xf] %v1601
                  %v1603 = vld [vmem:[%s1597 + $0x8] sm:$0xf]
                  %1604 = vst [vmem:[%s1598 + $0x8] sm:$0xf] %v1603
                  %v1605 = vld [vmem:[%s1597 + $0xc] sm:$0xf]
                  %1606 = vst [vmem:[%s1598 + $0xc] sm:$0xf] %v1605
                  %v1607 = vld [vmem:[%s1597 + $0x10] sm:$0xf]
                  %1608 = vst [vmem:[%s1598 + $0x10] sm:$0xf] %v1607
                  %v1609 = vld [vmem:[%s1597 + $0x14] sm:$0xf]
                  %1610 = vst [vmem:[%s1598 + $0x14] sm:$0xf] %v1609
                  %v1611 = vld [vmem:[%s1597 + $0x18] sm:$0xf]
                  %1612 = vst [vmem:[%s1598 + $0x18] sm:$0xf] %v1611
                  %v1613 = vld [vmem:[%s1597 + $0x1c] sm:$0xf]
                  %1614 = vst [vmem:[%s1598 + $0x1c] sm:$0xf] %v1613
                  %v1615 = vld [vmem:[%s1597 + $0x20] sm:$0xf]
                  %1616 = vst [vmem:[%s1598 + $0x20] sm:$0xf] %v1615
                  %v1617 = vld [vmem:[%s1597 + $0x24] sm:$0xf]
                  %1618 = vst [vmem:[%s1598 + $0x24] sm:$0xf] %v1617
                  %v1619 = vld [vmem:[%s1597 + $0x28] sm:$0xf]
                  %1620 = vst [vmem:[%s1598 + $0x28] sm:$0xf] %v1619
                  %v1621 = vld [vmem:[%s1597 + $0x2c] sm:$0xf]
                  %1622 = vst [vmem:[%s1598 + $0x2c] sm:$0xf] %v1621
                  %v1623 = vld [vmem:[%s1597 + $0x30] sm:$0xf]
                  %1624 = vst [vmem:[%s1598 + $0x30] sm:$0xf] %v1623
                  %v1625 = vld [vmem:[%s1597 + $0x34] sm:$0xf]
                  %1626 = vst [vmem:[%s1598 + $0x34] sm:$0xf] %v1625
                  %v1627 = vld [vmem:[%s1597 + $0x38] sm:$0xf]
                  %1628 = vst [vmem:[%s1598 + $0x38] sm:$0xf] %v1627
                  %v1629 = vld [vmem:[%s1597 + $0x3c] sm:$0xf]
                  %1630 = vst [vmem:[%s1598 + $0x3c] sm:$0xf] %v1629
                  %v1631 = vld [vmem:[%s1597 + $0x40] sm:$0xf]
                  %1632 = vst [vmem:[%s1598 + $0x40] sm:$0xf] %v1631
                  %v1633 = vld [vmem:[%s1597 + $0x44] sm:$0xf]
                  %1634 = vst [vmem:[%s1598 + $0x44] sm:$0xf] %v1633
                  %v1635 = vld [vmem:[%s1597 + $0x48] sm:$0xf]
                  %1636 = vst [vmem:[%s1598 + $0x48] sm:$0xf] %v1635
                  %v1637 = vld [vmem:[%s1597 + $0x4c] sm:$0xf]
                  %1638 = vst [vmem:[%s1598 + $0x4c] sm:$0xf] %v1637
                  %v1639 = vld [vmem:[%s1597 + $0x50] sm:$0xf]
                  %1640 = vst [vmem:[%s1598 + $0x50] sm:$0xf] %v1639
                  %v1641 = vld [vmem:[%s1597 + $0x54] sm:$0xf]
                  %1642 = vst [vmem:[%s1598 + $0x54] sm:$0xf] %v1641
                  %v1643 = vld [vmem:[%s1597 + $0x58] sm:$0xf]
                  %1644 = vst [vmem:[%s1598 + $0x58] sm:$0xf] %v1643
                  %v1645 = vld [vmem:[%s1597 + $0x5c] sm:$0xf]
                  %1646 = vst [vmem:[%s1598 + $0x5c] sm:$0xf] %v1645
                  %v1647 = vld [vmem:[%s1597 + $0x60] sm:$0xf]
                  %1648 = vst [vmem:[%s1598 + $0x60] sm:$0xf] %v1647
                  %v1649 = vld [vmem:[%s1597 + $0x64] sm:$0xf]
                  %1650 = vst [vmem:[%s1598 + $0x64] sm:$0xf] %v1649
                  %v1651 = vld [vmem:[%s1597 + $0x68] sm:$0xf]
                  %1652 = vst [vmem:[%s1598 + $0x68] sm:$0xf] %v1651
                  %v1653 = vld [vmem:[%s1597 + $0x6c] sm:$0xf]
                  %1654 = vst [vmem:[%s1598 + $0x6c] sm:$0xf] %v1653
                  %v1655 = vld [vmem:[%s1597 + $0x70] sm:$0xf]
                  %1656 = vst [vmem:[%s1598 + $0x70] sm:$0xf] %v1655
                  %v1657 = vld [vmem:[%s1597 + $0x74] sm:$0xf]
                  %1658 = vst [vmem:[%s1598 + $0x74] sm:$0xf] %v1657
                  %v1659 = vld [vmem:[%s1597 + $0x78] sm:$0xf]
                  %1660 = vst [vmem:[%s1598 + $0x78] sm:$0xf] %v1659
                  %v1661 = vld [vmem:[%s1597 + $0x7c] sm:$0xf]
                  %1662 = vst [vmem:[%s1598 + $0x7c] sm:$0xf] %v1661
                  %v1663 = vld [vmem:[%s1597 + $0x80] sm:$0xf]
                  %1664 = vst [vmem:[%s1598 + $0x80] sm:$0xf] %v1663
                  %v1665 = vld [vmem:[%s1597 + $0x84] sm:$0xf]
                  %1666 = vst [vmem:[%s1598 + $0x84] sm:$0xf] %v1665
                  %v1667 = vld [vmem:[%s1597 + $0x88] sm:$0xf]
                  %1668 = vst [vmem:[%s1598 + $0x88] sm:$0xf] %v1667
                  %v1669 = vld [vmem:[%s1597 + $0x8c] sm:$0xf]
                  %1670 = vst [vmem:[%s1598 + $0x8c] sm:$0xf] %v1669
                  %v1671 = vld [vmem:[%s1597 + $0x90] sm:$0xf]
                  %1672 = vst [vmem:[%s1598 + $0x90] sm:$0xf] %v1671
                  %v1673 = vld [vmem:[%s1597 + $0x94] sm:$0xf]
                  %1674 = vst [vmem:[%s1598 + $0x94] sm:$0xf] %v1673
                  %v1675 = vld [vmem:[%s1597 + $0x98] sm:$0xf]
                  %1676 = vst [vmem:[%s1598 + $0x98] sm:$0xf] %v1675
                  %v1677 = vld [vmem:[%s1597 + $0x9c] sm:$0xf]
                  %1678 = vst [vmem:[%s1598 + $0x9c] sm:$0xf] %v1677
                  %v1679 = vld [vmem:[%s1597 + $0xa0] sm:$0xf]
                  %1680 = vst [vmem:[%s1598 + $0xa0] sm:$0xf] %v1679
                  %v1681 = vld [vmem:[%s1597 + $0xa4] sm:$0xf]
                  %1682 = vst [vmem:[%s1598 + $0xa4] sm:$0xf] %v1681
                  %v1683 = vld [vmem:[%s1597 + $0xa8] sm:$0xf]
                  %1684 = vst [vmem:[%s1598 + $0xa8] sm:$0xf] %v1683
                  %v1685 = vld [vmem:[%s1597 + $0xac] sm:$0xf]
                  %1686 = vst [vmem:[%s1598 + $0xac] sm:$0xf] %v1685
                  %v1687 = vld [vmem:[%s1597 + $0xb0] sm:$0xf]
                  %1688 = vst [vmem:[%s1598 + $0xb0] sm:$0xf] %v1687
                  %v1689 = vld [vmem:[%s1597 + $0xb4] sm:$0xf]
                  %1690 = vst [vmem:[%s1598 + $0xb4] sm:$0xf] %v1689
                  %v1691 = vld [vmem:[%s1597 + $0xb8] sm:$0xf]
                  %1692 = vst [vmem:[%s1598 + $0xb8] sm:$0xf] %v1691
                  %v1693 = vld [vmem:[%s1597 + $0xbc] sm:$0xf]
                  %1694 = vst [vmem:[%s1598 + $0xbc] sm:$0xf] %v1693
                  %v1695 = vld [vmem:[%s1597 + $0xc0] sm:$0xf]
                  %1696 = vst [vmem:[%s1598 + $0xc0] sm:$0xf] %v1695
                  %v1697 = vld [vmem:[%s1597 + $0xc4] sm:$0xf]
                  %1698 = vst [vmem:[%s1598 + $0xc4] sm:$0xf] %v1697
                  %v1699 = vld [vmem:[%s1597 + $0xc8] sm:$0xf]
                  %1700 = vst [vmem:[%s1598 + $0xc8] sm:$0xf] %v1699
                  %v1701 = vld [vmem:[%s1597 + $0xcc] sm:$0xf]
                  %1702 = vst [vmem:[%s1598 + $0xcc] sm:$0xf] %v1701
                  %v1703 = vld [vmem:[%s1597 + $0xd0] sm:$0xf]
                  %1704 = vst [vmem:[%s1598 + $0xd0] sm:$0xf] %v1703
                  %v1705 = vld [vmem:[%s1597 + $0xd4] sm:$0xf]
                  %1706 = vst [vmem:[%s1598 + $0xd4] sm:$0xf] %v1705
                  %v1707 = vld [vmem:[%s1597 + $0xd8] sm:$0xf]
                  %1708 = vst [vmem:[%s1598 + $0xd8] sm:$0xf] %v1707
                  %v1709 = vld [vmem:[%s1597 + $0xdc] sm:$0xf]
                  %1710 = vst [vmem:[%s1598 + $0xdc] sm:$0xf] %v1709
                  %v1711 = vld [vmem:[%s1597 + $0xe0] sm:$0xf]
                  %1712 = vst [vmem:[%s1598 + $0xe0] sm:$0xf] %v1711
                  %v1713 = vld [vmem:[%s1597 + $0xe4] sm:$0xf]
                  %1714 = vst [vmem:[%s1598 + $0xe4] sm:$0xf] %v1713
                  %v1715 = vld [vmem:[%s1597 + $0xe8] sm:$0xf]
                  %1716 = vst [vmem:[%s1598 + $0xe8] sm:$0xf] %v1715
                  %v1717 = vld [vmem:[%s1597 + $0xec] sm:$0xf]
                  %1718 = vst [vmem:[%s1598 + $0xec] sm:$0xf] %v1717
                  %v1719 = vld [vmem:[%s1597 + $0xf0] sm:$0xf]
                  %1720 = vst [vmem:[%s1598 + $0xf0] sm:$0xf] %v1719
                  %v1721 = vld [vmem:[%s1597 + $0xf4] sm:$0xf]
                  %1722 = vst [vmem:[%s1598 + $0xf4] sm:$0xf] %v1721
                  %v1723 = vld [vmem:[%s1597 + $0xf8] sm:$0xf]
                  %1724 = vst [vmem:[%s1598 + $0xf8] sm:$0xf] %v1723
                  %v1725 = vld [vmem:[%s1597 + $0xfc] sm:$0xf]
                  %1726 = vst [vmem:[%s1598 + $0xfc] sm:$0xf] %v1725
                  %s1727 = sadd.s32 1, %s1596
                  %p1728 = scmp.ge.s32.totalorder %s1727, %s1589
                  %s1729 = scalar_select %p1728, 0, %s1727
                  %s1730 = smul.u32 %s1729, 256
                  %s1731 = smul.u32 %s1729, 256
                  %s1732 = scalar_lea.vmem %s1396, %s1730 [#allocation2]
                  %s1733 = scalar_lea.vmem %s1407, %s1731
                $region71: #{dqn_forward.4} parent=65 // loop_footer
                  %s1593 = sadd.s32 %s1591, 1
                $region72: #{dqn_forward.4} parent=65 // loop_footer_branch
                  %1590 = sbr.rel target = $region68
                $region73: #{dqn_forward.4} parent=65 // loop_exit
                  _
                %s1734 = sshrl.u32 %s1403, 6
                %s1735 = sand.u32 %s1403, 63
                %s1736 = smul.u32 %s1734, 64
                %s1737 = smul.u32 4, %s1736
                %s1738 = scalar_lea.vmem %s1396, %s1737 [#allocation2]
                %s1739 = smul.u32 4, %s1736
                %s1740 = scalar_lea.vmem %s1407, %s1739
                // While loop
                $region74: #{dqn_forward.4} parent=65 // loop_pre_header
                  _
                $region75: #{dqn_forward.4} parent=65 // loop_header
                  %s1742 = sphi 0, %s1744
                  %p1743 = scmp.ge.s32.totalorder %s1742, %s1735
                  %s1747 = sphi 0, %s1754
                  %s1748 = sphi %s1738, %s1757
                  %s1749 = sphi %s1740, %s1758
                $region76: #{dqn_forward.4} parent=65 // loop_header_branch
                  %1746 = sbr.rel (%p1743) target = $region80
                $region77: #{dqn_forward.4} parent=65 // loop_body
                  %v1750 = vld [vmem:[%s1748] sm:$0xf]
                  %1751 = vst [vmem:[%s1749] sm:$0xf] %v1750
                  %s1752 = sadd.s32 1, %s1747
                  %p1753 = scmp.ge.s32.totalorder %s1752, %s1735
                  %s1754 = scalar_select %p1753, 0, %s1752
                  %s1755 = smul.u32 %s1754, 4
                  %s1756 = smul.u32 %s1754, 4
                  %s1757 = scalar_lea.vmem %s1738, %s1755 [#allocation2]
                  %s1758 = scalar_lea.vmem %s1740, %s1756
                $region78: #{dqn_forward.4} parent=65 // loop_footer
                  %s1744 = sadd.s32 %s1742, 1
                $region79: #{dqn_forward.4} parent=65 // loop_footer_branch
                  %1741 = sbr.rel target = $region75
                $region80: #{dqn_forward.4} parent=65 // loop_exit
                  _
              $region66: #{dqn_forward.4} parent=43 // pred_fallthru
                _
            $region44: #{dqn_forward.4} parent=39 // pred_fallthru
              _
            // Predicated region
            $region45: #{dqn_forward.4} parent=39 // pred_check
              _
            $region46: #{dqn_forward.4} parent=39 // pred_check_branch
              %1414 = sbr.rel (0) target = $region48
            $region47: #{dqn_forward.4} parent=39 // pred_region
              %s1416 = sshrl.u32 %s1403, 6
              // While loop
              $region49: #{dqn_forward.4} parent=47 // loop_pre_header
                _
              $region50: #{dqn_forward.4} parent=47 // loop_header
                %s1418 = sphi 0, %s1420
                %p1419 = scmp.ge.s32.totalorder %s1418, %s1416
                %s1423 = sphi 0, %s1556
                %s1424 = sphi %s1396, %s1559
                %s1425 = sphi %s1407, %s1560
              $region51: #{dqn_forward.4} parent=47 // loop_header_branch
                %1422 = sbr.rel (%p1419) target = $region55
              $region52: #{dqn_forward.4} parent=47 // loop_body
                %v1426 = vld [vmem:[%s1424] sm:$0xf]
                %1427 = vst [vmem:[%s1425] sm:$0xf] %v1426
                %v1428 = vld [vmem:[%s1424 + $0x4] sm:$0xf]
                %1429 = vst [vmem:[%s1425 + $0x4] sm:$0xf] %v1428
                %v1430 = vld [vmem:[%s1424 + $0x8] sm:$0xf]
                %1431 = vst [vmem:[%s1425 + $0x8] sm:$0xf] %v1430
                %v1432 = vld [vmem:[%s1424 + $0xc] sm:$0xf]
                %1433 = vst [vmem:[%s1425 + $0xc] sm:$0xf] %v1432
                %v1434 = vld [vmem:[%s1424 + $0x10] sm:$0xf]
                %1435 = vst [vmem:[%s1425 + $0x10] sm:$0xf] %v1434
                %v1436 = vld [vmem:[%s1424 + $0x14] sm:$0xf]
                %1437 = vst [vmem:[%s1425 + $0x14] sm:$0xf] %v1436
                %v1438 = vld [vmem:[%s1424 + $0x18] sm:$0xf]
                %1439 = vst [vmem:[%s1425 + $0x18] sm:$0xf] %v1438
                %v1440 = vld [vmem:[%s1424 + $0x1c] sm:$0xf]
                %1441 = vst [vmem:[%s1425 + $0x1c] sm:$0xf] %v1440
                %v1442 = vld [vmem:[%s1424 + $0x20] sm:$0xf]
                %1443 = vst [vmem:[%s1425 + $0x20] sm:$0xf] %v1442
                %v1444 = vld [vmem:[%s1424 + $0x24] sm:$0xf]
                %1445 = vst [vmem:[%s1425 + $0x24] sm:$0xf] %v1444
                %v1446 = vld [vmem:[%s1424 + $0x28] sm:$0xf]
                %1447 = vst [vmem:[%s1425 + $0x28] sm:$0xf] %v1446
                %v1448 = vld [vmem:[%s1424 + $0x2c] sm:$0xf]
                %1449 = vst [vmem:[%s1425 + $0x2c] sm:$0xf] %v1448
                %v1450 = vld [vmem:[%s1424 + $0x30] sm:$0xf]
                %1451 = vst [vmem:[%s1425 + $0x30] sm:$0xf] %v1450
                %v1452 = vld [vmem:[%s1424 + $0x34] sm:$0xf]
                %1453 = vst [vmem:[%s1425 + $0x34] sm:$0xf] %v1452
                %v1454 = vld [vmem:[%s1424 + $0x38] sm:$0xf]
                %1455 = vst [vmem:[%s1425 + $0x38] sm:$0xf] %v1454
                %v1456 = vld [vmem:[%s1424 + $0x3c] sm:$0xf]
                %1457 = vst [vmem:[%s1425 + $0x3c] sm:$0xf] %v1456
                %v1458 = vld [vmem:[%s1424 + $0x40] sm:$0xf]
                %1459 = vst [vmem:[%s1425 + $0x40] sm:$0xf] %v1458
                %v1460 = vld [vmem:[%s1424 + $0x44] sm:$0xf]
                %1461 = vst [vmem:[%s1425 + $0x44] sm:$0xf] %v1460
                %v1462 = vld [vmem:[%s1424 + $0x48] sm:$0xf]
                %1463 = vst [vmem:[%s1425 + $0x48] sm:$0xf] %v1462
                %v1464 = vld [vmem:[%s1424 + $0x4c] sm:$0xf]
                %1465 = vst [vmem:[%s1425 + $0x4c] sm:$0xf] %v1464
                %v1466 = vld [vmem:[%s1424 + $0x50] sm:$0xf]
                %1467 = vst [vmem:[%s1425 + $0x50] sm:$0xf] %v1466
                %v1468 = vld [vmem:[%s1424 + $0x54] sm:$0xf]
                %1469 = vst [vmem:[%s1425 + $0x54] sm:$0xf] %v1468
                %v1470 = vld [vmem:[%s1424 + $0x58] sm:$0xf]
                %1471 = vst [vmem:[%s1425 + $0x58] sm:$0xf] %v1470
                %v1472 = vld [vmem:[%s1424 + $0x5c] sm:$0xf]
                %1473 = vst [vmem:[%s1425 + $0x5c] sm:$0xf] %v1472
                %v1474 = vld [vmem:[%s1424 + $0x60] sm:$0xf]
                %1475 = vst [vmem:[%s1425 + $0x60] sm:$0xf] %v1474
                %v1476 = vld [vmem:[%s1424 + $0x64] sm:$0xf]
                %1477 = vst [vmem:[%s1425 + $0x64] sm:$0xf] %v1476
                %v1478 = vld [vmem:[%s1424 + $0x68] sm:$0xf]
                %1479 = vst [vmem:[%s1425 + $0x68] sm:$0xf] %v1478
                %v1480 = vld [vmem:[%s1424 + $0x6c] sm:$0xf]
                %1481 = vst [vmem:[%s1425 + $0x6c] sm:$0xf] %v1480
                %v1482 = vld [vmem:[%s1424 + $0x70] sm:$0xf]
                %1483 = vst [vmem:[%s1425 + $0x70] sm:$0xf] %v1482
                %v1484 = vld [vmem:[%s1424 + $0x74] sm:$0xf]
                %1485 = vst [vmem:[%s1425 + $0x74] sm:$0xf] %v1484
                %v1486 = vld [vmem:[%s1424 + $0x78] sm:$0xf]
                %1487 = vst [vmem:[%s1425 + $0x78] sm:$0xf] %v1486
                %v1488 = vld [vmem:[%s1424 + $0x7c] sm:$0xf]
                %1489 = vst [vmem:[%s1425 + $0x7c] sm:$0xf] %v1488
                %v1490 = vld [vmem:[%s1424 + $0x80] sm:$0xf]
                %1491 = vst [vmem:[%s1425 + $0x80] sm:$0xf] %v1490
                %v1492 = vld [vmem:[%s1424 + $0x84] sm:$0xf]
                %1493 = vst [vmem:[%s1425 + $0x84] sm:$0xf] %v1492
                %v1494 = vld [vmem:[%s1424 + $0x88] sm:$0xf]
                %1495 = vst [vmem:[%s1425 + $0x88] sm:$0xf] %v1494
                %v1496 = vld [vmem:[%s1424 + $0x8c] sm:$0xf]
                %1497 = vst [vmem:[%s1425 + $0x8c] sm:$0xf] %v1496
                %v1498 = vld [vmem:[%s1424 + $0x90] sm:$0xf]
                %1499 = vst [vmem:[%s1425 + $0x90] sm:$0xf] %v1498
                %v1500 = vld [vmem:[%s1424 + $0x94] sm:$0xf]
                %1501 = vst [vmem:[%s1425 + $0x94] sm:$0xf] %v1500
                %v1502 = vld [vmem:[%s1424 + $0x98] sm:$0xf]
                %1503 = vst [vmem:[%s1425 + $0x98] sm:$0xf] %v1502
                %v1504 = vld [vmem:[%s1424 + $0x9c] sm:$0xf]
                %1505 = vst [vmem:[%s1425 + $0x9c] sm:$0xf] %v1504
                %v1506 = vld [vmem:[%s1424 + $0xa0] sm:$0xf]
                %1507 = vst [vmem:[%s1425 + $0xa0] sm:$0xf] %v1506
                %v1508 = vld [vmem:[%s1424 + $0xa4] sm:$0xf]
                %1509 = vst [vmem:[%s1425 + $0xa4] sm:$0xf] %v1508
                %v1510 = vld [vmem:[%s1424 + $0xa8] sm:$0xf]
                %1511 = vst [vmem:[%s1425 + $0xa8] sm:$0xf] %v1510
                %v1512 = vld [vmem:[%s1424 + $0xac] sm:$0xf]
                %1513 = vst [vmem:[%s1425 + $0xac] sm:$0xf] %v1512
                %v1514 = vld [vmem:[%s1424 + $0xb0] sm:$0xf]
                %1515 = vst [vmem:[%s1425 + $0xb0] sm:$0xf] %v1514
                %v1516 = vld [vmem:[%s1424 + $0xb4] sm:$0xf]
                %1517 = vst [vmem:[%s1425 + $0xb4] sm:$0xf] %v1516
                %v1518 = vld [vmem:[%s1424 + $0xb8] sm:$0xf]
                %1519 = vst [vmem:[%s1425 + $0xb8] sm:$0xf] %v1518
                %v1520 = vld [vmem:[%s1424 + $0xbc] sm:$0xf]
                %1521 = vst [vmem:[%s1425 + $0xbc] sm:$0xf] %v1520
                %v1522 = vld [vmem:[%s1424 + $0xc0] sm:$0xf]
                %1523 = vst [vmem:[%s1425 + $0xc0] sm:$0xf] %v1522
                %v1524 = vld [vmem:[%s1424 + $0xc4] sm:$0xf]
                %1525 = vst [vmem:[%s1425 + $0xc4] sm:$0xf] %v1524
                %v1526 = vld [vmem:[%s1424 + $0xc8] sm:$0xf]
                %1527 = vst [vmem:[%s1425 + $0xc8] sm:$0xf] %v1526
                %v1528 = vld [vmem:[%s1424 + $0xcc] sm:$0xf]
                %1529 = vst [vmem:[%s1425 + $0xcc] sm:$0xf] %v1528
                %v1530 = vld [vmem:[%s1424 + $0xd0] sm:$0xf]
                %1531 = vst [vmem:[%s1425 + $0xd0] sm:$0xf] %v1530
                %v1532 = vld [vmem:[%s1424 + $0xd4] sm:$0xf]
                %1533 = vst [vmem:[%s1425 + $0xd4] sm:$0xf] %v1532
                %v1534 = vld [vmem:[%s1424 + $0xd8] sm:$0xf]
                %1535 = vst [vmem:[%s1425 + $0xd8] sm:$0xf] %v1534
                %v1536 = vld [vmem:[%s1424 + $0xdc] sm:$0xf]
                %1537 = vst [vmem:[%s1425 + $0xdc] sm:$0xf] %v1536
                %v1538 = vld [vmem:[%s1424 + $0xe0] sm:$0xf]
                %1539 = vst [vmem:[%s1425 + $0xe0] sm:$0xf] %v1538
                %v1540 = vld [vmem:[%s1424 + $0xe4] sm:$0xf]
                %1541 = vst [vmem:[%s1425 + $0xe4] sm:$0xf] %v1540
                %v1542 = vld [vmem:[%s1424 + $0xe8] sm:$0xf]
                %1543 = vst [vmem:[%s1425 + $0xe8] sm:$0xf] %v1542
                %v1544 = vld [vmem:[%s1424 + $0xec] sm:$0xf]
                %1545 = vst [vmem:[%s1425 + $0xec] sm:$0xf] %v1544
                %v1546 = vld [vmem:[%s1424 + $0xf0] sm:$0xf]
                %1547 = vst [vmem:[%s1425 + $0xf0] sm:$0xf] %v1546
                %v1548 = vld [vmem:[%s1424 + $0xf4] sm:$0xf]
                %1549 = vst [vmem:[%s1425 + $0xf4] sm:$0xf] %v1548
                %v1550 = vld [vmem:[%s1424 + $0xf8] sm:$0xf]
                %1551 = vst [vmem:[%s1425 + $0xf8] sm:$0xf] %v1550
                %v1552 = vld [vmem:[%s1424 + $0xfc] sm:$0xf]
                %1553 = vst [vmem:[%s1425 + $0xfc] sm:$0xf] %v1552
                %s1554 = sadd.s32 1, %s1423
                %p1555 = scmp.ge.s32.totalorder %s1554, %s1416
                %s1556 = scalar_select %p1555, 0, %s1554
                %s1557 = smul.u32 %s1556, 256
                %s1558 = smul.u32 %s1556, 256
                %s1559 = scalar_lea.vmem %s1396, %s1557 [#allocation2]
                %s1560 = scalar_lea.vmem %s1407, %s1558
              $region53: #{dqn_forward.4} parent=47 // loop_footer
                %s1420 = sadd.s32 %s1418, 1
              $region54: #{dqn_forward.4} parent=47 // loop_footer_branch
                %1417 = sbr.rel target = $region50
              $region55: #{dqn_forward.4} parent=47 // loop_exit
                _
              %s1561 = sshrl.u32 %s1403, 6
              %s1562 = sand.u32 %s1403, 63
              %s1563 = smul.u32 %s1561, 64
              %s1564 = smul.u32 4, %s1563
              %s1565 = scalar_lea.vmem %s1396, %s1564 [#allocation2]
              %s1566 = smul.u32 4, %s1563
              %s1567 = scalar_lea.vmem %s1407, %s1566
              // While loop
              $region56: #{dqn_forward.4} parent=47 // loop_pre_header
                _
              $region57: #{dqn_forward.4} parent=47 // loop_header
                %s1569 = sphi 0, %s1571
                %p1570 = scmp.ge.s32.totalorder %s1569, %s1562
                %s1574 = sphi 0, %s1581
                %s1575 = sphi %s1565, %s1584
                %s1576 = sphi %s1567, %s1585
              $region58: #{dqn_forward.4} parent=47 // loop_header_branch
                %1573 = sbr.rel (%p1570) target = $region62
              $region59: #{dqn_forward.4} parent=47 // loop_body
                %v1577 = vld [vmem:[%s1575] sm:$0xf]
                %1578 = vst [vmem:[%s1576] sm:$0xf] %v1577
                %s1579 = sadd.s32 1, %s1574
                %p1580 = scmp.ge.s32.totalorder %s1579, %s1562
                %s1581 = scalar_select %p1580, 0, %s1579
                %s1582 = smul.u32 %s1581, 4
                %s1583 = smul.u32 %s1581, 4
                %s1584 = scalar_lea.vmem %s1565, %s1582 [#allocation2]
                %s1585 = scalar_lea.vmem %s1567, %s1583
              $region60: #{dqn_forward.4} parent=47 // loop_footer
                %s1571 = sadd.s32 %s1569, 1
              $region61: #{dqn_forward.4} parent=47 // loop_footer_branch
                %1568 = sbr.rel target = $region57
              $region62: #{dqn_forward.4} parent=47 // loop_exit
                _
            $region48: #{dqn_forward.4} parent=39 // pred_fallthru
              _
          $region40: #{dqn_forward.4} parent=35 // pred_fallthru
            _
          %1759 = vnop
        $region36: #{dqn_forward.4} parent=31 // pred_fallthru
          _
      $region32: #{dqn_forward.4} parent=5 // pred_fallthru
        _
      %p1760 = scmp.le.s32.totalorder 2, %s9
      // Predicated region
      $region81: #{dqn_forward.4} parent=5 // pred_check
        %p1761 = pneg %p1760
      $region82: #{dqn_forward.4} parent=5 // pred_check_branch
        %1763 = sbr.rel (%p1761) target = $region84
      $region83: #{dqn_forward.4} parent=5 // pred_region
        %s1764 = ssub.s32 %s9, 2
        // Predicated region
        $region85: #{dqn_forward.4} parent=83 // pred_check
          %p1765 = pneg %p106
        $region86: #{dqn_forward.4} parent=83 // pred_check_branch
          %1767 = sbr.rel (%p1765) target = $region88
        $region87: #{dqn_forward.4} parent=83 // pred_region
          %s1768 = sand.u32 %s91, 1
          %s1769 = sand.u32 %s91, 1
          %s1770 = smul.addr %s1769, 256
          %s1771 = scalar_lea.vmem [#allocation2], %s1770
        $region88: #{dqn_forward.4} parent=83 // pred_fallthru
          _
      $region84: #{dqn_forward.4} parent=5 // pred_fallthru
        _
    $region6: #{dqn_forward.4} parent=1 // loop_footer
      %s13 = sadd.s32 1, %s9
    $region7: #{dqn_forward.4} parent=1 // loop_footer_branch
      %8 = sbr.rel target = $region3
    $region8: #{dqn_forward.4} parent=1 // loop_exit
      _

// kernel: dqn_forward.5
$region0: #{dqn_forward.5}
  #allocation0 [shape = 'u32[]', space=smem, size = 0x4, offset = 0x4, fixed_abs, tag = 'smem constant byte address 0x4 - core index']
  #allocation1 [shape = 'u32[144,128]{1,0:T(1,128)}', space=vmem, size = 0x12000, scoped, tag = 'internal scratch']
  %s0 = inlined_call_operand.vmem [shape: bf16[162,256], index: 0, kind: input, shape index: {}]
  %s1 = inlined_call_operand.vmem [shape: bf16[256,128], index: 1, kind: input, shape index: {}]
  %s2 = inlined_call_operand.vmem [shape: f32[1,128], index: 2, kind: input, shape index: {}]
  %s3 = inlined_call_operand.vmem [shape: bf16[162,128], index: 3, kind: output, shape index: {}]
  %s4 = sld [smem:[#allocation0]]
  $region22: #{dqn_forward.5} parent=0
    _
  %s6 = ssub.s32 1, %s4
  %s7 = scalar_select 0, %s6, %s4
  // Predicated region
  $region2: #{dqn_forward.5} parent=0 // pred_check
    _
  $region3: #{dqn_forward.5} parent=0 // pred_check_branch
    %9 = sbr.rel (0) target = $region5
  $region4: #{dqn_forward.5} parent=0 // pred_region
    _
  $region5: #{dqn_forward.5} parent=0 // pred_fallthru
    _
  // Predicated region
  $region6: #{dqn_forward.5} parent=0 // pred_check
    _
  $region7: #{dqn_forward.5} parent=0 // pred_check_branch
    %11 = sbr.rel (0) target = $region9
  $region8: #{dqn_forward.5} parent=0 // pred_region
    _
  $region9: #{dqn_forward.5} parent=0 // pred_fallthru
    _
  // Predicated region
  $region10: #{dqn_forward.5} parent=0 // pred_check
    _
  $region11: #{dqn_forward.5} parent=0 // pred_check_branch
    %13 = sbr.rel (0) target = $region13
  $region12: #{dqn_forward.5} parent=0 // pred_region
    _
  $region13: #{dqn_forward.5} parent=0 // pred_fallthru
    _
  %v15 = vld [vmem:[%s0] sm:$0xff]
  %v16 = vld [vmem:[%s0 + $0x8] sm:$0xff]
  %v17 = vld [vmem:[%s0 + $0x10] sm:$0xff]
  %v18 = vld [vmem:[%s0 + $0x18] sm:$0xff]
  %v19 = vld [vmem:[%s0 + $0x20] sm:$0xff]
  %v20 = vld [vmem:[%s0 + $0x28] sm:$0xff]
  %v21 = vld [vmem:[%s0 + $0x30] sm:$0xff]
  %v22 = vld [vmem:[%s0 + $0x38] sm:$0xff]
  %v23 = vld [vmem:[%s0 + $0x40] sm:$0xff]
  %v24 = vld [vmem:[%s0 + $0x48] sm:$0xff]
  %v25 = vld [vmem:[%s0 + $0x50] sm:$0xff]
  %v26 = vld [vmem:[%s0 + $0x58] sm:$0xff]
  %v27 = vld [vmem:[%s0 + $0x60] sm:$0xff]
  %v28 = vld [vmem:[%s0 + $0x68] sm:$0xff]
  %v29 = vld [vmem:[%s0 + $0x70] sm:$0xff]
  %v30 = vld [vmem:[%s0 + $0x78] sm:$0xff]
  %v31 = vld [vmem:[%s0 + $0x80] sm:$0xff]
  %v32 = vld [vmem:[%s0 + $0x88] sm:$0xff]
  %v33 = vld [vmem:[%s0 + $0x90] sm:$0xff]
  %v34 = vld [vmem:[%s0 + $0x98] sm:$0xff]
  %v35 = vld [vmem:[%s0 + $0xa0] sm:$0x11]
  %v36 = vld [vmem:[%s1] sm:$0xf]
  %v37 = vld [vmem:[%s1 + $0x4] sm:$0xf]
  %v38 = vld [vmem:[%s1 + $0x8] sm:$0xf]
  %v39 = vld [vmem:[%s1 + $0xc] sm:$0xf]
  %v40 = vld [vmem:[%s1 + $0x10] sm:$0xf]
  %v41 = vld [vmem:[%s1 + $0x14] sm:$0xf]
  %v42 = vld [vmem:[%s1 + $0x18] sm:$0xf]
  %v43 = vld [vmem:[%s1 + $0x1c] sm:$0xf]
  %v44 = vld [vmem:[%s1 + $0x20] sm:$0xf]
  %v45 = vld [vmem:[%s1 + $0x24] sm:$0xf]
  %v46 = vld [vmem:[%s1 + $0x28] sm:$0xf]
  %v47 = vld [vmem:[%s1 + $0x2c] sm:$0xf]
  %v48 = vld [vmem:[%s1 + $0x30] sm:$0xf]
  %v49 = vld [vmem:[%s1 + $0x34] sm:$0xf]
  %v50 = vld [vmem:[%s1 + $0x38] sm:$0xf]
  %v51 = vld [vmem:[%s1 + $0x3c] sm:$0xf]
  %v52 = vld [vmem:[%s1 + $0x40] sm:$0xf]
  %v53 = vld [vmem:[%s1 + $0x44] sm:$0xf]
  %v54 = vld [vmem:[%s1 + $0x48] sm:$0xf]
  %v55 = vld [vmem:[%s1 + $0x4c] sm:$0xf]
  %v56 = vld [vmem:[%s1 + $0x50] sm:$0xf]
  %v57 = vld [vmem:[%s1 + $0x54] sm:$0xf]
  %v58 = vld [vmem:[%s1 + $0x58] sm:$0xf]
  %v59 = vld [vmem:[%s1 + $0x5c] sm:$0xf]
  %v60 = vld [vmem:[%s1 + $0x60] sm:$0xf]
  %v61 = vld [vmem:[%s1 + $0x64] sm:$0xf]
  %v62 = vld [vmem:[%s1 + $0x68] sm:$0xf]
  %v63 = vld [vmem:[%s1 + $0x6c] sm:$0xf]
  %v64 = vld [vmem:[%s1 + $0x70] sm:$0xf]
  %v65 = vld [vmem:[%s1 + $0x74] sm:$0xf]
  %v66 = vld [vmem:[%s1 + $0x78] sm:$0xf]
  %v67 = vld [vmem:[%s1 + $0x7c] sm:$0xf]
  %v68 = vld [vmem:[%s2] sm:$0x1]
  %v70 = vlaneseq
  %v71 = vshrl.u32 %v70, 7
  %v72 = vsub.s32 0, %v71
  %v73 = vrot.slane %v68, %v72
  %v96 = vunpack.c.l.b16 %v15
  %v97 = vunpack.c.h.b16 %v15
  %v98 = vunpack.c.l.b16 %v16
  %v99 = vunpack.c.h.b16 %v16
  %v100 = vunpack.c.l.b16 %v17
  %v101 = vunpack.c.h.b16 %v17
  %v102 = vunpack.c.l.b16 %v18
  %v103 = vunpack.c.h.b16 %v18
  %v104 = vunpack.c.l.b16 %v19
  %v105 = vunpack.c.h.b16 %v19
  %v106 = vunpack.c.l.b16 %v20
  %v107 = vunpack.c.h.b16 %v20
  %v108 = vunpack.c.l.b16 %v21
  %v109 = vunpack.c.h.b16 %v21
  %v110 = vunpack.c.l.b16 %v22
  %v111 = vunpack.c.h.b16 %v22
  %v112 = vunpack.c.l.b16 %v23
  %v113 = vunpack.c.h.b16 %v23
  %v114 = vunpack.c.l.b16 %v24
  %v115 = vunpack.c.h.b16 %v24
  %v116 = vunpack.c.l.b16 %v25
  %v117 = vunpack.c.h.b16 %v25
  %v118 = vunpack.c.l.b16 %v26
  %v119 = vunpack.c.h.b16 %v26
  %v120 = vunpack.c.l.b16 %v27
  %v121 = vunpack.c.h.b16 %v27
  %v122 = vunpack.c.l.b16 %v28
  %v123 = vunpack.c.h.b16 %v28
  %v124 = vunpack.c.l.b16 %v29
  %v125 = vunpack.c.h.b16 %v29
  %v126 = vunpack.c.l.b16 %v30
  %v127 = vunpack.c.h.b16 %v30
  %v128 = vunpack.c.l.b16 %v31
  %v129 = vunpack.c.h.b16 %v31
  %v130 = vunpack.c.l.b16 %v32
  %v131 = vunpack.c.h.b16 %v32
  %v132 = vunpack.c.l.b16 %v33
  %v133 = vunpack.c.h.b16 %v33
  %v134 = vunpack.c.l.b16 %v34
  %v135 = vunpack.c.h.b16 %v34
  %v136 = vunpack.c.l.b16 %v35
  %v137 = vunpack.c.h.b16 %v35
  %v138 = vpack.c.b16 %v98, %v96
  %v139 = vpack.c.b16 %v99, %v97
  %v140 = vpack.c.b16 %v102, %v100
  %v141 = vpack.c.b16 %v103, %v101
  %v142 = vpack.c.b16 %v106, %v104
  %v143 = vpack.c.b16 %v107, %v105
  %v144 = vpack.c.b16 %v110, %v108
  %v145 = vpack.c.b16 %v111, %v109
  %v146 = vpack.c.b16 %v114, %v112
  %v147 = vpack.c.b16 %v115, %v113
  %v148 = vpack.c.b16 %v118, %v116
  %v149 = vpack.c.b16 %v119, %v117
  %v150 = vpack.c.b16 %v122, %v120
  %v151 = vpack.c.b16 %v123, %v121
  %v152 = vpack.c.b16 %v126, %v124
  %v153 = vpack.c.b16 %v127, %v125
  %v154 = vpack.c.b16 %v130, %v128
  %v155 = vpack.c.b16 %v131, %v129
  %v156 = vpack.c.b16 %v134, %v132
  %v157 = vpack.c.b16 %v135, %v133
  %v158 = vpack.c.b16 %v136, %v136
  %v159 = vpack.c.b16 %v137, %v137
  %v214 = vunpack.c.l.b16 %v36
  %v215 = vunpack.c.l.b16 %v37
  %v216 = vunpack.c.l.b16 %v38
  %v217 = vunpack.c.l.b16 %v39
  %v218 = vunpack.c.l.b16 %v40
  %v219 = vunpack.c.l.b16 %v41
  %v220 = vunpack.c.l.b16 %v42
  %v221 = vunpack.c.l.b16 %v43
  %v222 = vunpack.c.l.b16 %v44
  %v223 = vunpack.c.l.b16 %v45
  %v224 = vunpack.c.l.b16 %v46
  %v225 = vunpack.c.l.b16 %v47
  %v226 = vunpack.c.l.b16 %v48
  %v227 = vunpack.c.l.b16 %v49
  %v228 = vunpack.c.l.b16 %v50
  %v229 = vunpack.c.l.b16 %v51
  %v230 = vunpack.c.l.b16 %v52
  %v231 = vunpack.c.l.b16 %v53
  %v232 = vunpack.c.l.b16 %v54
  %v233 = vunpack.c.l.b16 %v55
  %v234 = vunpack.c.l.b16 %v56
  %v235 = vunpack.c.l.b16 %v57
  %v236 = vunpack.c.l.b16 %v58
  %v237 = vunpack.c.l.b16 %v59
  %v238 = vunpack.c.l.b16 %v60
  %v239 = vunpack.c.l.b16 %v61
  %v240 = vunpack.c.l.b16 %v62
  %v241 = vunpack.c.l.b16 %v63
  %v242 = vunpack.c.l.b16 %v64
  %v243 = vunpack.c.l.b16 %v65
  %v244 = vunpack.c.l.b16 %v66
  %v245 = vunpack.c.l.b16 %v67
  %v246 = vpack.c.b16 %v215, %v214
  %v247 = vpack.c.b16 %v217, %v216
  %v248 = vpack.c.b16 %v219, %v218
  %v249 = vpack.c.b16 %v221, %v220
  %v250 = vpack.c.b16 %v223, %v222
  %v251 = vpack.c.b16 %v225, %v224
  %v252 = vpack.c.b16 %v227, %v226
  %v253 = vpack.c.b16 %v229, %v228
  %v254 = vpack.c.b16 %v231, %v230
  %v255 = vpack.c.b16 %v233, %v232
  %v256 = vpack.c.b16 %v235, %v234
  %v257 = vpack.c.b16 %v237, %v236
  %v258 = vpack.c.b16 %v239, %v238
  %v259 = vpack.c.b16 %v241, %v240
  %v260 = vpack.c.b16 %v243, %v242
  %v261 = vpack.c.b16 %v245, %v244
  %278 = vmatprep.subr.bf16.mxu0 0
  %279 = vmatpush1.bf16.msra.mxu0 %v246
  %280 = vmatprep.subr.bf16.mxu0 0
  %281 = vmatpush1.bf16.msra.mxu0 %v247
  %282 = vmatprep.subr.bf16.mxu0 0
  %283 = vmatpush1.bf16.msra.mxu0 %v248
  %284 = vmatprep.subr.bf16.mxu0 0
  %285 = vmatpush1.bf16.msra.mxu0 %v249
  %286 = vmatprep.subr.bf16.mxu0 0
  %287 = vmatpush1.bf16.msra.mxu0 %v250
  %288 = vmatprep.subr.bf16.mxu0 0
  %289 = vmatpush1.bf16.msra.mxu0 %v251
  %290 = vmatprep.subr.bf16.mxu0 0
  %291 = vmatpush1.bf16.msra.mxu0 %v252
  %292 = vmatprep.subr.bf16.mxu0 0
  %293 = vmatpush1.bf16.msra.mxu0 %v253
  %294 = vmatprep.subr.bf16.mxu0 0
  %295 = vmatpush1.bf16.msra.mxu0 %v254
  %296 = vmatprep.subr.bf16.mxu0 0
  %297 = vmatpush1.bf16.msra.mxu0 %v255
  %298 = vmatprep.subr.bf16.mxu0 0
  %299 = vmatpush1.bf16.msra.mxu0 %v256
  %300 = vmatprep.subr.bf16.mxu0 0
  %301 = vmatpush1.bf16.msra.mxu0 %v257
  %302 = vmatprep.subr.bf16.mxu0 0
  %303 = vmatpush1.bf16.msra.mxu0 %v258
  %304 = vmatprep.subr.bf16.mxu0 0
  %305 = vmatpush1.bf16.msra.mxu0 %v259
  %306 = vmatprep.subr.bf16.mxu0 0
  %307 = vmatpush1.bf16.msra.mxu0 %v260
  %308 = vmatprep.subr.bf16.mxu0 0
  %309 = vmatpush1.bf16.msra.mxu0 %v261
  %310 = vmatprep.mubr.bf16.mxu0 %v139
  %311 = vmatmul.mubr.bf16.gmra.mrb[0].mxu0 %v138
  %v312 = vpop.f32.mrb[0].mxu0
  %v313 = vadd.f32 %v73, %v312
  %v314 = vpop.f32.mrb[0].mxu0
  %v315 = vpop.f32.mrb[0].mxu0
  %v316 = vadd.f32 %v73, %v315
  %v317 = vpop.f32.mrb[0].mxu0
  %318 = vmatprep.mubr.bf16.mxu0 %v141
  %319 = vmatmul.mubr.bf16.gmra.mrb[0].mxu0 %v140
  %v320 = vpop.f32.mrb[0].mxu0
  %v321 = vadd.f32 %v73, %v320
  %v322 = vpop.f32.mrb[0].mxu0
  %v323 = vpop.f32.mrb[0].mxu0
  %v324 = vadd.f32 %v73, %v323
  %v325 = vpop.f32.mrb[0].mxu0
  %326 = vmatprep.mubr.bf16.mxu0 %v143
  %327 = vmatmul.mubr.bf16.gmra.mrb[0].mxu0 %v142
  %v328 = vpop.f32.mrb[0].mxu0
  %v329 = vadd.f32 %v73, %v328
  %v330 = vpop.f32.mrb[0].mxu0
  %v331 = vpop.f32.mrb[0].mxu0
  %v332 = vadd.f32 %v73, %v331
  %v333 = vpop.f32.mrb[0].mxu0
  %334 = vmatprep.mubr.bf16.mxu0 %v145
  %335 = vmatmul.mubr.bf16.gmra.mrb[0].mxu0 %v144
  %v336 = vpop.f32.mrb[0].mxu0
  %v337 = vadd.f32 %v73, %v336
  %v338 = vpop.f32.mrb[0].mxu0
  %v339 = vpop.f32.mrb[0].mxu0
  %v340 = vadd.f32 %v73, %v339
  %v341 = vpop.f32.mrb[0].mxu0
  %342 = vmatprep.mubr.bf16.mxu0 %v147
  %343 = vmatmul.mubr.bf16.gmra.mrb[0].mxu0 %v146
  %v344 = vpop.f32.mrb[0].mxu0
  %v345 = vadd.f32 %v73, %v344
  %v346 = vpop.f32.mrb[0].mxu0
  %v347 = vpop.f32.mrb[0].mxu0
  %v348 = vadd.f32 %v73, %v347
  %v349 = vpop.f32.mrb[0].mxu0
  %350 = vmatprep.mubr.bf16.mxu0 %v149
  %351 = vmatmul.mubr.bf16.gmra.mrb[0].mxu0 %v148
  %v352 = vpop.f32.mrb[0].mxu0
  %v353 = vadd.f32 %v73, %v352
  %v354 = vpop.f32.mrb[0].mxu0
  %v355 = vpop.f32.mrb[0].mxu0
  %v356 = vadd.f32 %v73, %v355
  %v357 = vpop.f32.mrb[0].mxu0
  %358 = vmatprep.mubr.bf16.mxu0 %v151
  %359 = vmatmul.mubr.bf16.gmra.mrb[0].mxu0 %v150
  %v360 = vpop.f32.mrb[0].mxu0
  %v361 = vadd.f32 %v73, %v360
  %v362 = vpop.f32.mrb[0].mxu0
  %v363 = vpop.f32.mrb[0].mxu0
  %v364 = vadd.f32 %v73, %v363
  %v365 = vpop.f32.mrb[0].mxu0
  %366 = vmatprep.mubr.bf16.mxu0 %v153
  %367 = vmatmul.mubr.bf16.gmra.mrb[0].mxu0 %v152
  %v368 = vpop.f32.mrb[0].mxu0
  %v369 = vadd.f32 %v73, %v368
  %v370 = vpop.f32.mrb[0].mxu0
  %v371 = vpop.f32.mrb[0].mxu0
  %v372 = vadd.f32 %v73, %v371
  %v373 = vpop.f32.mrb[0].mxu0
  %374 = vmatprep.mubr.bf16.mxu0 %v155
  %375 = vmatmul.mubr.bf16.gmra.mrb[0].mxu0 %v154
  %v376 = vpop.f32.mrb[0].mxu0
  %v377 = vadd.f32 %v73, %v376
  %v378 = vpop.f32.mrb[0].mxu0
  %v379 = vpop.f32.mrb[0].mxu0
  %v380 = vadd.f32 %v73, %v379
  %v381 = vpop.f32.mrb[0].mxu0
  %382 = vmatprep.mubr.bf16.mxu0 %v157
  %383 = vmatmul.mubr.bf16.gmra.mrb[0].mxu0 %v156
  %v384 = vpop.f32.mrb[0].mxu0
  %v385 = vadd.f32 %v73, %v384
  %v386 = vpop.f32.mrb[0].mxu0
  %v387 = vpop.f32.mrb[0].mxu0
  %v388 = vadd.f32 %v73, %v387
  %v389 = vpop.f32.mrb[0].mxu0
  %390 = vmatprep.mubr.bf16.mxu0 %v159
  %391 = vmatmul.mubr.bf16.gmra.mrb[0].mxu0 %v158
  %v392 = vpop.f32.mrb[0].mxu0
  %v393 = vadd.f32 %v73, %v392
  %v394 = vpop.f32.mrb[0].mxu0
  %v395 = vpop.f32.mrb[0].mxu0
  %v396 = vpop.f32.mrb[0].mxu0
  %397 = vdwg.mxu0
  %v398 = vmax.f32 %v313, 0.0
  %v399 = vmax.f32 %v316, 0.0
  %v400 = vmax.f32 %v321, 0.0
  %v401 = vmax.f32 %v324, 0.0
  %v402 = vmax.f32 %v329, 0.0
  %v403 = vmax.f32 %v332, 0.0
  %v404 = vmax.f32 %v337, 0.0
  %v405 = vmax.f32 %v340, 0.0
  %v406 = vmax.f32 %v345, 0.0
  %v407 = vmax.f32 %v348, 0.0
  %v408 = vmax.f32 %v353, 0.0
  %v409 = vmax.f32 %v356, 0.0
  %v410 = vmax.f32 %v361, 0.0
  %v411 = vmax.f32 %v364, 0.0
  %v412 = vmax.f32 %v369, 0.0
  %v413 = vmax.f32 %v372, 0.0
  %v414 = vmax.f32 %v377, 0.0
  %v415 = vmax.f32 %v380, 0.0
  %v416 = vmax.f32 %v385, 0.0
  %v417 = vmax.f32 %v388, 0.0
  %v418 = vmax.f32 %v393, 0.0
  %v419 = vpack.c.bf16 %v399, %v398
  %v420 = vpack.c.bf16 %v401, %v400
  %v421 = vpack.c.bf16 %v403, %v402
  %v422 = vpack.c.bf16 %v405, %v404
  %v423 = vpack.c.bf16 %v407, %v406
  %v424 = vpack.c.bf16 %v409, %v408
  %v425 = vpack.c.bf16 %v411, %v410
  %v426 = vpack.c.bf16 %v413, %v412
  %v427 = vpack.c.bf16 %v415, %v414
  %v428 = vpack.c.bf16 %v417, %v416
  %v429 = vpack.c.bf16 %v418, %v418
  %v441 = vunpack.c.l.b16 %v419
  %v442 = vunpack.c.h.b16 %v419
  %v443 = vunpack.c.l.b16 %v420
  %v444 = vunpack.c.h.b16 %v420
  %v445 = vunpack.c.l.b16 %v421
  %v446 = vunpack.c.h.b16 %v421
  %v447 = vunpack.c.l.b16 %v422
  %v448 = vunpack.c.h.b16 %v422
  %v449 = vunpack.c.l.b16 %v423
  %v450 = vunpack.c.h.b16 %v423
  %v451 = vunpack.c.l.b16 %v424
  %v452 = vunpack.c.h.b16 %v424
  %v453 = vunpack.c.l.b16 %v425
  %v454 = vunpack.c.h.b16 %v425
  %v455 = vunpack.c.l.b16 %v426
  %v456 = vunpack.c.h.b16 %v426
  %v457 = vunpack.c.l.b16 %v427
  %v458 = vunpack.c.h.b16 %v427
  %v459 = vunpack.c.l.b16 %v428
  %v460 = vunpack.c.h.b16 %v428
  %v461 = vunpack.c.l.b16 %v429
  %v462 = vpack.c.b16 %v441, %v441
  %v463 = vpack.c.b16 %v442, %v442
  %v464 = vpack.c.b16 %v443, %v443
  %v465 = vpack.c.b16 %v444, %v444
  %v466 = vpack.c.b16 %v445, %v445
  %v467 = vpack.c.b16 %v446, %v446
  %v468 = vpack.c.b16 %v447, %v447
  %v469 = vpack.c.b16 %v448, %v448
  %v470 = vpack.c.b16 %v449, %v449
  %v471 = vpack.c.b16 %v450, %v450
  %v472 = vpack.c.b16 %v451, %v451
  %v473 = vpack.c.b16 %v452, %v452
  %v474 = vpack.c.b16 %v453, %v453
  %v475 = vpack.c.b16 %v454, %v454
  %v476 = vpack.c.b16 %v455, %v455
  %v477 = vpack.c.b16 %v456, %v456
  %v478 = vpack.c.b16 %v457, %v457
  %v479 = vpack.c.b16 %v458, %v458
  %v480 = vpack.c.b16 %v459, %v459
  %v481 = vpack.c.b16 %v460, %v460
  %v482 = vpack.c.b16 %v461, %v461
  %504 = vst [vmem:[%s3] sm:$0xf] %v462
  %505 = vst [vmem:[%s3 + $0x4] sm:$0xf] %v463
  %506 = vst [vmem:[%s3 + $0x8] sm:$0xf] %v464
  %507 = vst [vmem:[%s3 + $0xc] sm:$0xf] %v465
  %508 = vst [vmem:[%s3 + $0x10] sm:$0xf] %v466
  %509 = vst [vmem:[%s3 + $0x14] sm:$0xf] %v467
  %510 = vst [vmem:[%s3 + $0x18] sm:$0xf] %v468
  %511 = vst [vmem:[%s3 + $0x1c] sm:$0xf] %v469
  %512 = vst [vmem:[%s3 + $0x20] sm:$0xf] %v470
  %513 = vst [vmem:[%s3 + $0x24] sm:$0xf] %v471
  %514 = vst [vmem:[%s3 + $0x28] sm:$0xf] %v472
  %515 = vst [vmem:[%s3 + $0x2c] sm:$0xf] %v473
  %516 = vst [vmem:[%s3 + $0x30] sm:$0xf] %v474
  %517 = vst [vmem:[%s3 + $0x34] sm:$0xf] %v475
  %518 = vst [vmem:[%s3 + $0x38] sm:$0xf] %v476
  %519 = vst [vmem:[%s3 + $0x3c] sm:$0xf] %v477
  %520 = vst [vmem:[%s3 + $0x40] sm:$0xf] %v478
  %521 = vst [vmem:[%s3 + $0x44] sm:$0xf] %v479
  %522 = vst [vmem:[%s3 + $0x48] sm:$0xf] %v480
  %523 = vst [vmem:[%s3 + $0x4c] sm:$0xf] %v481
  %524 = vst [vmem:[%s3 + $0x50] sm:$0x1] %v482
  // Predicated region
  $region14: #{dqn_forward.5} parent=0 // pred_check
    _
  $region15: #{dqn_forward.5} parent=0 // pred_check_branch
    %526 = sbr.rel (0) target = $region17
  $region16: #{dqn_forward.5} parent=0 // pred_region
    _
  $region17: #{dqn_forward.5} parent=0 // pred_fallthru
    _
  // Predicated region
  $region18: #{dqn_forward.5} parent=0 // pred_check
    _
  $region19: #{dqn_forward.5} parent=0 // pred_check_branch
    %528 = sbr.rel (0) target = $region21
  $region20: #{dqn_forward.5} parent=0 // pred_region
    _
  $region21: #{dqn_forward.5} parent=0 // pred_fallthru
    _

// kernel: dqn_forward.7
$region0: #{dqn_forward.7}
  #allocation0 [shape = 'u32[]', space=smem, size = 0x4, offset = 0x4, fixed_abs, tag = 'smem constant byte address 0x4 - core index']
  #allocation1 [shape = 'u32[144,128]{1,0:T(1,128)}', space=vmem, size = 0x12000, scoped, tag = 'internal scratch']
  %s0 = inlined_call_operand.vmem [shape: bf16[2,256], index: 0, kind: input, shape index: {}]
  %s1 = inlined_call_operand.vmem [shape: bf16[256,128], index: 1, kind: input, shape index: {}]
  %s2 = inlined_call_operand.vmem [shape: f32[1,128], index: 2, kind: input, shape index: {}]
  %s3 = inlined_call_operand.hbm [shape: f32[2,128], index: 3, kind: output, shape index: {}]
  %s4 = sld [smem:[#allocation0]]
  $region22: #{dqn_forward.7} parent=0
    _
  %s6 = ssub.s32 1, %s4
  %s7 = scalar_select 0, %s6, %s4
  $region1: #{dqn_forward.7} parent=0
    #allocation2 [shape = 'u8[1024]{0}', space=vmem, size = 0x400, scoped, tag = 'output window, operand 0, single buffered']
    #allocation3 [shape = 's32[1]{0}', space=sflag, size = 0x4, scoped, tag = 'scoped memory for dqn_forward.7']
    %8 = vsyncpa [#allocation3], 0
    // Predicated region
    $region2: #{dqn_forward.7} parent=1 // pred_check
      _
    $region3: #{dqn_forward.7} parent=1 // pred_check_branch
      %10 = sbr.rel (0) target = $region5
    $region4: #{dqn_forward.7} parent=1 // pred_region
      _
    $region5: #{dqn_forward.7} parent=1 // pred_fallthru
      _
    // Predicated region
    $region6: #{dqn_forward.7} parent=1 // pred_check
      _
    $region7: #{dqn_forward.7} parent=1 // pred_check_branch
      %12 = sbr.rel (0) target = $region9
    $region8: #{dqn_forward.7} parent=1 // pred_region
      _
    $region9: #{dqn_forward.7} parent=1 // pred_fallthru
      _
    // Predicated region
    $region10: #{dqn_forward.7} parent=1 // pred_check
      _
    $region11: #{dqn_forward.7} parent=1 // pred_check_branch
      %14 = sbr.rel (0) target = $region13
    $region12: #{dqn_forward.7} parent=1 // pred_region
      _
    $region13: #{dqn_forward.7} parent=1 // pred_fallthru
      _
    %v16 = vld [vmem:[%s0] sm:$0x3]
    %v17 = vld [vmem:[%s1] sm:$0xf]
    %v18 = vld [vmem:[%s1 + $0x4] sm:$0xf]
    %v19 = vld [vmem:[%s1 + $0x8] sm:$0xf]
    %v20 = vld [vmem:[%s1 + $0xc] sm:$0xf]
    %v21 = vld [vmem:[%s1 + $0x10] sm:$0xf]
    %v22 = vld [vmem:[%s1 + $0x14] sm:$0xf]
    %v23 = vld [vmem:[%s1 + $0x18] sm:$0xf]
    %v24 = vld [vmem:[%s1 + $0x1c] sm:$0xf]
    %v25 = vld [vmem:[%s1 + $0x20] sm:$0xf]
    %v26 = vld [vmem:[%s1 + $0x24] sm:$0xf]
    %v27 = vld [vmem:[%s1 + $0x28] sm:$0xf]
    %v28 = vld [vmem:[%s1 + $0x2c] sm:$0xf]
    %v29 = vld [vmem:[%s1 + $0x30] sm:$0xf]
    %v30 = vld [vmem:[%s1 + $0x34] sm:$0xf]
    %v31 = vld [vmem:[%s1 + $0x38] sm:$0xf]
    %v32 = vld [vmem:[%s1 + $0x3c] sm:$0xf]
    %v33 = vld [vmem:[%s1 + $0x40] sm:$0xf]
    %v34 = vld [vmem:[%s1 + $0x44] sm:$0xf]
    %v35 = vld [vmem:[%s1 + $0x48] sm:$0xf]
    %v36 = vld [vmem:[%s1 + $0x4c] sm:$0xf]
    %v37 = vld [vmem:[%s1 + $0x50] sm:$0xf]
    %v38 = vld [vmem:[%s1 + $0x54] sm:$0xf]
    %v39 = vld [vmem:[%s1 + $0x58] sm:$0xf]
    %v40 = vld [vmem:[%s1 + $0x5c] sm:$0xf]
    %v41 = vld [vmem:[%s1 + $0x60] sm:$0xf]
    %v42 = vld [vmem:[%s1 + $0x64] sm:$0xf]
    %v43 = vld [vmem:[%s1 + $0x68] sm:$0xf]
    %v44 = vld [vmem:[%s1 + $0x6c] sm:$0xf]
    %v45 = vld [vmem:[%s1 + $0x70] sm:$0xf]
    %v46 = vld [vmem:[%s1 + $0x74] sm:$0xf]
    %v47 = vld [vmem:[%s1 + $0x78] sm:$0xf]
    %v48 = vld [vmem:[%s1 + $0x7c] sm:$0xf]
    %v49 = vld [vmem:[%s2] sm:$0x1]
    %v51 = vlaneseq
    %v52 = vshrl.u32 %v51, 7
    %v53 = vsub.s32 0, %v52
    %v54 = vrot.slane %v49, %v53
    %v58 = vunpack.c.l.s4 1966171168
    %v59 = vunpack.c.0.s8 %v58
    %v60 = vlaneseq
    %v61 = vshrl.u32 %v60, 7
    %v62 = vsub.s32 %v59, %v61
    %v63 = vrot.slane %v16, %v62
    %v64 = vcombine.high %v63, %v63
    %v66 = vunpack.c.l.s4 1966171168
    %v67 = vunpack.c.0.s8 %v66
    %v68 = vlaneseq
    %v69 = vshrl.u32 %v68, 7
    %v70 = vsub.s32 %v67, %v69
    %v71 = vrot.slane %v63, %v70
    %v73 = vunpack.c.l.s4 1966171168
    %v74 = vunpack.c.0.s8 %v73
    %v75 = vlaneseq
    %v76 = vshrl.u32 %v75, 7
    %v77 = vsub.s32 %v74, %v76
    %v78 = vrot.slane %v64, %v77
    %v113 = vunpack.c.l.b16 %v17
    %v114 = vunpack.c.l.b16 %v18
    %v115 = vunpack.c.l.b16 %v19
    %v116 = vunpack.c.l.b16 %v20
    %v117 = vunpack.c.l.b16 %v21
    %v118 = vunpack.c.l.b16 %v22
    %v119 = vunpack.c.l.b16 %v23
    %v120 = vunpack.c.l.b16 %v24
    %v121 = vunpack.c.l.b16 %v25
    %v122 = vunpack.c.l.b16 %v26
    %v123 = vunpack.c.l.b16 %v27
    %v124 = vunpack.c.l.b16 %v28
    %v125 = vunpack.c.l.b16 %v29
    %v126 = vunpack.c.l.b16 %v30
    %v127 = vunpack.c.l.b16 %v31
    %v128 = vunpack.c.l.b16 %v32
    %v129 = vunpack.c.l.b16 %v33
    %v130 = vunpack.c.l.b16 %v34
    %v131 = vunpack.c.l.b16 %v35
    %v132 = vunpack.c.l.b16 %v36
    %v133 = vunpack.c.l.b16 %v37
    %v134 = vunpack.c.l.b16 %v38
    %v135 = vunpack.c.l.b16 %v39
    %v136 = vunpack.c.l.b16 %v40
    %v137 = vunpack.c.l.b16 %v41
    %v138 = vunpack.c.l.b16 %v42
    %v139 = vunpack.c.l.b16 %v43
    %v140 = vunpack.c.l.b16 %v44
    %v141 = vunpack.c.l.b16 %v45
    %v142 = vunpack.c.l.b16 %v46
    %v143 = vunpack.c.l.b16 %v47
    %v144 = vunpack.c.l.b16 %v48
    %v145 = vpack.c.b16 %v114, %v113
    %v146 = vpack.c.b16 %v116, %v115
    %v147 = vpack.c.b16 %v118, %v117
    %v148 = vpack.c.b16 %v120, %v119
    %v149 = vpack.c.b16 %v122, %v121
    %v150 = vpack.c.b16 %v124, %v123
    %v151 = vpack.c.b16 %v126, %v125
    %v152 = vpack.c.b16 %v128, %v127
    %v153 = vpack.c.b16 %v130, %v129
    %v154 = vpack.c.b16 %v132, %v131
    %v155 = vpack.c.b16 %v134, %v133
    %v156 = vpack.c.b16 %v136, %v135
    %v157 = vpack.c.b16 %v138, %v137
    %v158 = vpack.c.b16 %v140, %v139
    %v159 = vpack.c.b16 %v142, %v141
    %v160 = vpack.c.b16 %v144, %v143
    %177 = vmatprep.subr.bf16.mxu0 0
    %178 = vmatpush1.bf16.msra.mxu0 %v145
    %179 = vmatprep.subr.bf16.mxu0 0
    %180 = vmatpush1.bf16.msra.mxu0 %v146
    %181 = vmatprep.subr.bf16.mxu0 0
    %182 = vmatpush1.bf16.msra.mxu0 %v147
    %183 = vmatprep.subr.bf16.mxu0 0
    %184 = vmatpush1.bf16.msra.mxu0 %v148
    %185 = vmatprep.subr.bf16.mxu0 0
    %186 = vmatpush1.bf16.msra.mxu0 %v149
    %187 = vmatprep.subr.bf16.mxu0 0
    %188 = vmatpush1.bf16.msra.mxu0 %v150
    %189 = vmatprep.subr.bf16.mxu0 0
    %190 = vmatpush1.bf16.msra.mxu0 %v151
    %191 = vmatprep.subr.bf16.mxu0 0
    %192 = vmatpush1.bf16.msra.mxu0 %v152
    %193 = vmatprep.subr.bf16.mxu0 0
    %194 = vmatpush1.bf16.msra.mxu0 %v153
    %195 = vmatprep.subr.bf16.mxu0 0
    %196 = vmatpush1.bf16.msra.mxu0 %v154
    %197 = vmatprep.subr.bf16.mxu0 0
    %198 = vmatpush1.bf16.msra.mxu0 %v155
    %199 = vmatprep.subr.bf16.mxu0 0
    %200 = vmatpush1.bf16.msra.mxu0 %v156
    %201 = vmatprep.subr.bf16.mxu0 0
    %202 = vmatpush1.bf16.msra.mxu0 %v157
    %203 = vmatprep.subr.bf16.mxu0 0
    %204 = vmatpush1.bf16.msra.mxu0 %v158
    %205 = vmatprep.subr.bf16.mxu0 0
    %206 = vmatpush1.bf16.msra.mxu0 %v159
    %207 = vmatprep.subr.bf16.mxu0 0
    %208 = vmatpush1.bf16.msra.mxu0 %v160
    %209 = vmatprep.mubr.bf16.mxu0 %v78
    %210 = vmatmul.mubr.bf16.gmra.mrb[0].mxu0 %v71
    %v211 = vpop.f32.mrb[0].mxu0
    %v212 = vadd.f32 %v54, %v211
    %v213 = vpop.f32.mrb[0].mxu0
    %v214 = vpop.f32.mrb[0].mxu0
    %v215 = vpop.f32.mrb[0].mxu0
    %216 = vdwg.mxu0
    %217 = vst [vmem:[#allocation2] sm:$0x3] %v212
    // Predicated region
    $region14: #{dqn_forward.7} parent=1 // pred_check
      _
    $region15: #{dqn_forward.7} parent=1 // pred_check_branch
      %219 = sbr.rel (0) target = $region17
    $region16: #{dqn_forward.7} parent=1 // pred_region
      %s221 = ssub.s32 32, 32
      %222 = vsyncadd [#allocation3], %s221
      %s224 = sshll.u32 [#allocation2], 4
      %s225 = int_to_ptr.vmem [resolvable:$true] %s224
      %227 = dma.vmem_to_hbm [thread:$0]  %s225, 32, %s3, [#allocation3]
    $region17: #{dqn_forward.7} parent=1 // pred_fallthru
      _
    // Predicated region
    $region18: #{dqn_forward.7} parent=1 // pred_check
      _
    $region19: #{dqn_forward.7} parent=1 // pred_check_branch
      %229 = sbr.rel (0) target = $region21
    $region20: #{dqn_forward.7} parent=1 // pred_region
      %230 = dma.done [#allocation3], 32
    $region21: #{dqn_forward.7} parent=1 // pred_fallthru
      _
    %231 = vsyncpa [#allocation3], 1

// kernel: dqn_forward.6
$region0: #{dqn_forward.6}
  #allocation0 [shape = 'u32[]', space=smem, size = 0x4, offset = 0x4, fixed_abs, tag = 'smem constant byte address 0x4 - core index']
  #allocation1 [shape = 'u32[144,128]{1,0:T(1,128)}', space=vmem, size = 0x12000, scoped, tag = 'internal scratch']
  %s0 = inlined_call_operand.vmem [shape: bf16[2,2592], index: 0, kind: input, shape index: {}]
  %s1 = inlined_call_operand.vmem [shape: bf16[2592,256], index: 1, kind: input, shape index: {}]
  %s2 = inlined_call_operand.vmem [shape: f32[1,256], index: 2, kind: input, shape index: {}]
  %s3 = inlined_call_operand.vmem [shape: bf16[2,256], index: 3, kind: output, shape index: {}]
  %s4 = sld [smem:[#allocation0]]
  $region22: #{dqn_forward.6} parent=0
    _
  %s6 = ssub.s32 1, %s4
  %s7 = scalar_select 0, %s6, %s4
  // Predicated region
  $region2: #{dqn_forward.6} parent=0 // pred_check
    _
  $region3: #{dqn_forward.6} parent=0 // pred_check_branch
    %9 = sbr.rel (0) target = $region5
  $region4: #{dqn_forward.6} parent=0 // pred_region
    _
  $region5: #{dqn_forward.6} parent=0 // pred_fallthru
    _
  // Predicated region
  $region6: #{dqn_forward.6} parent=0 // pred_check
    _
  $region7: #{dqn_forward.6} parent=0 // pred_check_branch
    %11 = sbr.rel (0) target = $region9
  $region8: #{dqn_forward.6} parent=0 // pred_region
    _
  $region9: #{dqn_forward.6} parent=0 // pred_fallthru
    _
  // Predicated region
  $region10: #{dqn_forward.6} parent=0 // pred_check
    _
  $region11: #{dqn_forward.6} parent=0 // pred_check_branch
    %13 = sbr.rel (0) target = $region13
  $region12: #{dqn_forward.6} parent=0 // pred_region
    _
  $region13: #{dqn_forward.6} parent=0 // pred_fallthru
    _
  %v15 = vld [vmem:[%s0] sm:$0xff]
  %v16 = vld [vmem:[%s0 + $0x8] sm:$0xff]
  %v17 = vld [vmem:[%s0 + $0x10] sm:$0x1f]
  %v18 = vld [vmem:[%s1] sm:$0xff]
  %v19 = vld [vmem:[%s1 + $0x8] sm:$0xff]
  %v20 = vld [vmem:[%s1 + $0x10] sm:$0xff]
  %v21 = vld [vmem:[%s1 + $0x18] sm:$0xff]
  %v22 = vld [vmem:[%s1 + $0x20] sm:$0xff]
  %v23 = vld [vmem:[%s1 + $0x28] sm:$0xff]
  %v24 = vld [vmem:[%s1 + $0x30] sm:$0xff]
  %v25 = vld [vmem:[%s1 + $0x38] sm:$0xff]
  %v26 = vld [vmem:[%s1 + $0x40] sm:$0xff]
  %v27 = vld [vmem:[%s1 + $0x48] sm:$0xff]
  %v28 = vld [vmem:[%s1 + $0x50] sm:$0xff]
  %v29 = vld [vmem:[%s1 + $0x58] sm:$0xff]
  %v30 = vld [vmem:[%s1 + $0x60] sm:$0xff]
  %v31 = vld [vmem:[%s1 + $0x68] sm:$0xff]
  %v32 = vld [vmem:[%s1 + $0x70] sm:$0xff]
  %v33 = vld [vmem:[%s1 + $0x78] sm:$0xff]
  %v34 = vld [vmem:[%s1 + $0x80] sm:$0xff]
  %v35 = vld [vmem:[%s1 + $0x88] sm:$0xff]
  %v36 = vld [vmem:[%s1 + $0x90] sm:$0xff]
  %v37 = vld [vmem:[%s1 + $0x98] sm:$0xff]
  %v38 = vld [vmem:[%s1 + $0xa0] sm:$0xff]
  %v39 = vld [vmem:[%s1 + $0xa8] sm:$0xff]
  %v40 = vld [vmem:[%s1 + $0xb0] sm:$0xff]
  %v41 = vld [vmem:[%s1 + $0xb8] sm:$0xff]
  %v42 = vld [vmem:[%s1 + $0xc0] sm:$0xff]
  %v43 = vld [vmem:[%s1 + $0xc8] sm:$0xff]
  %v44 = vld [vmem:[%s1 + $0xd0] sm:$0xff]
  %v45 = vld [vmem:[%s1 + $0xd8] sm:$0xff]
  %v46 = vld [vmem:[%s1 + $0xe0] sm:$0xff]
  %v47 = vld [vmem:[%s1 + $0xe8] sm:$0xff]
  %v48 = vld [vmem:[%s1 + $0xf0] sm:$0xff]
  %v49 = vld [vmem:[%s1 + $0xf8] sm:$0xff]
  %v50 = vld [vmem:[%s1 + $0x100] sm:$0xff]
  %v51 = vld [vmem:[%s1 + $0x108] sm:$0xff]
  %v52 = vld [vmem:[%s1 + $0x110] sm:$0xff]
  %v53 = vld [vmem:[%s1 + $0x118] sm:$0xff]
  %v54 = vld [vmem:[%s1 + $0x120] sm:$0xff]
  %v55 = vld [vmem:[%s1 + $0x128] sm:$0xff]
  %v56 = vld [vmem:[%s1 + $0x130] sm:$0xff]
  %v57 = vld [vmem:[%s1 + $0x138] sm:$0xff]
  %v58 = vld [vmem:[%s1 + $0x140] sm:$0xff]
  %v59 = vld [vmem:[%s1 + $0x148] sm:$0xff]
  %v60 = vld [vmem:[%s1 + $0x150] sm:$0xff]
  %v61 = vld [vmem:[%s1 + $0x158] sm:$0xff]
  %v62 = vld [vmem:[%s1 + $0x160] sm:$0xff]
  %v63 = vld [vmem:[%s1 + $0x168] sm:$0xff]
  %v64 = vld [vmem:[%s1 + $0x170] sm:$0xff]
  %v65 = vld [vmem:[%s1 + $0x178] sm:$0xff]
  %v66 = vld [vmem:[%s1 + $0x180] sm:$0xff]
  %v67 = vld [vmem:[%s1 + $0x188] sm:$0xff]
  %v68 = vld [vmem:[%s1 + $0x190] sm:$0xff]
  %v69 = vld [vmem:[%s1 + $0x198] sm:$0xff]
  %v70 = vld [vmem:[%s1 + $0x1a0] sm:$0xff]
  %v71 = vld [vmem:[%s1 + $0x1a8] sm:$0xff]
  %v72 = vld [vmem:[%s1 + $0x1b0] sm:$0xff]
  %v73 = vld [vmem:[%s1 + $0x1b8] sm:$0xff]
  %v74 = vld [vmem:[%s1 + $0x1c0] sm:$0xff]
  %v75 = vld [vmem:[%s1 + $0x1c8] sm:$0xff]
  %v76 = vld [vmem:[%s1 + $0x1d0] sm:$0xff]
  %v77 = vld [vmem:[%s1 + $0x1d8] sm:$0xff]
  %v78 = vld [vmem:[%s1 + $0x1e0] sm:$0xff]
  %v79 = vld [vmem:[%s1 + $0x1e8] sm:$0xff]
  %v80 = vld [vmem:[%s1 + $0x1f0] sm:$0xff]
  %v81 = vld [vmem:[%s1 + $0x1f8] sm:$0xff]
  %v82 = vld [vmem:[%s1 + $0x200] sm:$0xff]
  %v83 = vld [vmem:[%s1 + $0x208] sm:$0xff]
  %v84 = vld [vmem:[%s1 + $0x210] sm:$0xff]
  %v85 = vld [vmem:[%s1 + $0x218] sm:$0xff]
  %v86 = vld [vmem:[%s1 + $0x220] sm:$0xff]
  %v87 = vld [vmem:[%s1 + $0x228] sm:$0xff]
  %v88 = vld [vmem:[%s1 + $0x230] sm:$0xff]
  %v89 = vld [vmem:[%s1 + $0x238] sm:$0xff]
  %v90 = vld [vmem:[%s1 + $0x240] sm:$0xff]
  %v91 = vld [vmem:[%s1 + $0x248] sm:$0xff]
  %v92 = vld [vmem:[%s1 + $0x250] sm:$0xff]
  %v93 = vld [vmem:[%s1 + $0x258] sm:$0xff]
  %v94 = vld [vmem:[%s1 + $0x260] sm:$0xff]
  %v95 = vld [vmem:[%s1 + $0x268] sm:$0xff]
  %v96 = vld [vmem:[%s1 + $0x270] sm:$0xff]
  %v97 = vld [vmem:[%s1 + $0x278] sm:$0xff]
  %v98 = vld [vmem:[%s1 + $0x280] sm:$0xff]
  %v99 = vld [vmem:[%s1 + $0x288] sm:$0xff]
  %v100 = vld [vmem:[%s1 + $0x290] sm:$0xff]
  %v101 = vld [vmem:[%s1 + $0x298] sm:$0xff]
  %v102 = vld [vmem:[%s1 + $0x2a0] sm:$0xff]
  %v103 = vld [vmem:[%s1 + $0x2a8] sm:$0xff]
  %v104 = vld [vmem:[%s1 + $0x2b0] sm:$0xff]
  %v105 = vld [vmem:[%s1 + $0x2b8] sm:$0xff]
  %v106 = vld [vmem:[%s1 + $0x2c0] sm:$0xff]
  %v107 = vld [vmem:[%s1 + $0x2c8] sm:$0xff]
  %v108 = vld [vmem:[%s1 + $0x2d0] sm:$0xff]
  %v109 = vld [vmem:[%s1 + $0x2d8] sm:$0xff]
  %v110 = vld [vmem:[%s1 + $0x2e0] sm:$0xff]
  %v111 = vld [vmem:[%s1 + $0x2e8] sm:$0xff]
  %v112 = vld [vmem:[%s1 + $0x2f0] sm:$0xff]
  %v113 = vld [vmem:[%s1 + $0x2f8] sm:$0xff]
  %v114 = vld [vmem:[%s1 + $0x300] sm:$0xff]
  %v115 = vld [vmem:[%s1 + $0x308] sm:$0xff]
  %v116 = vld [vmem:[%s1 + $0x310] sm:$0xff]
  %v117 = vld [vmem:[%s1 + $0x318] sm:$0xff]
  %v118 = vld [vmem:[%s1 + $0x320] sm:$0xff]
  %v119 = vld [vmem:[%s1 + $0x328] sm:$0xff]
  %v120 = vld [vmem:[%s1 + $0x330] sm:$0xff]
  %v121 = vld [vmem:[%s1 + $0x338] sm:$0xff]
  %v122 = vld [vmem:[%s1 + $0x340] sm:$0xff]
  %v123 = vld [vmem:[%s1 + $0x348] sm:$0xff]
  %v124 = vld [vmem:[%s1 + $0x350] sm:$0xff]
  %v125 = vld [vmem:[%s1 + $0x358] sm:$0xff]
  %v126 = vld [vmem:[%s1 + $0x360] sm:$0xff]
  %v127 = vld [vmem:[%s1 + $0x368] sm:$0xff]
  %v128 = vld [vmem:[%s1 + $0x370] sm:$0xff]
  %v129 = vld [vmem:[%s1 + $0x378] sm:$0xff]
  %v130 = vld [vmem:[%s1 + $0x380] sm:$0xff]
  %v131 = vld [vmem:[%s1 + $0x388] sm:$0xff]
  %v132 = vld [vmem:[%s1 + $0x390] sm:$0xff]
  %v133 = vld [vmem:[%s1 + $0x398] sm:$0xff]
  %v134 = vld [vmem:[%s1 + $0x3a0] sm:$0xff]
  %v135 = vld [vmem:[%s1 + $0x3a8] sm:$0xff]
  %v136 = vld [vmem:[%s1 + $0x3b0] sm:$0xff]
  %v137 = vld [vmem:[%s1 + $0x3b8] sm:$0xff]
  %v138 = vld [vmem:[%s1 + $0x3c0] sm:$0xff]
  %v139 = vld [vmem:[%s1 + $0x3c8] sm:$0xff]
  %v140 = vld [vmem:[%s1 + $0x3d0] sm:$0xff]
  %v141 = vld [vmem:[%s1 + $0x3d8] sm:$0xff]
  %v142 = vld [vmem:[%s1 + $0x3e0] sm:$0xff]
  %v143 = vld [vmem:[%s1 + $0x3e8] sm:$0xff]
  %v144 = vld [vmem:[%s1 + $0x3f0] sm:$0xff]
  %v145 = vld [vmem:[%s1 + $0x3f8] sm:$0xff]
  %v146 = vld [vmem:[%s1 + $0x400] sm:$0xff]
  %v147 = vld [vmem:[%s1 + $0x408] sm:$0xff]
  %v148 = vld [vmem:[%s1 + $0x410] sm:$0xff]
  %v149 = vld [vmem:[%s1 + $0x418] sm:$0xff]
  %v150 = vld [vmem:[%s1 + $0x420] sm:$0xff]
  %v151 = vld [vmem:[%s1 + $0x428] sm:$0xff]
  %v152 = vld [vmem:[%s1 + $0x430] sm:$0xff]
  %v153 = vld [vmem:[%s1 + $0x438] sm:$0xff]
  %v154 = vld [vmem:[%s1 + $0x440] sm:$0xff]
  %v155 = vld [vmem:[%s1 + $0x448] sm:$0xff]
  %v156 = vld [vmem:[%s1 + $0x450] sm:$0xff]
  %v157 = vld [vmem:[%s1 + $0x458] sm:$0xff]
  %v158 = vld [vmem:[%s1 + $0x460] sm:$0xff]
  %v159 = vld [vmem:[%s1 + $0x468] sm:$0xff]
  %v160 = vld [vmem:[%s1 + $0x470] sm:$0xff]
  %v161 = vld [vmem:[%s1 + $0x478] sm:$0xff]
  %v162 = vld [vmem:[%s1 + $0x480] sm:$0xff]
  %v163 = vld [vmem:[%s1 + $0x488] sm:$0xff]
  %v164 = vld [vmem:[%s1 + $0x490] sm:$0xff]
  %v165 = vld [vmem:[%s1 + $0x498] sm:$0xff]
  %v166 = vld [vmem:[%s1 + $0x4a0] sm:$0xff]
  %v167 = vld [vmem:[%s1 + $0x4a8] sm:$0xff]
  %v168 = vld [vmem:[%s1 + $0x4b0] sm:$0xff]
  %v169 = vld [vmem:[%s1 + $0x4b8] sm:$0xff]
  %v170 = vld [vmem:[%s1 + $0x4c0] sm:$0xff]
  %v171 = vld [vmem:[%s1 + $0x4c8] sm:$0xff]
  %v172 = vld [vmem:[%s1 + $0x4d0] sm:$0xff]
  %v173 = vld [vmem:[%s1 + $0x4d8] sm:$0xff]
  %v174 = vld [vmem:[%s1 + $0x4e0] sm:$0xff]
  %v175 = vld [vmem:[%s1 + $0x4e8] sm:$0xff]
  %v176 = vld [vmem:[%s1 + $0x4f0] sm:$0xff]
  %v177 = vld [vmem:[%s1 + $0x4f8] sm:$0xff]
  %v178 = vld [vmem:[%s1 + $0x500] sm:$0xff]
  %v179 = vld [vmem:[%s1 + $0x508] sm:$0xff]
  %v180 = vld [vmem:[%s1 + $0x510] sm:$0xff]
  %v181 = vld [vmem:[%s1 + $0x518] sm:$0xff]
  %v182 = vld [vmem:[%s1 + $0x520] sm:$0xff]
  %v183 = vld [vmem:[%s1 + $0x528] sm:$0xff]
  %v184 = vld [vmem:[%s1 + $0x530] sm:$0xff]
  %v185 = vld [vmem:[%s1 + $0x538] sm:$0xff]
  %v186 = vld [vmem:[%s1 + $0x540] sm:$0xff]
  %v187 = vld [vmem:[%s1 + $0x548] sm:$0xff]
  %v188 = vld [vmem:[%s1 + $0x550] sm:$0xff]
  %v189 = vld [vmem:[%s1 + $0x558] sm:$0xff]
  %v190 = vld [vmem:[%s1 + $0x560] sm:$0xff]
  %v191 = vld [vmem:[%s1 + $0x568] sm:$0xff]
  %v192 = vld [vmem:[%s1 + $0x570] sm:$0xff]
  %v193 = vld [vmem:[%s1 + $0x578] sm:$0xff]
  %v194 = vld [vmem:[%s1 + $0x580] sm:$0xff]
  %v195 = vld [vmem:[%s1 + $0x588] sm:$0xff]
  %v196 = vld [vmem:[%s1 + $0x590] sm:$0xff]
  %v197 = vld [vmem:[%s1 + $0x598] sm:$0xff]
  %v198 = vld [vmem:[%s1 + $0x5a0] sm:$0xff]
  %v199 = vld [vmem:[%s1 + $0x5a8] sm:$0xff]
  %v200 = vld [vmem:[%s1 + $0x5b0] sm:$0xff]
  %v201 = vld [vmem:[%s1 + $0x5b8] sm:$0xff]
  %v202 = vld [vmem:[%s1 + $0x5c0] sm:$0xff]
  %v203 = vld [vmem:[%s1 + $0x5c8] sm:$0xff]
  %v204 = vld [vmem:[%s1 + $0x5d0] sm:$0xff]
  %v205 = vld [vmem:[%s1 + $0x5d8] sm:$0xff]
  %v206 = vld [vmem:[%s1 + $0x5e0] sm:$0xff]
  %v207 = vld [vmem:[%s1 + $0x5e8] sm:$0xff]
  %v208 = vld [vmem:[%s1 + $0x5f0] sm:$0xff]
  %v209 = vld [vmem:[%s1 + $0x5f8] sm:$0xff]
  %v210 = vld [vmem:[%s1 + $0x600] sm:$0xff]
  %v211 = vld [vmem:[%s1 + $0x608] sm:$0xff]
  %v212 = vld [vmem:[%s1 + $0x610] sm:$0xff]
  %v213 = vld [vmem:[%s1 + $0x618] sm:$0xff]
  %v214 = vld [vmem:[%s1 + $0x620] sm:$0xff]
  %v215 = vld [vmem:[%s1 + $0x628] sm:$0xff]
  %v216 = vld [vmem:[%s1 + $0x630] sm:$0xff]
  %v217 = vld [vmem:[%s1 + $0x638] sm:$0xff]
  %v218 = vld [vmem:[%s1 + $0x640] sm:$0xff]
  %v219 = vld [vmem:[%s1 + $0x648] sm:$0xff]
  %v220 = vld [vmem:[%s1 + $0x650] sm:$0xff]
  %v221 = vld [vmem:[%s1 + $0x658] sm:$0xff]
  %v222 = vld [vmem:[%s1 + $0x660] sm:$0xff]
  %v223 = vld [vmem:[%s1 + $0x668] sm:$0xff]
  %v224 = vld [vmem:[%s1 + $0x670] sm:$0xff]
  %v225 = vld [vmem:[%s1 + $0x678] sm:$0xff]
  %v226 = vld [vmem:[%s1 + $0x680] sm:$0xff]
  %v227 = vld [vmem:[%s1 + $0x688] sm:$0xff]
  %v228 = vld [vmem:[%s1 + $0x690] sm:$0xff]
  %v229 = vld [vmem:[%s1 + $0x698] sm:$0xff]
  %v230 = vld [vmem:[%s1 + $0x6a0] sm:$0xff]
  %v231 = vld [vmem:[%s1 + $0x6a8] sm:$0xff]
  %v232 = vld [vmem:[%s1 + $0x6b0] sm:$0xff]
  %v233 = vld [vmem:[%s1 + $0x6b8] sm:$0xff]
  %v234 = vld [vmem:[%s1 + $0x6c0] sm:$0xff]
  %v235 = vld [vmem:[%s1 + $0x6c8] sm:$0xff]
  %v236 = vld [vmem:[%s1 + $0x6d0] sm:$0xff]
  %v237 = vld [vmem:[%s1 + $0x6d8] sm:$0xff]
  %v238 = vld [vmem:[%s1 + $0x6e0] sm:$0xff]
  %v239 = vld [vmem:[%s1 + $0x6e8] sm:$0xff]
  %v240 = vld [vmem:[%s1 + $0x6f0] sm:$0xff]
  %v241 = vld [vmem:[%s1 + $0x6f8] sm:$0xff]
  %v242 = vld [vmem:[%s1 + $0x700] sm:$0xff]
  %v243 = vld [vmem:[%s1 + $0x708] sm:$0xff]
  %v244 = vld [vmem:[%s1 + $0x710] sm:$0xff]
  %v245 = vld [vmem:[%s1 + $0x718] sm:$0xff]
  %v246 = vld [vmem:[%s1 + $0x720] sm:$0xff]
  %v247 = vld [vmem:[%s1 + $0x728] sm:$0xff]
  %v248 = vld [vmem:[%s1 + $0x730] sm:$0xff]
  %v249 = vld [vmem:[%s1 + $0x738] sm:$0xff]
  %v250 = vld [vmem:[%s1 + $0x740] sm:$0xff]
  %v251 = vld [vmem:[%s1 + $0x748] sm:$0xff]
  %v252 = vld [vmem:[%s1 + $0x750] sm:$0xff]
  %v253 = vld [vmem:[%s1 + $0x758] sm:$0xff]
  %v254 = vld [vmem:[%s1 + $0x760] sm:$0xff]
  %v255 = vld [vmem:[%s1 + $0x768] sm:$0xff]
  %v256 = vld [vmem:[%s1 + $0x770] sm:$0xff]
  %v257 = vld [vmem:[%s1 + $0x778] sm:$0xff]
  %v258 = vld [vmem:[%s1 + $0x780] sm:$0xff]
  %v259 = vld [vmem:[%s1 + $0x788] sm:$0xff]
  %v260 = vld [vmem:[%s1 + $0x790] sm:$0xff]
  %v261 = vld [vmem:[%s1 + $0x798] sm:$0xff]
  %v262 = vld [vmem:[%s1 + $0x7a0] sm:$0xff]
  %v263 = vld [vmem:[%s1 + $0x7a8] sm:$0xff]
  %v264 = vld [vmem:[%s1 + $0x7b0] sm:$0xff]
  %v265 = vld [vmem:[%s1 + $0x7b8] sm:$0xff]
  %v266 = vld [vmem:[%s1 + $0x7c0] sm:$0xff]
  %v267 = vld [vmem:[%s1 + $0x7c8] sm:$0xff]
  %v268 = vld [vmem:[%s1 + $0x7d0] sm:$0xff]
  %v269 = vld [vmem:[%s1 + $0x7d8] sm:$0xff]
  %v270 = vld [vmem:[%s1 + $0x7e0] sm:$0xff]
  %v271 = vld [vmem:[%s1 + $0x7e8] sm:$0xff]
  %v272 = vld [vmem:[%s1 + $0x7f0] sm:$0xff]
  %v273 = vld [vmem:[%s1 + $0x7f8] sm:$0xff]
  %v274 = vld [vmem:[%s1 + $0x800] sm:$0xff]
  %v275 = vld [vmem:[%s1 + $0x808] sm:$0xff]
  %v276 = vld [vmem:[%s1 + $0x810] sm:$0xff]
  %v277 = vld [vmem:[%s1 + $0x818] sm:$0xff]
  %v278 = vld [vmem:[%s1 + $0x820] sm:$0xff]
  %v279 = vld [vmem:[%s1 + $0x828] sm:$0xff]
  %v280 = vld [vmem:[%s1 + $0x830] sm:$0xff]
  %v281 = vld [vmem:[%s1 + $0x838] sm:$0xff]
  %v282 = vld [vmem:[%s1 + $0x840] sm:$0xff]
  %v283 = vld [vmem:[%s1 + $0x848] sm:$0xff]
  %v284 = vld [vmem:[%s1 + $0x850] sm:$0xff]
  %v285 = vld [vmem:[%s1 + $0x858] sm:$0xff]
  %v286 = vld [vmem:[%s1 + $0x860] sm:$0xff]
  %v287 = vld [vmem:[%s1 + $0x868] sm:$0xff]
  %v288 = vld [vmem:[%s1 + $0x870] sm:$0xff]
  %v289 = vld [vmem:[%s1 + $0x878] sm:$0xff]
  %v290 = vld [vmem:[%s1 + $0x880] sm:$0xff]
  %v291 = vld [vmem:[%s1 + $0x888] sm:$0xff]
  %v292 = vld [vmem:[%s1 + $0x890] sm:$0xff]
  %v293 = vld [vmem:[%s1 + $0x898] sm:$0xff]
  %v294 = vld [vmem:[%s1 + $0x8a0] sm:$0xff]
  %v295 = vld [vmem:[%s1 + $0x8a8] sm:$0xff]
  %v296 = vld [vmem:[%s1 + $0x8b0] sm:$0xff]
  %v297 = vld [vmem:[%s1 + $0x8b8] sm:$0xff]
  %v298 = vld [vmem:[%s1 + $0x8c0] sm:$0xff]
  %v299 = vld [vmem:[%s1 + $0x8c8] sm:$0xff]
  %v300 = vld [vmem:[%s1 + $0x8d0] sm:$0xff]
  %v301 = vld [vmem:[%s1 + $0x8d8] sm:$0xff]
  %v302 = vld [vmem:[%s1 + $0x8e0] sm:$0xff]
  %v303 = vld [vmem:[%s1 + $0x8e8] sm:$0xff]
  %v304 = vld [vmem:[%s1 + $0x8f0] sm:$0xff]
  %v305 = vld [vmem:[%s1 + $0x8f8] sm:$0xff]
  %v306 = vld [vmem:[%s1 + $0x900] sm:$0xff]
  %v307 = vld [vmem:[%s1 + $0x908] sm:$0xff]
  %v308 = vld [vmem:[%s1 + $0x910] sm:$0xff]
  %v309 = vld [vmem:[%s1 + $0x918] sm:$0xff]
  %v310 = vld [vmem:[%s1 + $0x920] sm:$0xff]
  %v311 = vld [vmem:[%s1 + $0x928] sm:$0xff]
  %v312 = vld [vmem:[%s1 + $0x930] sm:$0xff]
  %v313 = vld [vmem:[%s1 + $0x938] sm:$0xff]
  %v314 = vld [vmem:[%s1 + $0x940] sm:$0xff]
  %v315 = vld [vmem:[%s1 + $0x948] sm:$0xff]
  %v316 = vld [vmem:[%s1 + $0x950] sm:$0xff]
  %v317 = vld [vmem:[%s1 + $0x958] sm:$0xff]
  %v318 = vld [vmem:[%s1 + $0x960] sm:$0xff]
  %v319 = vld [vmem:[%s1 + $0x968] sm:$0xff]
  %v320 = vld [vmem:[%s1 + $0x970] sm:$0xff]
  %v321 = vld [vmem:[%s1 + $0x978] sm:$0xff]
  %v322 = vld [vmem:[%s1 + $0x980] sm:$0xff]
  %v323 = vld [vmem:[%s1 + $0x988] sm:$0xff]
  %v324 = vld [vmem:[%s1 + $0x990] sm:$0xff]
  %v325 = vld [vmem:[%s1 + $0x998] sm:$0xff]
  %v326 = vld [vmem:[%s1 + $0x9a0] sm:$0xff]
  %v327 = vld [vmem:[%s1 + $0x9a8] sm:$0xff]
  %v328 = vld [vmem:[%s1 + $0x9b0] sm:$0xff]
  %v329 = vld [vmem:[%s1 + $0x9b8] sm:$0xff]
  %v330 = vld [vmem:[%s1 + $0x9c0] sm:$0xff]
  %v331 = vld [vmem:[%s1 + $0x9c8] sm:$0xff]
  %v332 = vld [vmem:[%s1 + $0x9d0] sm:$0xff]
  %v333 = vld [vmem:[%s1 + $0x9d8] sm:$0xff]
  %v334 = vld [vmem:[%s1 + $0x9e0] sm:$0xff]
  %v335 = vld [vmem:[%s1 + $0x9e8] sm:$0xff]
  %v336 = vld [vmem:[%s1 + $0x9f0] sm:$0xff]
  %v337 = vld [vmem:[%s1 + $0x9f8] sm:$0xff]
  %v338 = vld [vmem:[%s1 + $0xa00] sm:$0xff]
  %v339 = vld [vmem:[%s1 + $0xa08] sm:$0xff]
  %v340 = vld [vmem:[%s1 + $0xa10] sm:$0xff]
  %v341 = vld [vmem:[%s1 + $0xa18] sm:$0xff]
  %v342 = vld [vmem:[%s2] sm:$0x3]
  %v344 = vlaneseq
  %v345 = vshrl.u32 %v344, 7
  %v346 = vsub.s32 0, %v345
  %v347 = vrot.slane %v342, %v346
  %v348 = vlaneseq
  %v349 = vshrl.u32 %v348, 7
  %v350 = vsub.s32 1, %v349
  %v351 = vrot.slane %v342, %v350
  %v357 = vcombine.high %v15, %v15
  %v359 = vunpack.c.l.s4 1966171168
  %v360 = vunpack.c.0.s8 %v359
  %v361 = vlaneseq
  %v362 = vshrl.u32 %v361, 7
  %v363 = vsub.s32 %v360, %v362
  %v364 = vrot.slane %v15, %v363
  %v366 = vunpack.c.l.s4 1966171168
  %v367 = vunpack.c.0.s8 %v366
  %v368 = vlaneseq
  %v369 = vshrl.u32 %v368, 7
  %v370 = vsub.s32 %v367, %v369
  %v371 = vrot.slane %v357, %v370
  %v372 = vcombine.high %v364, %v364
  %v373 = vcombine.high %v371, %v371
  %v375 = vunpack.c.l.s4 1966171168
  %v376 = vunpack.c.0.s8 %v375
  %v377 = vlaneseq
  %v378 = vshrl.u32 %v377, 7
  %v379 = vsub.s32 %v376, %v378
  %v380 = vrot.slane %v364, %v379
  %v382 = vunpack.c.l.s4 1966171168
  %v383 = vunpack.c.0.s8 %v382
  %v384 = vlaneseq
  %v385 = vshrl.u32 %v384, 7
  %v386 = vsub.s32 %v383, %v385
  %v387 = vrot.slane %v371, %v386
  %v389 = vunpack.c.l.s4 1966171168
  %v390 = vunpack.c.0.s8 %v389
  %v391 = vlaneseq
  %v392 = vshrl.u32 %v391, 7
  %v393 = vsub.s32 %v390, %v392
  %v394 = vrot.slane %v372, %v393
  %v396 = vunpack.c.l.s4 1966171168
  %v397 = vunpack.c.0.s8 %v396
  %v398 = vlaneseq
  %v399 = vshrl.u32 %v398, 7
  %v400 = vsub.s32 %v397, %v399
  %v401 = vrot.slane %v373, %v400
  %v402 = vcombine.high %v380, %v380
  %v403 = vcombine.high %v387, %v387
  %v404 = vcombine.high %v394, %v394
  %v405 = vcombine.high %v401, %v401
  %v406 = vcombine.high %v16, %v16
  %v408 = vunpack.c.l.s4 1966171168
  %v409 = vunpack.c.0.s8 %v408
  %v410 = vlaneseq
  %v411 = vshrl.u32 %v410, 7
  %v412 = vsub.s32 %v409, %v411
  %v413 = vrot.slane %v16, %v412
  %v415 = vunpack.c.l.s4 1966171168
  %v416 = vunpack.c.0.s8 %v415
  %v417 = vlaneseq
  %v418 = vshrl.u32 %v417, 7
  %v419 = vsub.s32 %v416, %v418
  %v420 = vrot.slane %v406, %v419
  %v421 = vcombine.high %v413, %v413
  %v422 = vcombine.high %v420, %v420
  %v424 = vunpack.c.l.s4 1966171168
  %v425 = vunpack.c.0.s8 %v424
  %v426 = vlaneseq
  %v427 = vshrl.u32 %v426, 7
  %v428 = vsub.s32 %v425, %v427
  %v429 = vrot.slane %v413, %v428
  %v431 = vunpack.c.l.s4 1966171168
  %v432 = vunpack.c.0.s8 %v431
  %v433 = vlaneseq
  %v434 = vshrl.u32 %v433, 7
  %v435 = vsub.s32 %v432, %v434
  %v436 = vrot.slane %v420, %v435
  %v438 = vunpack.c.l.s4 1966171168
  %v439 = vunpack.c.0.s8 %v438
  %v440 = vlaneseq
  %v441 = vshrl.u32 %v440, 7
  %v442 = vsub.s32 %v439, %v441
  %v443 = vrot.slane %v421, %v442
  %v445 = vunpack.c.l.s4 1966171168
  %v446 = vunpack.c.0.s8 %v445
  %v447 = vlaneseq
  %v448 = vshrl.u32 %v447, 7
  %v449 = vsub.s32 %v446, %v448
  %v450 = vrot.slane %v422, %v449
  %v451 = vcombine.high %v429, %v429
  %v452 = vcombine.high %v436, %v436
  %v453 = vcombine.high %v443, %v443
  %v454 = vcombine.high %v450, %v450
  %v455 = vcombine.high %v17, %v17
  %v457 = vunpack.c.l.s4 1966171168
  %v458 = vunpack.c.0.s8 %v457
  %v459 = vlaneseq
  %v460 = vshrl.u32 %v459, 7
  %v461 = vsub.s32 %v458, %v460
  %v462 = vrot.slane %v17, %v461
  %v464 = vunpack.c.l.s4 1966171168
  %v465 = vunpack.c.0.s8 %v464
  %v466 = vlaneseq
  %v467 = vshrl.u32 %v466, 7
  %v468 = vsub.s32 %v465, %v467
  %v469 = vrot.slane %v455, %v468
  %v470 = vcombine.high %v462, %v462
  %v472 = vunpack.c.l.s4 1966171168
  %v473 = vunpack.c.0.s8 %v472
  %v474 = vlaneseq
  %v475 = vshrl.u32 %v474, 7
  %v476 = vsub.s32 %v473, %v475
  %v477 = vrot.slane %v462, %v476
  %v479 = vunpack.c.l.s4 1966171168
  %v480 = vunpack.c.0.s8 %v479
  %v481 = vlaneseq
  %v482 = vshrl.u32 %v481, 7
  %v483 = vsub.s32 %v480, %v482
  %v484 = vrot.slane %v469, %v483
  %v486 = vunpack.c.l.s4 1966171168
  %v487 = vunpack.c.0.s8 %v486
  %v488 = vlaneseq
  %v489 = vshrl.u32 %v488, 7
  %v490 = vsub.s32 %v487, %v489
  %v491 = vrot.slane %v470, %v490
  %v492 = vcombine.high %v477, %v477
  %v493 = vcombine.high %v491, %v491
  %v838 = vunpack.c.l.b16 %v18
  %v839 = vunpack.c.h.b16 %v18
  %v840 = vunpack.c.l.b16 %v19
  %v841 = vunpack.c.h.b16 %v19
  %v842 = vunpack.c.l.b16 %v20
  %v843 = vunpack.c.h.b16 %v20
  %v844 = vunpack.c.l.b16 %v21
  %v845 = vunpack.c.h.b16 %v21
  %v846 = vunpack.c.l.b16 %v22
  %v847 = vunpack.c.h.b16 %v22
  %v848 = vunpack.c.l.b16 %v23
  %v849 = vunpack.c.h.b16 %v23
  %v850 = vunpack.c.l.b16 %v24
  %v851 = vunpack.c.h.b16 %v24
  %v852 = vunpack.c.l.b16 %v25
  %v853 = vunpack.c.h.b16 %v25
  %v854 = vunpack.c.l.b16 %v26
  %v855 = vunpack.c.h.b16 %v26
  %v856 = vunpack.c.l.b16 %v27
  %v857 = vunpack.c.h.b16 %v27
  %v858 = vunpack.c.l.b16 %v28
  %v859 = vunpack.c.h.b16 %v28
  %v860 = vunpack.c.l.b16 %v29
  %v861 = vunpack.c.h.b16 %v29
  %v862 = vunpack.c.l.b16 %v30
  %v863 = vunpack.c.h.b16 %v30
  %v864 = vunpack.c.l.b16 %v31
  %v865 = vunpack.c.h.b16 %v31
  %v866 = vunpack.c.l.b16 %v32
  %v867 = vunpack.c.h.b16 %v32
  %v868 = vunpack.c.l.b16 %v33
  %v869 = vunpack.c.h.b16 %v33
  %v870 = vunpack.c.l.b16 %v34
  %v871 = vunpack.c.h.b16 %v34
  %v872 = vunpack.c.l.b16 %v35
  %v873 = vunpack.c.h.b16 %v35
  %v874 = vunpack.c.l.b16 %v36
  %v875 = vunpack.c.h.b16 %v36
  %v876 = vunpack.c.l.b16 %v37
  %v877 = vunpack.c.h.b16 %v37
  %v878 = vunpack.c.l.b16 %v38
  %v879 = vunpack.c.h.b16 %v38
  %v880 = vunpack.c.l.b16 %v39
  %v881 = vunpack.c.h.b16 %v39
  %v882 = vunpack.c.l.b16 %v40
  %v883 = vunpack.c.h.b16 %v40
  %v884 = vunpack.c.l.b16 %v41
  %v885 = vunpack.c.h.b16 %v41
  %v886 = vunpack.c.l.b16 %v42
  %v887 = vunpack.c.h.b16 %v42
  %v888 = vunpack.c.l.b16 %v43
  %v889 = vunpack.c.h.b16 %v43
  %v890 = vunpack.c.l.b16 %v44
  %v891 = vunpack.c.h.b16 %v44
  %v892 = vunpack.c.l.b16 %v45
  %v893 = vunpack.c.h.b16 %v45
  %v894 = vunpack.c.l.b16 %v46
  %v895 = vunpack.c.h.b16 %v46
  %v896 = vunpack.c.l.b16 %v47
  %v897 = vunpack.c.h.b16 %v47
  %v898 = vunpack.c.l.b16 %v48
  %v899 = vunpack.c.h.b16 %v48
  %v900 = vunpack.c.l.b16 %v49
  %v901 = vunpack.c.h.b16 %v49
  %v902 = vunpack.c.l.b16 %v50
  %v903 = vunpack.c.h.b16 %v50
  %v904 = vunpack.c.l.b16 %v51
  %v905 = vunpack.c.h.b16 %v51
  %v906 = vunpack.c.l.b16 %v52
  %v907 = vunpack.c.h.b16 %v52
  %v908 = vunpack.c.l.b16 %v53
  %v909 = vunpack.c.h.b16 %v53
  %v910 = vunpack.c.l.b16 %v54
  %v911 = vunpack.c.h.b16 %v54
  %v912 = vunpack.c.l.b16 %v55
  %v913 = vunpack.c.h.b16 %v55
  %v914 = vunpack.c.l.b16 %v56
  %v915 = vunpack.c.h.b16 %v56
  %v916 = vunpack.c.l.b16 %v57
  %v917 = vunpack.c.h.b16 %v57
  %v918 = vunpack.c.l.b16 %v58
  %v919 = vunpack.c.h.b16 %v58
  %v920 = vunpack.c.l.b16 %v59
  %v921 = vunpack.c.h.b16 %v59
  %v922 = vunpack.c.l.b16 %v60
  %v923 = vunpack.c.h.b16 %v60
  %v924 = vunpack.c.l.b16 %v61
  %v925 = vunpack.c.h.b16 %v61
  %v926 = vunpack.c.l.b16 %v62
  %v927 = vunpack.c.h.b16 %v62
  %v928 = vunpack.c.l.b16 %v63
  %v929 = vunpack.c.h.b16 %v63
  %v930 = vunpack.c.l.b16 %v64
  %v931 = vunpack.c.h.b16 %v64
  %v932 = vunpack.c.l.b16 %v65
  %v933 = vunpack.c.h.b16 %v65
  %v934 = vunpack.c.l.b16 %v66
  %v935 = vunpack.c.h.b16 %v66
  %v936 = vunpack.c.l.b16 %v67
  %v937 = vunpack.c.h.b16 %v67
  %v938 = vunpack.c.l.b16 %v68
  %v939 = vunpack.c.h.b16 %v68
  %v940 = vunpack.c.l.b16 %v69
  %v941 = vunpack.c.h.b16 %v69
  %v942 = vunpack.c.l.b16 %v70
  %v943 = vunpack.c.h.b16 %v70
  %v944 = vunpack.c.l.b16 %v71
  %v945 = vunpack.c.h.b16 %v71
  %v946 = vunpack.c.l.b16 %v72
  %v947 = vunpack.c.h.b16 %v72
  %v948 = vunpack.c.l.b16 %v73
  %v949 = vunpack.c.h.b16 %v73
  %v950 = vunpack.c.l.b16 %v74
  %v951 = vunpack.c.h.b16 %v74
  %v952 = vunpack.c.l.b16 %v75
  %v953 = vunpack.c.h.b16 %v75
  %v954 = vunpack.c.l.b16 %v76
  %v955 = vunpack.c.h.b16 %v76
  %v956 = vunpack.c.l.b16 %v77
  %v957 = vunpack.c.h.b16 %v77
  %v958 = vunpack.c.l.b16 %v78
  %v959 = vunpack.c.h.b16 %v78
  %v960 = vunpack.c.l.b16 %v79
  %v961 = vunpack.c.h.b16 %v79
  %v962 = vunpack.c.l.b16 %v80
  %v963 = vunpack.c.h.b16 %v80
  %v964 = vunpack.c.l.b16 %v81
  %v965 = vunpack.c.h.b16 %v81
  %v966 = vunpack.c.l.b16 %v82
  %v967 = vunpack.c.h.b16 %v82
  %v968 = vunpack.c.l.b16 %v83
  %v969 = vunpack.c.h.b16 %v83
  %v970 = vunpack.c.l.b16 %v84
  %v971 = vunpack.c.h.b16 %v84
  %v972 = vunpack.c.l.b16 %v85
  %v973 = vunpack.c.h.b16 %v85
  %v974 = vunpack.c.l.b16 %v86
  %v975 = vunpack.c.h.b16 %v86
  %v976 = vunpack.c.l.b16 %v87
  %v977 = vunpack.c.h.b16 %v87
  %v978 = vunpack.c.l.b16 %v88
  %v979 = vunpack.c.h.b16 %v88
  %v980 = vunpack.c.l.b16 %v89
  %v981 = vunpack.c.h.b16 %v89
  %v982 = vunpack.c.l.b16 %v90
  %v983 = vunpack.c.h.b16 %v90
  %v984 = vunpack.c.l.b16 %v91
  %v985 = vunpack.c.h.b16 %v91
  %v986 = vunpack.c.l.b16 %v92
  %v987 = vunpack.c.h.b16 %v92
  %v988 = vunpack.c.l.b16 %v93
  %v989 = vunpack.c.h.b16 %v93
  %v990 = vunpack.c.l.b16 %v94
  %v991 = vunpack.c.h.b16 %v94
  %v992 = vunpack.c.l.b16 %v95
  %v993 = vunpack.c.h.b16 %v95
  %v994 = vunpack.c.l.b16 %v96
  %v995 = vunpack.c.h.b16 %v96
  %v996 = vunpack.c.l.b16 %v97
  %v997 = vunpack.c.h.b16 %v97
  %v998 = vunpack.c.l.b16 %v98
  %v999 = vunpack.c.h.b16 %v98
  %v1000 = vunpack.c.l.b16 %v99
  %v1001 = vunpack.c.h.b16 %v99
  %v1002 = vunpack.c.l.b16 %v100
  %v1003 = vunpack.c.h.b16 %v100
  %v1004 = vunpack.c.l.b16 %v101
  %v1005 = vunpack.c.h.b16 %v101
  %v1006 = vunpack.c.l.b16 %v102
  %v1007 = vunpack.c.h.b16 %v102
  %v1008 = vunpack.c.l.b16 %v103
  %v1009 = vunpack.c.h.b16 %v103
  %v1010 = vunpack.c.l.b16 %v104
  %v1011 = vunpack.c.h.b16 %v104
  %v1012 = vunpack.c.l.b16 %v105
  %v1013 = vunpack.c.h.b16 %v105
  %v1014 = vunpack.c.l.b16 %v106
  %v1015 = vunpack.c.h.b16 %v106
  %v1016 = vunpack.c.l.b16 %v107
  %v1017 = vunpack.c.h.b16 %v107
  %v1018 = vunpack.c.l.b16 %v108
  %v1019 = vunpack.c.h.b16 %v108
  %v1020 = vunpack.c.l.b16 %v109
  %v1021 = vunpack.c.h.b16 %v109
  %v1022 = vunpack.c.l.b16 %v110
  %v1023 = vunpack.c.h.b16 %v110
  %v1024 = vunpack.c.l.b16 %v111
  %v1025 = vunpack.c.h.b16 %v111
  %v1026 = vunpack.c.l.b16 %v112
  %v1027 = vunpack.c.h.b16 %v112
  %v1028 = vunpack.c.l.b16 %v113
  %v1029 = vunpack.c.h.b16 %v113
  %v1030 = vunpack.c.l.b16 %v114
  %v1031 = vunpack.c.h.b16 %v114
  %v1032 = vunpack.c.l.b16 %v115
  %v1033 = vunpack.c.h.b16 %v115
  %v1034 = vunpack.c.l.b16 %v116
  %v1035 = vunpack.c.h.b16 %v116
  %v1036 = vunpack.c.l.b16 %v117
  %v1037 = vunpack.c.h.b16 %v117
  %v1038 = vunpack.c.l.b16 %v118
  %v1039 = vunpack.c.h.b16 %v118
  %v1040 = vunpack.c.l.b16 %v119
  %v1041 = vunpack.c.h.b16 %v119
  %v1042 = vunpack.c.l.b16 %v120
  %v1043 = vunpack.c.h.b16 %v120
  %v1044 = vunpack.c.l.b16 %v121
  %v1045 = vunpack.c.h.b16 %v121
  %v1046 = vunpack.c.l.b16 %v122
  %v1047 = vunpack.c.h.b16 %v122
  %v1048 = vunpack.c.l.b16 %v123
  %v1049 = vunpack.c.h.b16 %v123
  %v1050 = vunpack.c.l.b16 %v124
  %v1051 = vunpack.c.h.b16 %v124
  %v1052 = vunpack.c.l.b16 %v125
  %v1053 = vunpack.c.h.b16 %v125
  %v1054 = vunpack.c.l.b16 %v126
  %v1055 = vunpack.c.h.b16 %v126
  %v1056 = vunpack.c.l.b16 %v127
  %v1057 = vunpack.c.h.b16 %v127
  %v1058 = vunpack.c.l.b16 %v128
  %v1059 = vunpack.c.h.b16 %v128
  %v1060 = vunpack.c.l.b16 %v129
  %v1061 = vunpack.c.h.b16 %v129
  %v1062 = vunpack.c.l.b16 %v130
  %v1063 = vunpack.c.h.b16 %v130
  %v1064 = vunpack.c.l.b16 %v131
  %v1065 = vunpack.c.h.b16 %v131
  %v1066 = vunpack.c.l.b16 %v132
  %v1067 = vunpack.c.h.b16 %v132
  %v1068 = vunpack.c.l.b16 %v133
  %v1069 = vunpack.c.h.b16 %v133
  %v1070 = vunpack.c.l.b16 %v134
  %v1071 = vunpack.c.h.b16 %v134
  %v1072 = vunpack.c.l.b16 %v135
  %v1073 = vunpack.c.h.b16 %v135
  %v1074 = vunpack.c.l.b16 %v136
  %v1075 = vunpack.c.h.b16 %v136
  %v1076 = vunpack.c.l.b16 %v137
  %v1077 = vunpack.c.h.b16 %v137
  %v1078 = vunpack.c.l.b16 %v138
  %v1079 = vunpack.c.h.b16 %v138
  %v1080 = vunpack.c.l.b16 %v139
  %v1081 = vunpack.c.h.b16 %v139
  %v1082 = vunpack.c.l.b16 %v140
  %v1083 = vunpack.c.h.b16 %v140
  %v1084 = vunpack.c.l.b16 %v141
  %v1085 = vunpack.c.h.b16 %v141
  %v1086 = vunpack.c.l.b16 %v142
  %v1087 = vunpack.c.h.b16 %v142
  %v1088 = vunpack.c.l.b16 %v143
  %v1089 = vunpack.c.h.b16 %v143
  %v1090 = vunpack.c.l.b16 %v144
  %v1091 = vunpack.c.h.b16 %v144
  %v1092 = vunpack.c.l.b16 %v145
  %v1093 = vunpack.c.h.b16 %v145
  %v1094 = vunpack.c.l.b16 %v146
  %v1095 = vunpack.c.h.b16 %v146
  %v1096 = vunpack.c.l.b16 %v147
  %v1097 = vunpack.c.h.b16 %v147
  %v1098 = vunpack.c.l.b16 %v148
  %v1099 = vunpack.c.h.b16 %v148
  %v1100 = vunpack.c.l.b16 %v149
  %v1101 = vunpack.c.h.b16 %v149
  %v1102 = vunpack.c.l.b16 %v150
  %v1103 = vunpack.c.h.b16 %v150
  %v1104 = vunpack.c.l.b16 %v151
  %v1105 = vunpack.c.h.b16 %v151
  %v1106 = vunpack.c.l.b16 %v152
  %v1107 = vunpack.c.h.b16 %v152
  %v1108 = vunpack.c.l.b16 %v153
  %v1109 = vunpack.c.h.b16 %v153
  %v1110 = vunpack.c.l.b16 %v154
  %v1111 = vunpack.c.h.b16 %v154
  %v1112 = vunpack.c.l.b16 %v155
  %v1113 = vunpack.c.h.b16 %v155
  %v1114 = vunpack.c.l.b16 %v156
  %v1115 = vunpack.c.h.b16 %v156
  %v1116 = vunpack.c.l.b16 %v157
  %v1117 = vunpack.c.h.b16 %v157
  %v1118 = vunpack.c.l.b16 %v158
  %v1119 = vunpack.c.h.b16 %v158
  %v1120 = vunpack.c.l.b16 %v159
  %v1121 = vunpack.c.h.b16 %v159
  %v1122 = vunpack.c.l.b16 %v160
  %v1123 = vunpack.c.h.b16 %v160
  %v1124 = vunpack.c.l.b16 %v161
  %v1125 = vunpack.c.h.b16 %v161
  %v1126 = vunpack.c.l.b16 %v162
  %v1127 = vunpack.c.h.b16 %v162
  %v1128 = vunpack.c.l.b16 %v163
  %v1129 = vunpack.c.h.b16 %v163
  %v1130 = vunpack.c.l.b16 %v164
  %v1131 = vunpack.c.h.b16 %v164
  %v1132 = vunpack.c.l.b16 %v165
  %v1133 = vunpack.c.h.b16 %v165
  %v1134 = vunpack.c.l.b16 %v166
  %v1135 = vunpack.c.h.b16 %v166
  %v1136 = vunpack.c.l.b16 %v167
  %v1137 = vunpack.c.h.b16 %v167
  %v1138 = vunpack.c.l.b16 %v168
  %v1139 = vunpack.c.h.b16 %v168
  %v1140 = vunpack.c.l.b16 %v169
  %v1141 = vunpack.c.h.b16 %v169
  %v1142 = vunpack.c.l.b16 %v170
  %v1143 = vunpack.c.h.b16 %v170
  %v1144 = vunpack.c.l.b16 %v171
  %v1145 = vunpack.c.h.b16 %v171
  %v1146 = vunpack.c.l.b16 %v172
  %v1147 = vunpack.c.h.b16 %v172
  %v1148 = vunpack.c.l.b16 %v173
  %v1149 = vunpack.c.h.b16 %v173
  %v1150 = vunpack.c.l.b16 %v174
  %v1151 = vunpack.c.h.b16 %v174
  %v1152 = vunpack.c.l.b16 %v175
  %v1153 = vunpack.c.h.b16 %v175
  %v1154 = vunpack.c.l.b16 %v176
  %v1155 = vunpack.c.h.b16 %v176
  %v1156 = vunpack.c.l.b16 %v177
  %v1157 = vunpack.c.h.b16 %v177
  %v1158 = vunpack.c.l.b16 %v178
  %v1159 = vunpack.c.h.b16 %v178
  %v1160 = vunpack.c.l.b16 %v179
  %v1161 = vunpack.c.h.b16 %v179
  %v1162 = vunpack.c.l.b16 %v180
  %v1163 = vunpack.c.h.b16 %v180
  %v1164 = vunpack.c.l.b16 %v181
  %v1165 = vunpack.c.h.b16 %v181
  %v1166 = vunpack.c.l.b16 %v182
  %v1167 = vunpack.c.h.b16 %v182
  %v1168 = vunpack.c.l.b16 %v183
  %v1169 = vunpack.c.h.b16 %v183
  %v1170 = vunpack.c.l.b16 %v184
  %v1171 = vunpack.c.h.b16 %v184
  %v1172 = vunpack.c.l.b16 %v185
  %v1173 = vunpack.c.h.b16 %v185
  %v1174 = vunpack.c.l.b16 %v186
  %v1175 = vunpack.c.h.b16 %v186
  %v1176 = vunpack.c.l.b16 %v187
  %v1177 = vunpack.c.h.b16 %v187
  %v1178 = vunpack.c.l.b16 %v188
  %v1179 = vunpack.c.h.b16 %v188
  %v1180 = vunpack.c.l.b16 %v189
  %v1181 = vunpack.c.h.b16 %v189
  %v1182 = vunpack.c.l.b16 %v190
  %v1183 = vunpack.c.h.b16 %v190
  %v1184 = vunpack.c.l.b16 %v191
  %v1185 = vunpack.c.h.b16 %v191
  %v1186 = vunpack.c.l.b16 %v192
  %v1187 = vunpack.c.h.b16 %v192
  %v1188 = vunpack.c.l.b16 %v193
  %v1189 = vunpack.c.h.b16 %v193
  %v1190 = vunpack.c.l.b16 %v194
  %v1191 = vunpack.c.h.b16 %v194
  %v1192 = vunpack.c.l.b16 %v195
  %v1193 = vunpack.c.h.b16 %v195
  %v1194 = vunpack.c.l.b16 %v196
  %v1195 = vunpack.c.h.b16 %v196
  %v1196 = vunpack.c.l.b16 %v197
  %v1197 = vunpack.c.h.b16 %v197
  %v1198 = vunpack.c.l.b16 %v198
  %v1199 = vunpack.c.h.b16 %v198
  %v1200 = vunpack.c.l.b16 %v199
  %v1201 = vunpack.c.h.b16 %v199
  %v1202 = vunpack.c.l.b16 %v200
  %v1203 = vunpack.c.h.b16 %v200
  %v1204 = vunpack.c.l.b16 %v201
  %v1205 = vunpack.c.h.b16 %v201
  %v1206 = vunpack.c.l.b16 %v202
  %v1207 = vunpack.c.h.b16 %v202
  %v1208 = vunpack.c.l.b16 %v203
  %v1209 = vunpack.c.h.b16 %v203
  %v1210 = vunpack.c.l.b16 %v204
  %v1211 = vunpack.c.h.b16 %v204
  %v1212 = vunpack.c.l.b16 %v205
  %v1213 = vunpack.c.h.b16 %v205
  %v1214 = vunpack.c.l.b16 %v206
  %v1215 = vunpack.c.h.b16 %v206
  %v1216 = vunpack.c.l.b16 %v207
  %v1217 = vunpack.c.h.b16 %v207
  %v1218 = vunpack.c.l.b16 %v208
  %v1219 = vunpack.c.h.b16 %v208
  %v1220 = vunpack.c.l.b16 %v209
  %v1221 = vunpack.c.h.b16 %v209
  %v1222 = vunpack.c.l.b16 %v210
  %v1223 = vunpack.c.h.b16 %v210
  %v1224 = vunpack.c.l.b16 %v211
  %v1225 = vunpack.c.h.b16 %v211
  %v1226 = vunpack.c.l.b16 %v212
  %v1227 = vunpack.c.h.b16 %v212
  %v1228 = vunpack.c.l.b16 %v213
  %v1229 = vunpack.c.h.b16 %v213
  %v1230 = vunpack.c.l.b16 %v214
  %v1231 = vunpack.c.h.b16 %v214
  %v1232 = vunpack.c.l.b16 %v215
  %v1233 = vunpack.c.h.b16 %v215
  %v1234 = vunpack.c.l.b16 %v216
  %v1235 = vunpack.c.h.b16 %v216
  %v1236 = vunpack.c.l.b16 %v217
  %v1237 = vunpack.c.h.b16 %v217
  %v1238 = vunpack.c.l.b16 %v218
  %v1239 = vunpack.c.h.b16 %v218
  %v1240 = vunpack.c.l.b16 %v219
  %v1241 = vunpack.c.h.b16 %v219
  %v1242 = vunpack.c.l.b16 %v220
  %v1243 = vunpack.c.h.b16 %v220
  %v1244 = vunpack.c.l.b16 %v221
  %v1245 = vunpack.c.h.b16 %v221
  %v1246 = vunpack.c.l.b16 %v222
  %v1247 = vunpack.c.h.b16 %v222
  %v1248 = vunpack.c.l.b16 %v223
  %v1249 = vunpack.c.h.b16 %v223
  %v1250 = vunpack.c.l.b16 %v224
  %v1251 = vunpack.c.h.b16 %v224
  %v1252 = vunpack.c.l.b16 %v225
  %v1253 = vunpack.c.h.b16 %v225
  %v1254 = vunpack.c.l.b16 %v226
  %v1255 = vunpack.c.h.b16 %v226
  %v1256 = vunpack.c.l.b16 %v227
  %v1257 = vunpack.c.h.b16 %v227
  %v1258 = vunpack.c.l.b16 %v228
  %v1259 = vunpack.c.h.b16 %v228
  %v1260 = vunpack.c.l.b16 %v229
  %v1261 = vunpack.c.h.b16 %v229
  %v1262 = vunpack.c.l.b16 %v230
  %v1263 = vunpack.c.h.b16 %v230
  %v1264 = vunpack.c.l.b16 %v231
  %v1265 = vunpack.c.h.b16 %v231
  %v1266 = vunpack.c.l.b16 %v232
  %v1267 = vunpack.c.h.b16 %v232
  %v1268 = vunpack.c.l.b16 %v233
  %v1269 = vunpack.c.h.b16 %v233
  %v1270 = vunpack.c.l.b16 %v234
  %v1271 = vunpack.c.h.b16 %v234
  %v1272 = vunpack.c.l.b16 %v235
  %v1273 = vunpack.c.h.b16 %v235
  %v1274 = vunpack.c.l.b16 %v236
  %v1275 = vunpack.c.h.b16 %v236
  %v1276 = vunpack.c.l.b16 %v237
  %v1277 = vunpack.c.h.b16 %v237
  %v1278 = vunpack.c.l.b16 %v238
  %v1279 = vunpack.c.h.b16 %v238
  %v1280 = vunpack.c.l.b16 %v239
  %v1281 = vunpack.c.h.b16 %v239
  %v1282 = vunpack.c.l.b16 %v240
  %v1283 = vunpack.c.h.b16 %v240
  %v1284 = vunpack.c.l.b16 %v241
  %v1285 = vunpack.c.h.b16 %v241
  %v1286 = vunpack.c.l.b16 %v242
  %v1287 = vunpack.c.h.b16 %v242
  %v1288 = vunpack.c.l.b16 %v243
  %v1289 = vunpack.c.h.b16 %v243
  %v1290 = vunpack.c.l.b16 %v244
  %v1291 = vunpack.c.h.b16 %v244
  %v1292 = vunpack.c.l.b16 %v245
  %v1293 = vunpack.c.h.b16 %v245
  %v1294 = vunpack.c.l.b16 %v246
  %v1295 = vunpack.c.h.b16 %v246
  %v1296 = vunpack.c.l.b16 %v247
  %v1297 = vunpack.c.h.b16 %v247
  %v1298 = vunpack.c.l.b16 %v248
  %v1299 = vunpack.c.h.b16 %v248
  %v1300 = vunpack.c.l.b16 %v249
  %v1301 = vunpack.c.h.b16 %v249
  %v1302 = vunpack.c.l.b16 %v250
  %v1303 = vunpack.c.h.b16 %v250
  %v1304 = vunpack.c.l.b16 %v251
  %v1305 = vunpack.c.h.b16 %v251
  %v1306 = vunpack.c.l.b16 %v252
  %v1307 = vunpack.c.h.b16 %v252
  %v1308 = vunpack.c.l.b16 %v253
  %v1309 = vunpack.c.h.b16 %v253
  %v1310 = vunpack.c.l.b16 %v254
  %v1311 = vunpack.c.h.b16 %v254
  %v1312 = vunpack.c.l.b16 %v255
  %v1313 = vunpack.c.h.b16 %v255
  %v1314 = vunpack.c.l.b16 %v256
  %v1315 = vunpack.c.h.b16 %v256
  %v1316 = vunpack.c.l.b16 %v257
  %v1317 = vunpack.c.h.b16 %v257
  %v1318 = vunpack.c.l.b16 %v258
  %v1319 = vunpack.c.h.b16 %v258
  %v1320 = vunpack.c.l.b16 %v259
  %v1321 = vunpack.c.h.b16 %v259
  %v1322 = vunpack.c.l.b16 %v260
  %v1323 = vunpack.c.h.b16 %v260
  %v1324 = vunpack.c.l.b16 %v261
  %v1325 = vunpack.c.h.b16 %v261
  %v1326 = vunpack.c.l.b16 %v262
  %v1327 = vunpack.c.h.b16 %v262
  %v1328 = vunpack.c.l.b16 %v263
  %v1329 = vunpack.c.h.b16 %v263
  %v1330 = vunpack.c.l.b16 %v264
  %v1331 = vunpack.c.h.b16 %v264
  %v1332 = vunpack.c.l.b16 %v265
  %v1333 = vunpack.c.h.b16 %v265
  %v1334 = vunpack.c.l.b16 %v266
  %v1335 = vunpack.c.h.b16 %v266
  %v1336 = vunpack.c.l.b16 %v267
  %v1337 = vunpack.c.h.b16 %v267
  %v1338 = vunpack.c.l.b16 %v268
  %v1339 = vunpack.c.h.b16 %v268
  %v1340 = vunpack.c.l.b16 %v269
  %v1341 = vunpack.c.h.b16 %v269
  %v1342 = vunpack.c.l.b16 %v270
  %v1343 = vunpack.c.h.b16 %v270
  %v1344 = vunpack.c.l.b16 %v271
  %v1345 = vunpack.c.h.b16 %v271
  %v1346 = vunpack.c.l.b16 %v272
  %v1347 = vunpack.c.h.b16 %v272
  %v1348 = vunpack.c.l.b16 %v273
  %v1349 = vunpack.c.h.b16 %v273
  %v1350 = vunpack.c.l.b16 %v274
  %v1351 = vunpack.c.h.b16 %v274
  %v1352 = vunpack.c.l.b16 %v275
  %v1353 = vunpack.c.h.b16 %v275
  %v1354 = vunpack.c.l.b16 %v276
  %v1355 = vunpack.c.h.b16 %v276
  %v1356 = vunpack.c.l.b16 %v277
  %v1357 = vunpack.c.h.b16 %v277
  %v1358 = vunpack.c.l.b16 %v278
  %v1359 = vunpack.c.h.b16 %v278
  %v1360 = vunpack.c.l.b16 %v279
  %v1361 = vunpack.c.h.b16 %v279
  %v1362 = vunpack.c.l.b16 %v280
  %v1363 = vunpack.c.h.b16 %v280
  %v1364 = vunpack.c.l.b16 %v281
  %v1365 = vunpack.c.h.b16 %v281
  %v1366 = vunpack.c.l.b16 %v282
  %v1367 = vunpack.c.h.b16 %v282
  %v1368 = vunpack.c.l.b16 %v283
  %v1369 = vunpack.c.h.b16 %v283
  %v1370 = vunpack.c.l.b16 %v284
  %v1371 = vunpack.c.h.b16 %v284
  %v1372 = vunpack.c.l.b16 %v285
  %v1373 = vunpack.c.h.b16 %v285
  %v1374 = vunpack.c.l.b16 %v286
  %v1375 = vunpack.c.h.b16 %v286
  %v1376 = vunpack.c.l.b16 %v287
  %v1377 = vunpack.c.h.b16 %v287
  %v1378 = vunpack.c.l.b16 %v288
  %v1379 = vunpack.c.h.b16 %v288
  %v1380 = vunpack.c.l.b16 %v289
  %v1381 = vunpack.c.h.b16 %v289
  %v1382 = vunpack.c.l.b16 %v290
  %v1383 = vunpack.c.h.b16 %v290
  %v1384 = vunpack.c.l.b16 %v291
  %v1385 = vunpack.c.h.b16 %v291
  %v1386 = vunpack.c.l.b16 %v292
  %v1387 = vunpack.c.h.b16 %v292
  %v1388 = vunpack.c.l.b16 %v293
  %v1389 = vunpack.c.h.b16 %v293
  %v1390 = vunpack.c.l.b16 %v294
  %v1391 = vunpack.c.h.b16 %v294
  %v1392 = vunpack.c.l.b16 %v295
  %v1393 = vunpack.c.h.b16 %v295
  %v1394 = vunpack.c.l.b16 %v296
  %v1395 = vunpack.c.h.b16 %v296
  %v1396 = vunpack.c.l.b16 %v297
  %v1397 = vunpack.c.h.b16 %v297
  %v1398 = vunpack.c.l.b16 %v298
  %v1399 = vunpack.c.h.b16 %v298
  %v1400 = vunpack.c.l.b16 %v299
  %v1401 = vunpack.c.h.b16 %v299
  %v1402 = vunpack.c.l.b16 %v300
  %v1403 = vunpack.c.h.b16 %v300
  %v1404 = vunpack.c.l.b16 %v301
  %v1405 = vunpack.c.h.b16 %v301
  %v1406 = vunpack.c.l.b16 %v302
  %v1407 = vunpack.c.h.b16 %v302
  %v1408 = vunpack.c.l.b16 %v303
  %v1409 = vunpack.c.h.b16 %v303
  %v1410 = vunpack.c.l.b16 %v304
  %v1411 = vunpack.c.h.b16 %v304
  %v1412 = vunpack.c.l.b16 %v305
  %v1413 = vunpack.c.h.b16 %v305
  %v1414 = vunpack.c.l.b16 %v306
  %v1415 = vunpack.c.h.b16 %v306
  %v1416 = vunpack.c.l.b16 %v307
  %v1417 = vunpack.c.h.b16 %v307
  %v1418 = vunpack.c.l.b16 %v308
  %v1419 = vunpack.c.h.b16 %v308
  %v1420 = vunpack.c.l.b16 %v309
  %v1421 = vunpack.c.h.b16 %v309
  %v1422 = vunpack.c.l.b16 %v310
  %v1423 = vunpack.c.h.b16 %v310
  %v1424 = vunpack.c.l.b16 %v311
  %v1425 = vunpack.c.h.b16 %v311
  %v1426 = vunpack.c.l.b16 %v312
  %v1427 = vunpack.c.h.b16 %v312
  %v1428 = vunpack.c.l.b16 %v313
  %v1429 = vunpack.c.h.b16 %v313
  %v1430 = vunpack.c.l.b16 %v314
  %v1431 = vunpack.c.h.b16 %v314
  %v1432 = vunpack.c.l.b16 %v315
  %v1433 = vunpack.c.h.b16 %v315
  %v1434 = vunpack.c.l.b16 %v316
  %v1435 = vunpack.c.h.b16 %v316
  %v1436 = vunpack.c.l.b16 %v317
  %v1437 = vunpack.c.h.b16 %v317
  %v1438 = vunpack.c.l.b16 %v318
  %v1439 = vunpack.c.h.b16 %v318
  %v1440 = vunpack.c.l.b16 %v319
  %v1441 = vunpack.c.h.b16 %v319
  %v1442 = vunpack.c.l.b16 %v320
  %v1443 = vunpack.c.h.b16 %v320
  %v1444 = vunpack.c.l.b16 %v321
  %v1445 = vunpack.c.h.b16 %v321
  %v1446 = vunpack.c.l.b16 %v322
  %v1447 = vunpack.c.h.b16 %v322
  %v1448 = vunpack.c.l.b16 %v323
  %v1449 = vunpack.c.h.b16 %v323
  %v1450 = vunpack.c.l.b16 %v324
  %v1451 = vunpack.c.h.b16 %v324
  %v1452 = vunpack.c.l.b16 %v325
  %v1453 = vunpack.c.h.b16 %v325
  %v1454 = vunpack.c.l.b16 %v326
  %v1455 = vunpack.c.h.b16 %v326
  %v1456 = vunpack.c.l.b16 %v327
  %v1457 = vunpack.c.h.b16 %v327
  %v1458 = vunpack.c.l.b16 %v328
  %v1459 = vunpack.c.h.b16 %v328
  %v1460 = vunpack.c.l.b16 %v329
  %v1461 = vunpack.c.h.b16 %v329
  %v1462 = vunpack.c.l.b16 %v330
  %v1463 = vunpack.c.h.b16 %v330
  %v1464 = vunpack.c.l.b16 %v331
  %v1465 = vunpack.c.h.b16 %v331
  %v1466 = vunpack.c.l.b16 %v332
  %v1467 = vunpack.c.h.b16 %v332
  %v1468 = vunpack.c.l.b16 %v333
  %v1469 = vunpack.c.h.b16 %v333
  %v1470 = vunpack.c.l.b16 %v334
  %v1471 = vunpack.c.h.b16 %v334
  %v1472 = vunpack.c.l.b16 %v335
  %v1473 = vunpack.c.h.b16 %v335
  %v1474 = vunpack.c.l.b16 %v336
  %v1475 = vunpack.c.h.b16 %v336
  %v1476 = vunpack.c.l.b16 %v337
  %v1477 = vunpack.c.h.b16 %v337
  %v1478 = vunpack.c.l.b16 %v338
  %v1479 = vunpack.c.h.b16 %v338
  %v1480 = vunpack.c.l.b16 %v339
  %v1481 = vunpack.c.h.b16 %v339
  %v1482 = vunpack.c.l.b16 %v340
  %v1483 = vunpack.c.h.b16 %v340
  %v1484 = vunpack.c.l.b16 %v341
  %v1485 = vunpack.c.h.b16 %v341
  %v1486 = vpack.c.b16 %v840, %v838
  %v1487 = vpack.c.b16 %v841, %v839
  %v1488 = vpack.c.b16 %v844, %v842
  %v1489 = vpack.c.b16 %v845, %v843
  %v1490 = vpack.c.b16 %v848, %v846
  %v1491 = vpack.c.b16 %v849, %v847
  %v1492 = vpack.c.b16 %v852, %v850
  %v1493 = vpack.c.b16 %v853, %v851
  %v1494 = vpack.c.b16 %v856, %v854
  %v1495 = vpack.c.b16 %v857, %v855
  %v1496 = vpack.c.b16 %v860, %v858
  %v1497 = vpack.c.b16 %v861, %v859
  %v1498 = vpack.c.b16 %v864, %v862
  %v1499 = vpack.c.b16 %v865, %v863
  %v1500 = vpack.c.b16 %v868, %v866
  %v1501 = vpack.c.b16 %v869, %v867
  %v1502 = vpack.c.b16 %v872, %v870
  %v1503 = vpack.c.b16 %v873, %v871
  %v1504 = vpack.c.b16 %v876, %v874
  %v1505 = vpack.c.b16 %v877, %v875
  %v1506 = vpack.c.b16 %v880, %v878
  %v1507 = vpack.c.b16 %v881, %v879
  %v1508 = vpack.c.b16 %v884, %v882
  %v1509 = vpack.c.b16 %v885, %v883
  %v1510 = vpack.c.b16 %v888, %v886
  %v1511 = vpack.c.b16 %v889, %v887
  %v1512 = vpack.c.b16 %v892, %v890
  %v1513 = vpack.c.b16 %v893, %v891
  %v1514 = vpack.c.b16 %v896, %v894
  %v1515 = vpack.c.b16 %v897, %v895
  %v1516 = vpack.c.b16 %v900, %v898
  %v1517 = vpack.c.b16 %v901, %v899
  %v1518 = vpack.c.b16 %v904, %v902
  %v1519 = vpack.c.b16 %v905, %v903
  %v1520 = vpack.c.b16 %v908, %v906
  %v1521 = vpack.c.b16 %v909, %v907
  %v1522 = vpack.c.b16 %v912, %v910
  %v1523 = vpack.c.b16 %v913, %v911
  %v1524 = vpack.c.b16 %v916, %v914
  %v1525 = vpack.c.b16 %v917, %v915
  %v1526 = vpack.c.b16 %v920, %v918
  %v1527 = vpack.c.b16 %v921, %v919
  %v1528 = vpack.c.b16 %v924, %v922
  %v1529 = vpack.c.b16 %v925, %v923
  %v1530 = vpack.c.b16 %v928, %v926
  %v1531 = vpack.c.b16 %v929, %v927
  %v1532 = vpack.c.b16 %v932, %v930
  %v1533 = vpack.c.b16 %v933, %v931
  %v1534 = vpack.c.b16 %v936, %v934
  %v1535 = vpack.c.b16 %v937, %v935
  %v1536 = vpack.c.b16 %v940, %v938
  %v1537 = vpack.c.b16 %v941, %v939
  %v1538 = vpack.c.b16 %v944, %v942
  %v1539 = vpack.c.b16 %v945, %v943
  %v1540 = vpack.c.b16 %v948, %v946
  %v1541 = vpack.c.b16 %v949, %v947
  %v1542 = vpack.c.b16 %v952, %v950
  %v1543 = vpack.c.b16 %v953, %v951
  %v1544 = vpack.c.b16 %v956, %v954
  %v1545 = vpack.c.b16 %v957, %v955
  %v1546 = vpack.c.b16 %v960, %v958
  %v1547 = vpack.c.b16 %v961, %v959
  %v1548 = vpack.c.b16 %v964, %v962
  %v1549 = vpack.c.b16 %v965, %v963
  %v1550 = vpack.c.b16 %v968, %v966
  %v1551 = vpack.c.b16 %v969, %v967
  %v1552 = vpack.c.b16 %v972, %v970
  %v1553 = vpack.c.b16 %v973, %v971
  %v1554 = vpack.c.b16 %v976, %v974
  %v1555 = vpack.c.b16 %v977, %v975
  %v1556 = vpack.c.b16 %v980, %v978
  %v1557 = vpack.c.b16 %v981, %v979
  %v1558 = vpack.c.b16 %v984, %v982
  %v1559 = vpack.c.b16 %v985, %v983
  %v1560 = vpack.c.b16 %v988, %v986
  %v1561 = vpack.c.b16 %v989, %v987
  %v1562 = vpack.c.b16 %v992, %v990
  %v1563 = vpack.c.b16 %v993, %v991
  %v1564 = vpack.c.b16 %v996, %v994
  %v1565 = vpack.c.b16 %v997, %v995
  %v1566 = vpack.c.b16 %v1000, %v998
  %v1567 = vpack.c.b16 %v1001, %v999
  %v1568 = vpack.c.b16 %v1004, %v1002
  %v1569 = vpack.c.b16 %v1005, %v1003
  %v1570 = vpack.c.b16 %v1008, %v1006
  %v1571 = vpack.c.b16 %v1009, %v1007
  %v1572 = vpack.c.b16 %v1012, %v1010
  %v1573 = vpack.c.b16 %v1013, %v1011
  %v1574 = vpack.c.b16 %v1016, %v1014
  %v1575 = vpack.c.b16 %v1017, %v1015
  %v1576 = vpack.c.b16 %v1020, %v1018
  %v1577 = vpack.c.b16 %v1021, %v1019
  %v1578 = vpack.c.b16 %v1024, %v1022
  %v1579 = vpack.c.b16 %v1025, %v1023
  %v1580 = vpack.c.b16 %v1028, %v1026
  %v1581 = vpack.c.b16 %v1029, %v1027
  %v1582 = vpack.c.b16 %v1032, %v1030
  %v1583 = vpack.c.b16 %v1033, %v1031
  %v1584 = vpack.c.b16 %v1036, %v1034
  %v1585 = vpack.c.b16 %v1037, %v1035
  %v1586 = vpack.c.b16 %v1040, %v1038
  %v1587 = vpack.c.b16 %v1041, %v1039
  %v1588 = vpack.c.b16 %v1044, %v1042
  %v1589 = vpack.c.b16 %v1045, %v1043
  %v1590 = vpack.c.b16 %v1048, %v1046
  %v1591 = vpack.c.b16 %v1049, %v1047
  %v1592 = vpack.c.b16 %v1052, %v1050
  %v1593 = vpack.c.b16 %v1053, %v1051
  %v1594 = vpack.c.b16 %v1056, %v1054
  %v1595 = vpack.c.b16 %v1057, %v1055
  %v1596 = vpack.c.b16 %v1060, %v1058
  %v1597 = vpack.c.b16 %v1061, %v1059
  %v1598 = vpack.c.b16 %v1064, %v1062
  %v1599 = vpack.c.b16 %v1065, %v1063
  %v1600 = vpack.c.b16 %v1068, %v1066
  %v1601 = vpack.c.b16 %v1069, %v1067
  %v1602 = vpack.c.b16 %v1072, %v1070
  %v1603 = vpack.c.b16 %v1073, %v1071
  %v1604 = vpack.c.b16 %v1076, %v1074
  %v1605 = vpack.c.b16 %v1077, %v1075
  %v1606 = vpack.c.b16 %v1080, %v1078
  %v1607 = vpack.c.b16 %v1081, %v1079
  %v1608 = vpack.c.b16 %v1084, %v1082
  %v1609 = vpack.c.b16 %v1085, %v1083
  %v1610 = vpack.c.b16 %v1088, %v1086
  %v1611 = vpack.c.b16 %v1089, %v1087
  %v1612 = vpack.c.b16 %v1092, %v1090
  %v1613 = vpack.c.b16 %v1093, %v1091
  %v1614 = vpack.c.b16 %v1096, %v1094
  %v1615 = vpack.c.b16 %v1097, %v1095
  %v1616 = vpack.c.b16 %v1100, %v1098
  %v1617 = vpack.c.b16 %v1101, %v1099
  %v1618 = vpack.c.b16 %v1104, %v1102
  %v1619 = vpack.c.b16 %v1105, %v1103
  %v1620 = vpack.c.b16 %v1108, %v1106
  %v1621 = vpack.c.b16 %v1109, %v1107
  %v1622 = vpack.c.b16 %v1112, %v1110
  %v1623 = vpack.c.b16 %v1113, %v1111
  %v1624 = vpack.c.b16 %v1116, %v1114
  %v1625 = vpack.c.b16 %v1117, %v1115
  %v1626 = vpack.c.b16 %v1120, %v1118
  %v1627 = vpack.c.b16 %v1121, %v1119
  %v1628 = vpack.c.b16 %v1124, %v1122
  %v1629 = vpack.c.b16 %v1125, %v1123
  %v1630 = vpack.c.b16 %v1128, %v1126
  %v1631 = vpack.c.b16 %v1129, %v1127
  %v1632 = vpack.c.b16 %v1132, %v1130
  %v1633 = vpack.c.b16 %v1133, %v1131
  %v1634 = vpack.c.b16 %v1136, %v1134
  %v1635 = vpack.c.b16 %v1137, %v1135
  %v1636 = vpack.c.b16 %v1140, %v1138
  %v1637 = vpack.c.b16 %v1141, %v1139
  %v1638 = vpack.c.b16 %v1144, %v1142
  %v1639 = vpack.c.b16 %v1145, %v1143
  %v1640 = vpack.c.b16 %v1148, %v1146
  %v1641 = vpack.c.b16 %v1149, %v1147
  %v1642 = vpack.c.b16 %v1152, %v1150
  %v1643 = vpack.c.b16 %v1153, %v1151
  %v1644 = vpack.c.b16 %v1156, %v1154
  %v1645 = vpack.c.b16 %v1157, %v1155
  %v1646 = vpack.c.b16 %v1160, %v1158
  %v1647 = vpack.c.b16 %v1161, %v1159
  %v1648 = vpack.c.b16 %v1164, %v1162
  %v1649 = vpack.c.b16 %v1165, %v1163
  %v1650 = vpack.c.b16 %v1168, %v1166
  %v1651 = vpack.c.b16 %v1169, %v1167
  %v1652 = vpack.c.b16 %v1172, %v1170
  %v1653 = vpack.c.b16 %v1173, %v1171
  %v1654 = vpack.c.b16 %v1176, %v1174
  %v1655 = vpack.c.b16 %v1177, %v1175
  %v1656 = vpack.c.b16 %v1180, %v1178
  %v1657 = vpack.c.b16 %v1181, %v1179
  %v1658 = vpack.c.b16 %v1184, %v1182
  %v1659 = vpack.c.b16 %v1185, %v1183
  %v1660 = vpack.c.b16 %v1188, %v1186
  %v1661 = vpack.c.b16 %v1189, %v1187
  %v1662 = vpack.c.b16 %v1192, %v1190
  %v1663 = vpack.c.b16 %v1193, %v1191
  %v1664 = vpack.c.b16 %v1196, %v1194
  %v1665 = vpack.c.b16 %v1197, %v1195
  %v1666 = vpack.c.b16 %v1200, %v1198
  %v1667 = vpack.c.b16 %v1201, %v1199
  %v1668 = vpack.c.b16 %v1204, %v1202
  %v1669 = vpack.c.b16 %v1205, %v1203
  %v1670 = vpack.c.b16 %v1208, %v1206
  %v1671 = vpack.c.b16 %v1209, %v1207
  %v1672 = vpack.c.b16 %v1212, %v1210
  %v1673 = vpack.c.b16 %v1213, %v1211
  %v1674 = vpack.c.b16 %v1216, %v1214
  %v1675 = vpack.c.b16 %v1217, %v1215
  %v1676 = vpack.c.b16 %v1220, %v1218
  %v1677 = vpack.c.b16 %v1221, %v1219
  %v1678 = vpack.c.b16 %v1224, %v1222
  %v1679 = vpack.c.b16 %v1225, %v1223
  %v1680 = vpack.c.b16 %v1228, %v1226
  %v1681 = vpack.c.b16 %v1229, %v1227
  %v1682 = vpack.c.b16 %v1232, %v1230
  %v1683 = vpack.c.b16 %v1233, %v1231
  %v1684 = vpack.c.b16 %v1236, %v1234
  %v1685 = vpack.c.b16 %v1237, %v1235
  %v1686 = vpack.c.b16 %v1240, %v1238
  %v1687 = vpack.c.b16 %v1241, %v1239
  %v1688 = vpack.c.b16 %v1244, %v1242
  %v1689 = vpack.c.b16 %v1245, %v1243
  %v1690 = vpack.c.b16 %v1248, %v1246
  %v1691 = vpack.c.b16 %v1249, %v1247
  %v1692 = vpack.c.b16 %v1252, %v1250
  %v1693 = vpack.c.b16 %v1253, %v1251
  %v1694 = vpack.c.b16 %v1256, %v1254
  %v1695 = vpack.c.b16 %v1257, %v1255
  %v1696 = vpack.c.b16 %v1260, %v1258
  %v1697 = vpack.c.b16 %v1261, %v1259
  %v1698 = vpack.c.b16 %v1264, %v1262
  %v1699 = vpack.c.b16 %v1265, %v1263
  %v1700 = vpack.c.b16 %v1268, %v1266
  %v1701 = vpack.c.b16 %v1269, %v1267
  %v1702 = vpack.c.b16 %v1272, %v1270
  %v1703 = vpack.c.b16 %v1273, %v1271
  %v1704 = vpack.c.b16 %v1276, %v1274
  %v1705 = vpack.c.b16 %v1277, %v1275
  %v1706 = vpack.c.b16 %v1280, %v1278
  %v1707 = vpack.c.b16 %v1281, %v1279
  %v1708 = vpack.c.b16 %v1284, %v1282
  %v1709 = vpack.c.b16 %v1285, %v1283
  %v1710 = vpack.c.b16 %v1288, %v1286
  %v1711 = vpack.c.b16 %v1289, %v1287
  %v1712 = vpack.c.b16 %v1292, %v1290
  %v1713 = vpack.c.b16 %v1293, %v1291
  %v1714 = vpack.c.b16 %v1296, %v1294
  %v1715 = vpack.c.b16 %v1297, %v1295
  %v1716 = vpack.c.b16 %v1300, %v1298
  %v1717 = vpack.c.b16 %v1301, %v1299
  %v1718 = vpack.c.b16 %v1304, %v1302
  %v1719 = vpack.c.b16 %v1305, %v1303
  %v1720 = vpack.c.b16 %v1308, %v1306
  %v1721 = vpack.c.b16 %v1309, %v1307
  %v1722 = vpack.c.b16 %v1312, %v1310
  %v1723 = vpack.c.b16 %v1313, %v1311
  %v1724 = vpack.c.b16 %v1316, %v1314
  %v1725 = vpack.c.b16 %v1317, %v1315
  %v1726 = vpack.c.b16 %v1320, %v1318
  %v1727 = vpack.c.b16 %v1321, %v1319
  %v1728 = vpack.c.b16 %v1324, %v1322
  %v1729 = vpack.c.b16 %v1325, %v1323
  %v1730 = vpack.c.b16 %v1328, %v1326
  %v1731 = vpack.c.b16 %v1329, %v1327
  %v1732 = vpack.c.b16 %v1332, %v1330
  %v1733 = vpack.c.b16 %v1333, %v1331
  %v1734 = vpack.c.b16 %v1336, %v1334
  %v1735 = vpack.c.b16 %v1337, %v1335
  %v1736 = vpack.c.b16 %v1340, %v1338
  %v1737 = vpack.c.b16 %v1341, %v1339
  %v1738 = vpack.c.b16 %v1344, %v1342
  %v1739 = vpack.c.b16 %v1345, %v1343
  %v1740 = vpack.c.b16 %v1348, %v1346
  %v1741 = vpack.c.b16 %v1349, %v1347
  %v1742 = vpack.c.b16 %v1352, %v1350
  %v1743 = vpack.c.b16 %v1353, %v1351
  %v1744 = vpack.c.b16 %v1356, %v1354
  %v1745 = vpack.c.b16 %v1357, %v1355
  %v1746 = vpack.c.b16 %v1360, %v1358
  %v1747 = vpack.c.b16 %v1361, %v1359
  %v1748 = vpack.c.b16 %v1364, %v1362
  %v1749 = vpack.c.b16 %v1365, %v1363
  %v1750 = vpack.c.b16 %v1368, %v1366
  %v1751 = vpack.c.b16 %v1369, %v1367
  %v1752 = vpack.c.b16 %v1372, %v1370
  %v1753 = vpack.c.b16 %v1373, %v1371
  %v1754 = vpack.c.b16 %v1376, %v1374
  %v1755 = vpack.c.b16 %v1377, %v1375
  %v1756 = vpack.c.b16 %v1380, %v1378
  %v1757 = vpack.c.b16 %v1381, %v1379
  %v1758 = vpack.c.b16 %v1384, %v1382
  %v1759 = vpack.c.b16 %v1385, %v1383
  %v1760 = vpack.c.b16 %v1388, %v1386
  %v1761 = vpack.c.b16 %v1389, %v1387
  %v1762 = vpack.c.b16 %v1392, %v1390
  %v1763 = vpack.c.b16 %v1393, %v1391
  %v1764 = vpack.c.b16 %v1396, %v1394
  %v1765 = vpack.c.b16 %v1397, %v1395
  %v1766 = vpack.c.b16 %v1400, %v1398
  %v1767 = vpack.c.b16 %v1401, %v1399
  %v1768 = vpack.c.b16 %v1404, %v1402
  %v1769 = vpack.c.b16 %v1405, %v1403
  %v1770 = vpack.c.b16 %v1408, %v1406
  %v1771 = vpack.c.b16 %v1409, %v1407
  %v1772 = vpack.c.b16 %v1412, %v1410
  %v1773 = vpack.c.b16 %v1413, %v1411
  %v1774 = vpack.c.b16 %v1416, %v1414
  %v1775 = vpack.c.b16 %v1417, %v1415
  %v1776 = vpack.c.b16 %v1420, %v1418
  %v1777 = vpack.c.b16 %v1421, %v1419
  %v1778 = vpack.c.b16 %v1424, %v1422
  %v1779 = vpack.c.b16 %v1425, %v1423
  %v1780 = vpack.c.b16 %v1428, %v1426
  %v1781 = vpack.c.b16 %v1429, %v1427
  %v1782 = vpack.c.b16 %v1432, %v1430
  %v1783 = vpack.c.b16 %v1433, %v1431
  %v1784 = vpack.c.b16 %v1436, %v1434
  %v1785 = vpack.c.b16 %v1437, %v1435
  %v1786 = vpack.c.b16 %v1440, %v1438
  %v1787 = vpack.c.b16 %v1441, %v1439
  %v1788 = vpack.c.b16 %v1444, %v1442
  %v1789 = vpack.c.b16 %v1445, %v1443
  %v1790 = vpack.c.b16 %v1448, %v1446
  %v1791 = vpack.c.b16 %v1449, %v1447
  %v1792 = vpack.c.b16 %v1452, %v1450
  %v1793 = vpack.c.b16 %v1453, %v1451
  %v1794 = vpack.c.b16 %v1456, %v1454
  %v1795 = vpack.c.b16 %v1457, %v1455
  %v1796 = vpack.c.b16 %v1460, %v1458
  %v1797 = vpack.c.b16 %v1461, %v1459
  %v1798 = vpack.c.b16 %v1464, %v1462
  %v1799 = vpack.c.b16 %v1465, %v1463
  %v1800 = vpack.c.b16 %v1468, %v1466
  %v1801 = vpack.c.b16 %v1469, %v1467
  %v1802 = vpack.c.b16 %v1472, %v1470
  %v1803 = vpack.c.b16 %v1473, %v1471
  %v1804 = vpack.c.b16 %v1476, %v1474
  %v1805 = vpack.c.b16 %v1477, %v1475
  %v1806 = vpack.c.b16 %v1480, %v1478
  %v1807 = vpack.c.b16 %v1481, %v1479
  %v1808 = vpack.c.b16 %v1484, %v1482
  %v1809 = vpack.c.b16 %v1485, %v1483
  %vm2134 = vcmask 261120
  %v2136 = vsel %vm2134, %v484, 0
  %2138 = vmatprep.subr.bf16.mxu0 %v1487
  %2139 = vmatpush1.bf16.msra.mxu0 %v1486
  %2140 = vmatprep.subr.bf16.mxu0 %v1489
  %2141 = vmatpush1.bf16.msra.mxu0 %v1488
  %2142 = vmatprep.subr.bf16.mxu0 %v1491
  %2143 = vmatpush1.bf16.msra.mxu0 %v1490
  %2144 = vmatprep.subr.bf16.mxu0 %v1493
  %2145 = vmatpush1.bf16.msra.mxu0 %v1492
  %2146 = vmatprep.subr.bf16.mxu0 %v1495
  %2147 = vmatpush1.bf16.msra.mxu0 %v1494
  %2148 = vmatprep.subr.bf16.mxu0 %v1497
  %2149 = vmatpush1.bf16.msra.mxu0 %v1496
  %2150 = vmatprep.subr.bf16.mxu0 %v1499
  %2151 = vmatpush1.bf16.msra.mxu0 %v1498
  %2152 = vmatprep.subr.bf16.mxu0 %v1501
  %2153 = vmatpush1.bf16.msra.mxu0 %v1500
  %2154 = vmatprep.subr.bf16.mxu0 %v1503
  %2155 = vmatpush1.bf16.msra.mxu0 %v1502
  %2156 = vmatprep.subr.bf16.mxu0 %v1505
  %2157 = vmatpush1.bf16.msra.mxu0 %v1504
  %2158 = vmatprep.subr.bf16.mxu0 %v1507
  %2159 = vmatpush1.bf16.msra.mxu0 %v1506
  %2160 = vmatprep.subr.bf16.mxu0 %v1509
  %2161 = vmatpush1.bf16.msra.mxu0 %v1508
  %2162 = vmatprep.subr.bf16.mxu0 %v1511
  %2163 = vmatpush1.bf16.msra.mxu0 %v1510
  %2164 = vmatprep.subr.bf16.mxu0 %v1513
  %2165 = vmatpush1.bf16.msra.mxu0 %v1512
  %2166 = vmatprep.subr.bf16.mxu0 %v1515
  %2167 = vmatpush1.bf16.msra.mxu0 %v1514
  %2168 = vmatprep.subr.bf16.mxu0 %v1517
  %2169 = vmatpush1.bf16.msra.mxu0 %v1516
  %2170 = vmatprep.mubr.bf16.mxu0 %v394
  %2171 = vmatmul.mubr.bf16.gmra.mrb[0].mxu0 %v380
  %v2172 = vpop.f32.mrb[0].mxu0
  %v2173 = vadd.f32 %v347, %v2172
  %v2174 = vpop.f32.mrb[0].mxu0
  %v2175 = vadd.f32 %v351, %v2174
  %v2176 = vpop.f32.mrb[0].mxu0
  %v2177 = vpop.f32.mrb[0].mxu0
  %2178 = vdwg.mxu0
  %2179 = vmatprep.subr.bf16.mxu0 %v1519
  %2180 = vmatpush1.bf16.msra.mxu0 %v1518
  %2181 = vmatprep.subr.bf16.mxu0 %v1521
  %2182 = vmatpush1.bf16.msra.mxu0 %v1520
  %2183 = vmatprep.subr.bf16.mxu0 %v1523
  %2184 = vmatpush1.bf16.msra.mxu0 %v1522
  %2185 = vmatprep.subr.bf16.mxu0 %v1525
  %2186 = vmatpush1.bf16.msra.mxu0 %v1524
  %2187 = vmatprep.subr.bf16.mxu0 %v1527
  %2188 = vmatpush1.bf16.msra.mxu0 %v1526
  %2189 = vmatprep.subr.bf16.mxu0 %v1529
  %2190 = vmatpush1.bf16.msra.mxu0 %v1528
  %2191 = vmatprep.subr.bf16.mxu0 %v1531
  %2192 = vmatpush1.bf16.msra.mxu0 %v1530
  %2193 = vmatprep.subr.bf16.mxu0 %v1533
  %2194 = vmatpush1.bf16.msra.mxu0 %v1532
  %2195 = vmatprep.subr.bf16.mxu0 %v1535
  %2196 = vmatpush1.bf16.msra.mxu0 %v1534
  %2197 = vmatprep.subr.bf16.mxu0 %v1537
  %2198 = vmatpush1.bf16.msra.mxu0 %v1536
  %2199 = vmatprep.subr.bf16.mxu0 %v1539
  %2200 = vmatpush1.bf16.msra.mxu0 %v1538
  %2201 = vmatprep.subr.bf16.mxu0 %v1541
  %2202 = vmatpush1.bf16.msra.mxu0 %v1540
  %2203 = vmatprep.subr.bf16.mxu0 %v1543
  %2204 = vmatpush1.bf16.msra.mxu0 %v1542
  %2205 = vmatprep.subr.bf16.mxu0 %v1545
  %2206 = vmatpush1.bf16.msra.mxu0 %v1544
  %2207 = vmatprep.subr.bf16.mxu0 %v1547
  %2208 = vmatpush1.bf16.msra.mxu0 %v1546
  %2209 = vmatprep.subr.bf16.mxu0 %v1549
  %2210 = vmatpush1.bf16.msra.mxu0 %v1548
  %2211 = vmatprep.mubr.bf16.mxu0 %v404
  %2212 = vmatmul.mubr.bf16.gmra.mrb[0].mxu0 %v402
  %v2213 = vpop.f32.mrb[0].mxu0
  %v2214 = vadd.f32 %v2173, %v2213
  %v2215 = vpop.f32.mrb[0].mxu0
  %v2216 = vadd.f32 %v2175, %v2215
  %v2217 = vpop.f32.mrb[0].mxu0
  %v2218 = vpop.f32.mrb[0].mxu0
  %2219 = vdwg.mxu0
  %2220 = vmatprep.subr.bf16.mxu0 %v1551
  %2221 = vmatpush1.bf16.msra.mxu0 %v1550
  %2222 = vmatprep.subr.bf16.mxu0 %v1553
  %2223 = vmatpush1.bf16.msra.mxu0 %v1552
  %2224 = vmatprep.subr.bf16.mxu0 %v1555
  %2225 = vmatpush1.bf16.msra.mxu0 %v1554
  %2226 = vmatprep.subr.bf16.mxu0 %v1557
  %2227 = vmatpush1.bf16.msra.mxu0 %v1556
  %2228 = vmatprep.subr.bf16.mxu0 %v1559
  %2229 = vmatpush1.bf16.msra.mxu0 %v1558
  %2230 = vmatprep.subr.bf16.mxu0 %v1561
  %2231 = vmatpush1.bf16.msra.mxu0 %v1560
  %2232 = vmatprep.subr.bf16.mxu0 %v1563
  %2233 = vmatpush1.bf16.msra.mxu0 %v1562
  %2234 = vmatprep.subr.bf16.mxu0 %v1565
  %2235 = vmatpush1.bf16.msra.mxu0 %v1564
  %2236 = vmatprep.subr.bf16.mxu0 %v1567
  %2237 = vmatpush1.bf16.msra.mxu0 %v1566
  %2238 = vmatprep.subr.bf16.mxu0 %v1569
  %2239 = vmatpush1.bf16.msra.mxu0 %v1568
  %2240 = vmatprep.subr.bf16.mxu0 %v1571
  %2241 = vmatpush1.bf16.msra.mxu0 %v1570
  %2242 = vmatprep.subr.bf16.mxu0 %v1573
  %2243 = vmatpush1.bf16.msra.mxu0 %v1572
  %2244 = vmatprep.subr.bf16.mxu0 %v1575
  %2245 = vmatpush1.bf16.msra.mxu0 %v1574
  %2246 = vmatprep.subr.bf16.mxu0 %v1577
  %2247 = vmatpush1.bf16.msra.mxu0 %v1576
  %2248 = vmatprep.subr.bf16.mxu0 %v1579
  %2249 = vmatpush1.bf16.msra.mxu0 %v1578
  %2250 = vmatprep.subr.bf16.mxu0 %v1581
  %2251 = vmatpush1.bf16.msra.mxu0 %v1580
  %2252 = vmatprep.mubr.bf16.mxu0 %v401
  %2253 = vmatmul.mubr.bf16.gmra.mrb[0].mxu0 %v387
  %v2254 = vpop.f32.mrb[0].mxu0
  %v2255 = vadd.f32 %v2214, %v2254
  %v2256 = vpop.f32.mrb[0].mxu0
  %v2257 = vadd.f32 %v2216, %v2256
  %v2258 = vpop.f32.mrb[0].mxu0
  %v2259 = vpop.f32.mrb[0].mxu0
  %2260 = vdwg.mxu0
  %2261 = vmatprep.subr.bf16.mxu0 %v1583
  %2262 = vmatpush1.bf16.msra.mxu0 %v1582
  %2263 = vmatprep.subr.bf16.mxu0 %v1585
  %2264 = vmatpush1.bf16.msra.mxu0 %v1584
  %2265 = vmatprep.subr.bf16.mxu0 %v1587
  %2266 = vmatpush1.bf16.msra.mxu0 %v1586
  %2267 = vmatprep.subr.bf16.mxu0 %v1589
  %2268 = vmatpush1.bf16.msra.mxu0 %v1588
  %2269 = vmatprep.subr.bf16.mxu0 %v1591
  %2270 = vmatpush1.bf16.msra.mxu0 %v1590
  %2271 = vmatprep.subr.bf16.mxu0 %v1593
  %2272 = vmatpush1.bf16.msra.mxu0 %v1592
  %2273 = vmatprep.subr.bf16.mxu0 %v1595
  %2274 = vmatpush1.bf16.msra.mxu0 %v1594
  %2275 = vmatprep.subr.bf16.mxu0 %v1597
  %2276 = vmatpush1.bf16.msra.mxu0 %v1596
  %2277 = vmatprep.subr.bf16.mxu0 %v1599
  %2278 = vmatpush1.bf16.msra.mxu0 %v1598
  %2279 = vmatprep.subr.bf16.mxu0 %v1601
  %2280 = vmatpush1.bf16.msra.mxu0 %v1600
  %2281 = vmatprep.subr.bf16.mxu0 %v1603
  %2282 = vmatpush1.bf16.msra.mxu0 %v1602
  %2283 = vmatprep.subr.bf16.mxu0 %v1605
  %2284 = vmatpush1.bf16.msra.mxu0 %v1604
  %2285 = vmatprep.subr.bf16.mxu0 %v1607
  %2286 = vmatpush1.bf16.msra.mxu0 %v1606
  %2287 = vmatprep.subr.bf16.mxu0 %v1609
  %2288 = vmatpush1.bf16.msra.mxu0 %v1608
  %2289 = vmatprep.subr.bf16.mxu0 %v1611
  %2290 = vmatpush1.bf16.msra.mxu0 %v1610
  %2291 = vmatprep.subr.bf16.mxu0 %v1613
  %2292 = vmatpush1.bf16.msra.mxu0 %v1612
  %2293 = vmatprep.mubr.bf16.mxu0 %v405
  %2294 = vmatmul.mubr.bf16.gmra.mrb[0].mxu0 %v403
  %v2295 = vpop.f32.mrb[0].mxu0
  %v2296 = vadd.f32 %v2255, %v2295
  %v2297 = vpop.f32.mrb[0].mxu0
  %v2298 = vadd.f32 %v2257, %v2297
  %v2299 = vpop.f32.mrb[0].mxu0
  %v2300 = vpop.f32.mrb[0].mxu0
  %2301 = vdwg.mxu0
  %2302 = vmatprep.subr.bf16.mxu0 %v1615
  %2303 = vmatpush1.bf16.msra.mxu0 %v1614
  %2304 = vmatprep.subr.bf16.mxu0 %v1617
  %2305 = vmatpush1.bf16.msra.mxu0 %v1616
  %2306 = vmatprep.subr.bf16.mxu0 %v1619
  %2307 = vmatpush1.bf16.msra.mxu0 %v1618
  %2308 = vmatprep.subr.bf16.mxu0 %v1621
  %2309 = vmatpush1.bf16.msra.mxu0 %v1620
  %2310 = vmatprep.subr.bf16.mxu0 %v1623
  %2311 = vmatpush1.bf16.msra.mxu0 %v1622
  %2312 = vmatprep.subr.bf16.mxu0 %v1625
  %2313 = vmatpush1.bf16.msra.mxu0 %v1624
  %2314 = vmatprep.subr.bf16.mxu0 %v1627
  %2315 = vmatpush1.bf16.msra.mxu0 %v1626
  %2316 = vmatprep.subr.bf16.mxu0 %v1629
  %2317 = vmatpush1.bf16.msra.mxu0 %v1628
  %2318 = vmatprep.subr.bf16.mxu0 %v1631
  %2319 = vmatpush1.bf16.msra.mxu0 %v1630
  %2320 = vmatprep.subr.bf16.mxu0 %v1633
  %2321 = vmatpush1.bf16.msra.mxu0 %v1632
  %2322 = vmatprep.subr.bf16.mxu0 %v1635
  %2323 = vmatpush1.bf16.msra.mxu0 %v1634
  %2324 = vmatprep.subr.bf16.mxu0 %v1637
  %2325 = vmatpush1.bf16.msra.mxu0 %v1636
  %2326 = vmatprep.subr.bf16.mxu0 %v1639
  %2327 = vmatpush1.bf16.msra.mxu0 %v1638
  %2328 = vmatprep.subr.bf16.mxu0 %v1641
  %2329 = vmatpush1.bf16.msra.mxu0 %v1640
  %2330 = vmatprep.subr.bf16.mxu0 %v1643
  %2331 = vmatpush1.bf16.msra.mxu0 %v1642
  %2332 = vmatprep.subr.bf16.mxu0 %v1645
  %2333 = vmatpush1.bf16.msra.mxu0 %v1644
  %2334 = vmatprep.mubr.bf16.mxu0 %v443
  %2335 = vmatmul.mubr.bf16.gmra.mrb[0].mxu0 %v429
  %v2336 = vpop.f32.mrb[0].mxu0
  %v2337 = vadd.f32 %v2296, %v2336
  %v2338 = vpop.f32.mrb[0].mxu0
  %v2339 = vadd.f32 %v2298, %v2338
  %v2340 = vpop.f32.mrb[0].mxu0
  %v2341 = vpop.f32.mrb[0].mxu0
  %2342 = vdwg.mxu0
  %2343 = vmatprep.subr.bf16.mxu0 %v1647
  %2344 = vmatpush1.bf16.msra.mxu0 %v1646
  %2345 = vmatprep.subr.bf16.mxu0 %v1649
  %2346 = vmatpush1.bf16.msra.mxu0 %v1648
  %2347 = vmatprep.subr.bf16.mxu0 %v1651
  %2348 = vmatpush1.bf16.msra.mxu0 %v1650
  %2349 = vmatprep.subr.bf16.mxu0 %v1653
  %2350 = vmatpush1.bf16.msra.mxu0 %v1652
  %2351 = vmatprep.subr.bf16.mxu0 %v1655
  %2352 = vmatpush1.bf16.msra.mxu0 %v1654
  %2353 = vmatprep.subr.bf16.mxu0 %v1657
  %2354 = vmatpush1.bf16.msra.mxu0 %v1656
  %2355 = vmatprep.subr.bf16.mxu0 %v1659
  %2356 = vmatpush1.bf16.msra.mxu0 %v1658
  %2357 = vmatprep.subr.bf16.mxu0 %v1661
  %2358 = vmatpush1.bf16.msra.mxu0 %v1660
  %2359 = vmatprep.subr.bf16.mxu0 %v1663
  %2360 = vmatpush1.bf16.msra.mxu0 %v1662
  %2361 = vmatprep.subr.bf16.mxu0 %v1665
  %2362 = vmatpush1.bf16.msra.mxu0 %v1664
  %2363 = vmatprep.subr.bf16.mxu0 %v1667
  %2364 = vmatpush1.bf16.msra.mxu0 %v1666
  %2365 = vmatprep.subr.bf16.mxu0 %v1669
  %2366 = vmatpush1.bf16.msra.mxu0 %v1668
  %2367 = vmatprep.subr.bf16.mxu0 %v1671
  %2368 = vmatpush1.bf16.msra.mxu0 %v1670
  %2369 = vmatprep.subr.bf16.mxu0 %v1673
  %2370 = vmatpush1.bf16.msra.mxu0 %v1672
  %2371 = vmatprep.subr.bf16.mxu0 %v1675
  %2372 = vmatpush1.bf16.msra.mxu0 %v1674
  %2373 = vmatprep.subr.bf16.mxu0 %v1677
  %2374 = vmatpush1.bf16.msra.mxu0 %v1676
  %2375 = vmatprep.mubr.bf16.mxu0 %v453
  %2376 = vmatmul.mubr.bf16.gmra.mrb[0].mxu0 %v451
  %v2377 = vpop.f32.mrb[0].mxu0
  %v2378 = vadd.f32 %v2337, %v2377
  %v2379 = vpop.f32.mrb[0].mxu0
  %v2380 = vadd.f32 %v2339, %v2379
  %v2381 = vpop.f32.mrb[0].mxu0
  %v2382 = vpop.f32.mrb[0].mxu0
  %2383 = vdwg.mxu0
  %2384 = vmatprep.subr.bf16.mxu0 %v1679
  %2385 = vmatpush1.bf16.msra.mxu0 %v1678
  %2386 = vmatprep.subr.bf16.mxu0 %v1681
  %2387 = vmatpush1.bf16.msra.mxu0 %v1680
  %2388 = vmatprep.subr.bf16.mxu0 %v1683
  %2389 = vmatpush1.bf16.msra.mxu0 %v1682
  %2390 = vmatprep.subr.bf16.mxu0 %v1685
  %2391 = vmatpush1.bf16.msra.mxu0 %v1684
  %2392 = vmatprep.subr.bf16.mxu0 %v1687
  %2393 = vmatpush1.bf16.msra.mxu0 %v1686
  %2394 = vmatprep.subr.bf16.mxu0 %v1689
  %2395 = vmatpush1.bf16.msra.mxu0 %v1688
  %2396 = vmatprep.subr.bf16.mxu0 %v1691
  %2397 = vmatpush1.bf16.msra.mxu0 %v1690
  %2398 = vmatprep.subr.bf16.mxu0 %v1693
  %2399 = vmatpush1.bf16.msra.mxu0 %v1692
  %2400 = vmatprep.subr.bf16.mxu0 %v1695
  %2401 = vmatpush1.bf16.msra.mxu0 %v1694
  %2402 = vmatprep.subr.bf16.mxu0 %v1697
  %2403 = vmatpush1.bf16.msra.mxu0 %v1696
  %2404 = vmatprep.subr.bf16.mxu0 %v1699
  %2405 = vmatpush1.bf16.msra.mxu0 %v1698
  %2406 = vmatprep.subr.bf16.mxu0 %v1701
  %2407 = vmatpush1.bf16.msra.mxu0 %v1700
  %2408 = vmatprep.subr.bf16.mxu0 %v1703
  %2409 = vmatpush1.bf16.msra.mxu0 %v1702
  %2410 = vmatprep.subr.bf16.mxu0 %v1705
  %2411 = vmatpush1.bf16.msra.mxu0 %v1704
  %2412 = vmatprep.subr.bf16.mxu0 %v1707
  %2413 = vmatpush1.bf16.msra.mxu0 %v1706
  %2414 = vmatprep.subr.bf16.mxu0 %v1709
  %2415 = vmatpush1.bf16.msra.mxu0 %v1708
  %2416 = vmatprep.mubr.bf16.mxu0 %v450
  %2417 = vmatmul.mubr.bf16.gmra.mrb[0].mxu0 %v436
  %v2418 = vpop.f32.mrb[0].mxu0
  %v2419 = vadd.f32 %v2378, %v2418
  %v2420 = vpop.f32.mrb[0].mxu0
  %v2421 = vadd.f32 %v2380, %v2420
  %v2422 = vpop.f32.mrb[0].mxu0
  %v2423 = vpop.f32.mrb[0].mxu0
  %2424 = vdwg.mxu0
  %2425 = vmatprep.subr.bf16.mxu0 %v1711
  %2426 = vmatpush1.bf16.msra.mxu0 %v1710
  %2427 = vmatprep.subr.bf16.mxu0 %v1713
  %2428 = vmatpush1.bf16.msra.mxu0 %v1712
  %2429 = vmatprep.subr.bf16.mxu0 %v1715
  %2430 = vmatpush1.bf16.msra.mxu0 %v1714
  %2431 = vmatprep.subr.bf16.mxu0 %v1717
  %2432 = vmatpush1.bf16.msra.mxu0 %v1716
  %2433 = vmatprep.subr.bf16.mxu0 %v1719
  %2434 = vmatpush1.bf16.msra.mxu0 %v1718
  %2435 = vmatprep.subr.bf16.mxu0 %v1721
  %2436 = vmatpush1.bf16.msra.mxu0 %v1720
  %2437 = vmatprep.subr.bf16.mxu0 %v1723
  %2438 = vmatpush1.bf16.msra.mxu0 %v1722
  %2439 = vmatprep.subr.bf16.mxu0 %v1725
  %2440 = vmatpush1.bf16.msra.mxu0 %v1724
  %2441 = vmatprep.subr.bf16.mxu0 %v1727
  %2442 = vmatpush1.bf16.msra.mxu0 %v1726
  %2443 = vmatprep.subr.bf16.mxu0 %v1729
  %2444 = vmatpush1.bf16.msra.mxu0 %v1728
  %2445 = vmatprep.subr.bf16.mxu0 %v1731
  %2446 = vmatpush1.bf16.msra.mxu0 %v1730
  %2447 = vmatprep.subr.bf16.mxu0 %v1733
  %2448 = vmatpush1.bf16.msra.mxu0 %v1732
  %2449 = vmatprep.subr.bf16.mxu0 %v1735
  %2450 = vmatpush1.bf16.msra.mxu0 %v1734
  %2451 = vmatprep.subr.bf16.mxu0 %v1737
  %2452 = vmatpush1.bf16.msra.mxu0 %v1736
  %2453 = vmatprep.subr.bf16.mxu0 %v1739
  %2454 = vmatpush1.bf16.msra.mxu0 %v1738
  %2455 = vmatprep.subr.bf16.mxu0 %v1741
  %2456 = vmatpush1.bf16.msra.mxu0 %v1740
  %2457 = vmatprep.mubr.bf16.mxu0 %v454
  %2458 = vmatmul.mubr.bf16.gmra.mrb[0].mxu0 %v452
  %v2459 = vpop.f32.mrb[0].mxu0
  %v2460 = vadd.f32 %v2419, %v2459
  %v2461 = vpop.f32.mrb[0].mxu0
  %v2462 = vadd.f32 %v2421, %v2461
  %v2463 = vpop.f32.mrb[0].mxu0
  %v2464 = vpop.f32.mrb[0].mxu0
  %2465 = vdwg.mxu0
  %2466 = vmatprep.subr.bf16.mxu0 %v1743
  %2467 = vmatpush1.bf16.msra.mxu0 %v1742
  %2468 = vmatprep.subr.bf16.mxu0 %v1745
  %2469 = vmatpush1.bf16.msra.mxu0 %v1744
  %2470 = vmatprep.subr.bf16.mxu0 %v1747
  %2471 = vmatpush1.bf16.msra.mxu0 %v1746
  %2472 = vmatprep.subr.bf16.mxu0 %v1749
  %2473 = vmatpush1.bf16.msra.mxu0 %v1748
  %2474 = vmatprep.subr.bf16.mxu0 %v1751
  %2475 = vmatpush1.bf16.msra.mxu0 %v1750
  %2476 = vmatprep.subr.bf16.mxu0 %v1753
  %2477 = vmatpush1.bf16.msra.mxu0 %v1752
  %2478 = vmatprep.subr.bf16.mxu0 %v1755
  %2479 = vmatpush1.bf16.msra.mxu0 %v1754
  %2480 = vmatprep.subr.bf16.mxu0 %v1757
  %2481 = vmatpush1.bf16.msra.mxu0 %v1756
  %2482 = vmatprep.subr.bf16.mxu0 %v1759
  %2483 = vmatpush1.bf16.msra.mxu0 %v1758
  %2484 = vmatprep.subr.bf16.mxu0 %v1761
  %2485 = vmatpush1.bf16.msra.mxu0 %v1760
  %2486 = vmatprep.subr.bf16.mxu0 %v1763
  %2487 = vmatpush1.bf16.msra.mxu0 %v1762
  %2488 = vmatprep.subr.bf16.mxu0 %v1765
  %2489 = vmatpush1.bf16.msra.mxu0 %v1764
  %2490 = vmatprep.subr.bf16.mxu0 %v1767
  %2491 = vmatpush1.bf16.msra.mxu0 %v1766
  %2492 = vmatprep.subr.bf16.mxu0 %v1769
  %2493 = vmatpush1.bf16.msra.mxu0 %v1768
  %2494 = vmatprep.subr.bf16.mxu0 %v1771
  %2495 = vmatpush1.bf16.msra.mxu0 %v1770
  %2496 = vmatprep.subr.bf16.mxu0 %v1773
  %2497 = vmatpush1.bf16.msra.mxu0 %v1772
  %2498 = vmatprep.mubr.bf16.mxu0 %v491
  %2499 = vmatmul.mubr.bf16.gmra.mrb[0].mxu0 %v477
  %v2500 = vpop.f32.mrb[0].mxu0
  %v2501 = vadd.f32 %v2460, %v2500
  %v2502 = vpop.f32.mrb[0].mxu0
  %v2503 = vadd.f32 %v2462, %v2502
  %v2504 = vpop.f32.mrb[0].mxu0
  %v2505 = vpop.f32.mrb[0].mxu0
  %2506 = vdwg.mxu0
  %2507 = vmatprep.subr.bf16.mxu0 %v1775
  %2508 = vmatpush1.bf16.msra.mxu0 %v1774
  %2509 = vmatprep.subr.bf16.mxu0 %v1777
  %2510 = vmatpush1.bf16.msra.mxu0 %v1776
  %2511 = vmatprep.subr.bf16.mxu0 %v1779
  %2512 = vmatpush1.bf16.msra.mxu0 %v1778
  %2513 = vmatprep.subr.bf16.mxu0 %v1781
  %2514 = vmatpush1.bf16.msra.mxu0 %v1780
  %2515 = vmatprep.subr.bf16.mxu0 %v1783
  %2516 = vmatpush1.bf16.msra.mxu0 %v1782
  %2517 = vmatprep.subr.bf16.mxu0 %v1785
  %2518 = vmatpush1.bf16.msra.mxu0 %v1784
  %2519 = vmatprep.subr.bf16.mxu0 %v1787
  %2520 = vmatpush1.bf16.msra.mxu0 %v1786
  %2521 = vmatprep.subr.bf16.mxu0 %v1789
  %2522 = vmatpush1.bf16.msra.mxu0 %v1788
  %2523 = vmatprep.subr.bf16.mxu0 %v1791
  %2524 = vmatpush1.bf16.msra.mxu0 %v1790
  %2525 = vmatprep.subr.bf16.mxu0 %v1793
  %2526 = vmatpush1.bf16.msra.mxu0 %v1792
  %2527 = vmatprep.subr.bf16.mxu0 %v1795
  %2528 = vmatpush1.bf16.msra.mxu0 %v1794
  %2529 = vmatprep.subr.bf16.mxu0 %v1797
  %2530 = vmatpush1.bf16.msra.mxu0 %v1796
  %2531 = vmatprep.subr.bf16.mxu0 %v1799
  %2532 = vmatpush1.bf16.msra.mxu0 %v1798
  %2533 = vmatprep.subr.bf16.mxu0 %v1801
  %2534 = vmatpush1.bf16.msra.mxu0 %v1800
  %2535 = vmatprep.subr.bf16.mxu0 %v1803
  %2536 = vmatpush1.bf16.msra.mxu0 %v1802
  %2537 = vmatprep.subr.bf16.mxu0 %v1805
  %2538 = vmatpush1.bf16.msra.mxu0 %v1804
  %2539 = vmatprep.mubr.bf16.mxu0 %v493
  %2540 = vmatmul.mubr.bf16.gmra.mrb[0].mxu0 %v492
  %v2541 = vpop.f32.mrb[0].mxu0
  %v2542 = vadd.f32 %v2501, %v2541
  %v2543 = vpop.f32.mrb[0].mxu0
  %v2544 = vadd.f32 %v2503, %v2543
  %v2545 = vpop.f32.mrb[0].mxu0
  %v2546 = vpop.f32.mrb[0].mxu0
  %2547 = vdwg.mxu0
  %2548 = vmatprep.subr.bf16.mxu0 %v1807
  %2549 = vmatpush1.bf16.msra.mxu0 %v1806
  %2550 = vmatprep.subr.bf16.mxu0 %v1809
  %2551 = vmatpush1.bf16.msra.mxu0 %v1808
  %2552 = vmatprep.subr.bf16.mxu0 0
  %2553 = vmatpush1.bf16.msra.mxu0 0
  %2554 = vmatprep.subr.bf16.mxu0 0
  %2555 = vmatpush1.bf16.msra.mxu0 0
  %2556 = vmatprep.subr.bf16.mxu0 0
  %2557 = vmatpush1.bf16.msra.mxu0 0
  %2558 = vmatprep.subr.bf16.mxu0 0
  %2559 = vmatpush1.bf16.msra.mxu0 0
  %2560 = vmatprep.subr.bf16.mxu0 0
  %2561 = vmatpush1.bf16.msra.mxu0 0
  %2562 = vmatprep.subr.bf16.mxu0 0
  %2563 = vmatpush1.bf16.msra.mxu0 0
  %2564 = vmatprep.subr.bf16.mxu0 0
  %2565 = vmatpush1.bf16.msra.mxu0 0
  %2566 = vmatprep.subr.bf16.mxu0 0
  %2567 = vmatpush1.bf16.msra.mxu0 0
  %2568 = vmatprep.subr.bf16.mxu0 0
  %2569 = vmatpush1.bf16.msra.mxu0 0
  %2570 = vmatprep.subr.bf16.mxu0 0
  %2571 = vmatpush1.bf16.msra.mxu0 0
  %2572 = vmatprep.subr.bf16.mxu0 0
  %2573 = vmatpush1.bf16.msra.mxu0 0
  %2574 = vmatprep.subr.bf16.mxu0 0
  %2575 = vmatpush1.bf16.msra.mxu0 0
  %2576 = vmatprep.subr.bf16.mxu0 0
  %2577 = vmatpush1.bf16.msra.mxu0 0
  %2578 = vmatprep.subr.bf16.mxu0 0
  %2579 = vmatpush1.bf16.msra.mxu0 0
  %2580 = vmatprep.mubr.bf16.mxu0 0
  %2581 = vmatmul.mubr.bf16.gmra.mrb[0].mxu0 %v2136
  %v2582 = vpop.f32.mrb[0].mxu0
  %v2583 = vadd.f32 %v2542, %v2582
  %v2584 = vpop.f32.mrb[0].mxu0
  %v2585 = vadd.f32 %v2544, %v2584
  %v2586 = vpop.f32.mrb[0].mxu0
  %v2587 = vpop.f32.mrb[0].mxu0
  %2588 = vdwg.mxu0
  %v2589 = vmax.f32 %v2583, 0.0
  %v2590 = vmax.f32 %v2585, 0.0
  %v2591 = vpack.c.bf16 %v2589, %v2589
  %v2592 = vpack.c.bf16 %v2590, %v2590
  %v2595 = vcombine.low %v2591, %v2592
  %v2597 = vunpack.c.l.s4 1966171168
  %v2598 = vunpack.c.0.s8 %v2597
  %v2599 = vlaneseq
  %v2600 = vshrl.u32 %v2599, 7
  %v2601 = vsub.s32 %v2598, %v2600
  %v2602 = vrot.slane %v2595, %v2601
  %v2604 = vunpack.c.l.s4 1966171168
  %v2605 = vunpack.c.0.s8 %v2604
  %v2606 = vlaneseq
  %v2607 = vshrl.u32 %v2606, 7
  %v2608 = vsub.s32 %v2605, %v2607
  %v2609 = vrot.slane %v2602, %v2608
  %2611 = vst [vmem:[%s3] sm:$0x3] %v2609
  // Predicated region
  $region14: #{dqn_forward.6} parent=0 // pred_check
    _
  $region15: #{dqn_forward.6} parent=0 // pred_check_branch
    %2613 = sbr.rel (0) target = $region17
  $region16: #{dqn_forward.6} parent=0 // pred_region
    _
  $region17: #{dqn_forward.6} parent=0 // pred_fallthru
    _
  // Predicated region
  $region18: #{dqn_forward.6} parent=0 // pred_check
    _
  $region19: #{dqn_forward.6} parent=0 // pred_check_branch
    %2615 = sbr.rel (0) target = $region21
  $region20: #{dqn_forward.6} parent=0 // pred_region
    _
  $region21: #{dqn_forward.6} parent=0 // pred_fallthru
    _

</llo_original>
